<compile_context>
chip_gen: v5e
topology: v5e:2x2
jax: 0.10.0
libtpu: 0.0.40
codegen_flags: <defaults>
</compile_context>

<pallas_src>
from functools import partial

import numpy as np
import jax
import jax.numpy as jnp
from jax.experimental import pallas as pl
from jax.experimental.pallas import tpu as pltpu


# ----------------------------------------------------------------------------
# kernel
# ----------------------------------------------------------------------------
def _basic3x3_kernel(x_ref, w_ref, b_ref, o_ref, *, td, hh, nc):
    """One (batch, depth-tile) step of fused conv3x3x3 + BN(shift) + ReLU.

    x_ref : (1, D+2, H+2, (W+2)*Cin) bf16  padded, channel-flattened input for
            this batch.  Constant index along the depth-tile grid axis, so it
            is copied HBM->VMEM once per batch and reused (no HBM im2col).
    w_ref : (3, 3, (W+2)*Cin, W*Cout) bf16  conv weights with the BatchNorm
            scale pre-folded, arranged as 9 banded (block-Toeplitz over W)
            matrices so each (kd, kh) tap is a single dense GEMM.
    b_ref : (1, W*Cout) f32  BatchNorm shift (beta - mean*scale), tiled over W.
    o_ref : (1, td*H, W*Cout) f32  lane-dense output tile.
    """
    j = pl.program_id(1)
    d0 = j * td                                   # first output depth of tile
    m = td * hh
    n_total = o_ref.shape[-1]

    # Static unroll over 128-aligned N chunks so the f32 accumulator stays
    # small (register-resident) across the 9 tap GEMMs.
    for c0 in range(0, n_total, nc):
        acc = jnp.zeros((m, nc), jnp.float32)
        for kd in range(3):
            for kh in range(3):
                # (td, H, (W+2)*Cin) slab of the VMEM-resident padded input.
                a = x_ref[0, pl.ds(d0 + kd, td), pl.ds(kh, hh), :]
                a = a.reshape(m, a.shape[-1])                 # bf16 MXU operand
                acc = acc + jnp.dot(a, w_ref[kd, kh, :, c0:c0 + nc],
                                    preferred_element_type=jnp.float32)
        # f32 epilogue: BN shift + ReLU, lane-aligned unmasked store.
        o_ref[0, :, c0:c0 + nc] = jnp.maximum(
            acc + b_ref[0, c0:c0 + nc], 0.0).astype(o_ref.dtype)


# ----------------------------------------------------------------------------
# wrapper
# ----------------------------------------------------------------------------
def basic3x3_forward(x, w, gamma, beta, running_mean, running_var, eps=1e-5):
    """Basic3x3 forward.

    x : (B, Cin, D, H, W) float32 (PyTorch NCDHW layout)
    w : (Cout, Cin, 3, 3, 3) conv weight (bias=False)
    gamma/beta/running_mean/running_var : (Cout,) BatchNorm3d parameters.
    Returns (B, Cout, D, H, W) float32.
    """
    B, Cin, D, H, W = x.shape
    Cout = w.shape[0]
    Dp, Hp, Wp = D + 2, H + 2, W + 2

    # ---- fold BatchNorm (inference) into the conv: scale -> weights,
    #      shift -> additive epilogue term.
    scale = gamma * jax.lax.rsqrt(running_var.astype(jnp.float32) + eps)  # (Cout,)
    shift = (beta - running_mean * scale).astype(jnp.float32)             # (Cout,)
    w_f = (w.astype(jnp.float32) * scale[:, None, None, None, None])      # (Cout,Cin,3,3,3)

    # ---- banded (block-Toeplitz over W) weight:
    #      T[kd, kh, (wpos+kw)*Cin + c, wpos*Cout + o] = w_f[o, c, kd, kh, kw]
    #      so a GEMM against a padded input row handles kw and Cin at once.
    w_perm = jnp.transpose(w_f, (2, 3, 4, 1, 0))          # (3,3,3,Cin,Cout)
    K3 = 3 * Cin
    L = Wp * Cin
    t_mats = []
    for kd in range(3):
        for kh in range(3):
            band = w_perm[kd, kh].reshape(K3, Cout)       # rows: kw*Cin + c
            cols = [jnp.pad(band, ((wpos * Cin, L - wpos * Cin - K3), (0, 0)))
                    for wpos in range(W)]                 # each (L, Cout)
            t_mats.append(jnp.stack(cols, axis=1).reshape(L, W * Cout))
    w_band = jnp.stack(t_mats, axis=0).reshape(3, 3, L, W * Cout)
    w_band = w_band.astype(jnp.bfloat16)                  # bf16 MXU operand

    shift_tiled = jnp.tile(shift, W).reshape(1, W * Cout)  # col wpos*Cout+o -> shift[o]

    # ---- channels-last, spatially padded, W/Cin-flattened, bf16 input
    #      (one cheap XLA transpose+pad+cast; conv taps are generated
    #      inside the kernel from this resident volume).
    xl = jnp.transpose(x, (0, 2, 3, 4, 1)).astype(jnp.bfloat16)  # (B,D,H,W,Cin)
    xp = jnp.pad(xl, ((0, 0), (1, 1), (1, 1), (1, 1), (0, 0)))   # (B,Dp,Hp,Wp,Cin)
    xflat = xp.reshape(B, Dp, Hp, Wp * Cin)

    # ---- depth tile: largest divisor of D keeping ~64 rows per tile and the
    #      output block 8-sublane aligned; fall back to the full extent
    #      (full extent is always a legal block shape).
    td = D
    for cand in range(min(D, max(1, 64 // max(H, 1))), 0, -1):
        if D % cand == 0 and (cand * H) % 8 == 0:
            td = cand
            break

    # ---- N chunk: 128-lane aligned, 256 preferred (matches v6e/v7x MXU width).
    ncols = W * Cout
    if ncols % 256 == 0:
        nc = 256
    elif ncols % 128 == 0:
        nc = 128
    else:
        nc = ncols

    grid = (B, D // td)
    out = pl.pallas_call(
        partial(_basic3x3_kernel, td=td, hh=H, nc=nc),
        out_shape=jax.ShapeDtypeStruct((B, D * H, W * Cout), jnp.float32),
        grid=grid,
        in_specs=[
            # full padded volume for batch b; constant along the depth-tile
            # axis -> DMA'd once per batch and kept resident in VMEM.
            pl.BlockSpec((1, Dp, Hp, Wp * Cin), lambda b, j: (b, 0, 0, 0)),
            pl.BlockSpec((3, 3, L, W * Cout), lambda b, j: (0, 0, 0, 0)),
            pl.BlockSpec((1, W * Cout), lambda b, j: (0, 0)),
        ],
        out_specs=pl.BlockSpec((1, td * H, W * Cout), lambda b, j: (b, j, 0)),
        compiler_params=pltpu.CompilerParams(
            dimension_semantics=("parallel", "parallel")),
    )(xflat, w_band, shift_tiled)

    y = out.reshape(B, D, H, W, Cout)
    return jnp.transpose(y, (0, 4, 1, 2, 3))              # back to NCDHW


# ----------------------------------------------------------------------------
# pure-JAX reference (f32) for a correctness sanity check
# ----------------------------------------------------------------------------
def basic3x3_reference(x, w, gamma, beta, running_mean, running_var, eps=1e-5):
    y = jax.lax.conv_general_dilated(
        x.astype(jnp.float32), w.astype(jnp.float32),
        window_strides=(1, 1, 1), padding=[(1, 1)] * 3,
        dimension_numbers=("NCDHW", "OIDHW", "NCDHW"))
    s = gamma * jax.lax.rsqrt(running_var + eps)
    b = beta - running_mean * s
    y = y * s[None, :, None, None, None] + b[None, :, None, None, None]
    return jnp.maximum(y, 0.0)


# ----------------------------------------------------------------------------
if __name__ == "__main__":
    key = jax.random.PRNGKey(0)
    kx, kw, kg, kb, km, kv = jax.random.split(key, 6)

    B, Cin, Cout, D, H, W = 2, 4, 32, 16, 16, 16
    x = jax.random.normal(kx, (B, Cin, D, H, W), jnp.float32)
    w = jax.random.normal(kw, (Cout, Cin, 3, 3, 3), jnp.float32) * np.sqrt(2.0 / (Cin * 27))
    gamma = 1.0 + 0.1 * jax.random.normal(kg, (Cout,), jnp.float32)
    beta = 0.1 * jax.random.normal(kb, (Cout,), jnp.float32)
    mean = 0.1 * jax.random.normal(km, (Cout,), jnp.float32)
    var = 1.0 + jnp.abs(0.1 * jax.random.normal(kv, (Cout,), jnp.float32))

    fwd = jax.jit(basic3x3_forward)
    out = jax.block_until_ready(fwd(x, w, gamma, beta, mean, var))

    assert out.shape == (B, Cout, D, H, W), out.shape
    assert bool(jnp.all(jnp.isfinite(out)))

    # bf16 MXU operands with f32 accumulation -> compare with relaxed tolerance.
    ref = basic3x3_reference(x, w, gamma, beta, mean, var)
    err = float(jnp.max(jnp.abs(out - ref)))
    assert err < 1e-1, f"max abs err vs reference: {err}"

    print("KERNEL_OK")
</pallas_src>

<mosaic_0001>
module attributes {stable_mosaic.version = 11 : i64} {
  func.func @_basic3x3_kernel(%arg0: i32, %arg1: i32, %arg2: memref<1x18x18x72xbf16, #tpu.memory_space<vmem>>, %arg3: memref<3x3x72x512xbf16, #tpu.memory_space<vmem>>, %arg4: memref<1x512xf32, #tpu.memory_space<vmem>>, %arg5: memref<1x64x512xf32, #tpu.memory_space<vmem>>) attributes {dimension_semantics = [#tpu.dimension_semantics<parallel>, #tpu.dimension_semantics<parallel>], iteration_bounds = array<i64: 2, 4>, scalar_prefetch = 0 : i64, scratch_operands = 0 : i64, tpu.core_type = #tpu.core_type<tc>, window_params = [{transform_indices = @transform_0, window_bounds = array<i64: 1, 18, 18, 72>}, {pipeline_mode = #tpu.pipeline_mode<synchronous>, transform_indices = @transform_1, window_bounds = array<i64: 3, 3, 72, 512>}, {pipeline_mode = #tpu.pipeline_mode<synchronous>, transform_indices = @transform_2, window_bounds = array<i64: 1, 512>}, {transform_indices = @transform_3, window_bounds = array<i64: 1, 64, 512>}]} {
    %c4_i32 = arith.constant 4 : i32
    %0 = arith.muli %arg1, %c4_i32 : i32
    %cst = arith.constant 0.000000e+00 : f32
    %1 = vector.broadcast %cst : f32 to vector<64x256xf32>
    %c0_i32 = arith.constant 0 : i32
    %2 = arith.addi %0, %c0_i32 : i32
    %c0 = arith.constant 0 : index
    %3 = arith.index_cast %2 : i32 to index
    %c0_0 = arith.constant 0 : index
    %c0_1 = arith.constant 0 : index
    %4 = vector.load %arg2[%c0, %3, %c0_0, %c0_1] : memref<1x18x18x72xbf16, #tpu.memory_space<vmem>>, vector<1x4x16x72xbf16>
    %5 = vector.shape_cast %4 : vector<1x4x16x72xbf16> to vector<4x16x72xbf16>
    %6 = vector.shape_cast %5 : vector<4x16x72xbf16> to vector<64x72xbf16>
    %c0_2 = arith.constant 0 : index
    %c0_3 = arith.constant 0 : index
    %c0_4 = arith.constant 0 : index
    %c0_5 = arith.constant 0 : index
    %7 = vector.load %arg3[%c0_2, %c0_3, %c0_4, %c0_5] : memref<3x3x72x512xbf16, #tpu.memory_space<vmem>>, vector<1x1x72x256xbf16>
    %8 = vector.shape_cast %7 : vector<1x1x72x256xbf16> to vector<72x256xbf16>
    %cst_6 = arith.constant dense<0.000000e+00> : vector<64x256xf32>
    %9 = tpu.matmul %6, %8, %cst_6 {dimension_numbers = #tpu.dot_dimension_numbers<[1], [0], [0], [1], [0, 0, 1, 1], [], []>} : vector<64x72xbf16>, vector<72x256xbf16>, vector<64x256xf32> -> vector<64x256xf32>
    %10 = arith.addf %1, %9 : vector<64x256xf32>
    %c0_i32_7 = arith.constant 0 : i32
    %11 = arith.addi %0, %c0_i32_7 : i32
    %c0_8 = arith.constant 0 : index
    %12 = arith.index_cast %11 : i32 to index
    %c1 = arith.constant 1 : index
    %c0_9 = arith.constant 0 : index
    %13 = vector.load %arg2[%c0_8, %12, %c1, %c0_9] : memref<1x18x18x72xbf16, #tpu.memory_space<vmem>>, vector<1x4x16x72xbf16>
    %14 = vector.shape_cast %13 : vector<1x4x16x72xbf16> to vector<4x16x72xbf16>
    %15 = vector.shape_cast %14 : vector<4x16x72xbf16> to vector<64x72xbf16>
    %c0_10 = arith.constant 0 : index
    %c1_11 = arith.constant 1 : index
    %c0_12 = arith.constant 0 : index
    %c0_13 = arith.constant 0 : index
    %16 = vector.load %arg3[%c0_10, %c1_11, %c0_12, %c0_13] : memref<3x3x72x512xbf16, #tpu.memory_space<vmem>>, vector<1x1x72x256xbf16>
    %17 = vector.shape_cast %16 : vector<1x1x72x256xbf16> to vector<72x256xbf16>
    %cst_14 = arith.constant dense<0.000000e+00> : vector<64x256xf32>
    %18 = tpu.matmul %15, %17, %cst_14 {dimension_numbers = #tpu.dot_dimension_numbers<[1], [0], [0], [1], [0, 0, 1, 1], [], []>} : vector<64x72xbf16>, vector<72x256xbf16>, vector<64x256xf32> -> vector<64x256xf32>
    %19 = arith.addf %10, %18 : vector<64x256xf32>
    %c0_i32_15 = arith.constant 0 : i32
    %20 = arith.addi %0, %c0_i32_15 : i32
    %c0_16 = arith.constant 0 : index
    %21 = arith.index_cast %20 : i32 to index
    %c2 = arith.constant 2 : index
    %c0_17 = arith.constant 0 : index
    %22 = vector.load %arg2[%c0_16, %21, %c2, %c0_17] : memref<1x18x18x72xbf16, #tpu.memory_space<vmem>>, vector<1x4x16x72xbf16>
    %23 = vector.shape_cast %22 : vector<1x4x16x72xbf16> to vector<4x16x72xbf16>
    %24 = vector.shape_cast %23 : vector<4x16x72xbf16> to vector<64x72xbf16>
    %c0_18 = arith.constant 0 : index
    %c2_19 = arith.constant 2 : index
    %c0_20 = arith.constant 0 : index
    %c0_21 = arith.constant 0 : index
    %25 = vector.load %arg3[%c0_18, %c2_19, %c0_20, %c0_21] : memref<3x3x72x512xbf16, #tpu.memory_space<vmem>>, vector<1x1x72x256xbf16>
    %26 = vector.shape_cast %25 : vector<1x1x72x256xbf16> to vector<72x256xbf16>
    %cst_22 = arith.constant dense<0.000000e+00> : vector<64x256xf32>
    %27 = tpu.matmul %24, %26, %cst_22 {dimension_numbers = #tpu.dot_dimension_numbers<[1], [0], [0], [1], [0, 0, 1, 1], [], []>} : vector<64x72xbf16>, vector<72x256xbf16>, vector<64x256xf32> -> vector<64x256xf32>
    %28 = arith.addf %19, %27 : vector<64x256xf32>
    %c1_i32 = arith.constant 1 : i32
    %29 = arith.addi %0, %c1_i32 : i32
    %c0_23 = arith.constant 0 : index
    %30 = arith.index_cast %29 : i32 to index
    %c0_24 = arith.constant 0 : index
    %c0_25 = arith.constant 0 : index
    %31 = vector.load %arg2[%c0_23, %30, %c0_24, %c0_25] : memref<1x18x18x72xbf16, #tpu.memory_space<vmem>>, vector<1x4x16x72xbf16>
    %32 = vector.shape_cast %31 : vector<1x4x16x72xbf16> to vector<4x16x72xbf16>
    %33 = vector.shape_cast %32 : vector<4x16x72xbf16> to vector<64x72xbf16>
    %c1_26 = arith.constant 1 : index
    %c0_27 = arith.constant 0 : index
    %c0_28 = arith.constant 0 : index
    %c0_29 = arith.constant 0 : index
    %34 = vector.load %arg3[%c1_26, %c0_27, %c0_28, %c0_29] : memref<3x3x72x512xbf16, #tpu.memory_space<vmem>>, vector<1x1x72x256xbf16>
    %35 = vector.shape_cast %34 : vector<1x1x72x256xbf16> to vector<72x256xbf16>
    %cst_30 = arith.constant dense<0.000000e+00> : vector<64x256xf32>
    %36 = tpu.matmul %33, %35, %cst_30 {dimension_numbers = #tpu.dot_dimension_numbers<[1], [0], [0], [1], [0, 0, 1, 1], [], []>} : vector<64x72xbf16>, vector<72x256xbf16>, vector<64x256xf32> -> vector<64x256xf32>
    %37 = arith.addf %28, %36 : vector<64x256xf32>
    %c1_i32_31 = arith.constant 1 : i32
    %38 = arith.addi %0, %c1_i32_31 : i32
    %c0_32 = arith.constant 0 : index
    %39 = arith.index_cast %38 : i32 to index
    %c1_33 = arith.constant 1 : index
    %c0_34 = arith.constant 0 : index
    %40 = vector.load %arg2[%c0_32, %39, %c1_33, %c0_34] : memref<1x18x18x72xbf16, #tpu.memory_space<vmem>>, vector<1x4x16x72xbf16>
    %41 = vector.shape_cast %40 : vector<1x4x16x72xbf16> to vector<4x16x72xbf16>
    %42 = vector.shape_cast %41 : vector<4x16x72xbf16> to vector<64x72xbf16>
    %c1_35 = arith.constant 1 : index
    %c1_36 = arith.constant 1 : index
    %c0_37 = arith.constant 0 : index
    %c0_38 = arith.constant 0 : index
    %43 = vector.load %arg3[%c1_35, %c1_36, %c0_37, %c0_38] : memref<3x3x72x512xbf16, #tpu.memory_space<vmem>>, vector<1x1x72x256xbf16>
    %44 = vector.shape_cast %43 : vector<1x1x72x256xbf16> to vector<72x256xbf16>
    %cst_39 = arith.constant dense<0.000000e+00> : vector<64x256xf32>
    %45 = tpu.matmul %42, %44, %cst_39 {dimension_numbers = #tpu.dot_dimension_numbers<[1], [0], [0], [1], [0, 0, 1, 1], [], []>} : vector<64x72xbf16>, vector<72x256xbf16>, vector<64x256xf32> -> vector<64x256xf32>
    %46 = arith.addf %37, %45 : vector<64x256xf32>
    %c1_i32_40 = arith.constant 1 : i32
    %47 = arith.addi %0, %c1_i32_40 : i32
    %c0_41 = arith.constant 0 : index
    %48 = arith.index_cast %47 : i32 to index
    %c2_42 = arith.constant 2 : index
    %c0_43 = arith.constant 0 : index
    %49 = vector.load %arg2[%c0_41, %48, %c2_42, %c0_43] : memref<1x18x18x72xbf16, #tpu.memory_space<vmem>>, vector<1x4x16x72xbf16>
    %50 = vector.shape_cast %49 : vector<1x4x16x72xbf16> to vector<4x16x72xbf16>
    %51 = vector.shape_cast %50 : vector<4x16x72xbf16> to vector<64x72xbf16>
    %c1_44 = arith.constant 1 : index
    %c2_45 = arith.constant 2 : index
    %c0_46 = arith.constant 0 : index
    %c0_47 = arith.constant 0 : index
    %52 = vector.load %arg3[%c1_44, %c2_45, %c0_46, %c0_47] : memref<3x3x72x512xbf16, #tpu.memory_space<vmem>>, vector<1x1x72x256xbf16>
    %53 = vector.shape_cast %52 : vector<1x1x72x256xbf16> to vector<72x256xbf16>
    %cst_48 = arith.constant dense<0.000000e+00> : vector<64x256xf32>
    %54 = tpu.matmul %51, %53, %cst_48 {dimension_numbers = #tpu.dot_dimension_numbers<[1], [0], [0], [1], [0, 0, 1, 1], [], []>} : vector<64x72xbf16>, vector<72x256xbf16>, vector<64x256xf32> -> vector<64x256xf32>
    %55 = arith.addf %46, %54 : vector<64x256xf32>
    %c2_i32 = arith.constant 2 : i32
    %56 = arith.addi %0, %c2_i32 : i32
    %c0_49 = arith.constant 0 : index
    %57 = arith.index_cast %56 : i32 to index
    %c0_50 = arith.constant 0 : index
    %c0_51 = arith.constant 0 : index
    %58 = vector.load %arg2[%c0_49, %57, %c0_50, %c0_51] : memref<1x18x18x72xbf16, #tpu.memory_space<vmem>>, vector<1x4x16x72xbf16>
    %59 = vector.shape_cast %58 : vector<1x4x16x72xbf16> to vector<4x16x72xbf16>
    %60 = vector.shape_cast %59 : vector<4x16x72xbf16> to vector<64x72xbf16>
    %c2_52 = arith.constant 2 : index
    %c0_53 = arith.constant 0 : index
    %c0_54 = arith.constant 0 : index
    %c0_55 = arith.constant 0 : index
    %61 = vector.load %arg3[%c2_52, %c0_53, %c0_54, %c0_55] : memref<3x3x72x512xbf16, #tpu.memory_space<vmem>>, vector<1x1x72x256xbf16>
    %62 = vector.shape_cast %61 : vector<1x1x72x256xbf16> to vector<72x256xbf16>
    %cst_56 = arith.constant dense<0.000000e+00> : vector<64x256xf32>
    %63 = tpu.matmul %60, %62, %cst_56 {dimension_numbers = #tpu.dot_dimension_numbers<[1], [0], [0], [1], [0, 0, 1, 1], [], []>} : vector<64x72xbf16>, vector<72x256xbf16>, vector<64x256xf32> -> vector<64x256xf32>
    %64 = arith.addf %55, %63 : vector<64x256xf32>
    %c2_i32_57 = arith.constant 2 : i32
    %65 = arith.addi %0, %c2_i32_57 : i32
    %c0_58 = arith.constant 0 : index
    %66 = arith.index_cast %65 : i32 to index
    %c1_59 = arith.constant 1 : index
    %c0_60 = arith.constant 0 : index
    %67 = vector.load %arg2[%c0_58, %66, %c1_59, %c0_60] : memref<1x18x18x72xbf16, #tpu.memory_space<vmem>>, vector<1x4x16x72xbf16>
    %68 = vector.shape_cast %67 : vector<1x4x16x72xbf16> to vector<4x16x72xbf16>
    %69 = vector.shape_cast %68 : vector<4x16x72xbf16> to vector<64x72xbf16>
    %c2_61 = arith.constant 2 : index
    %c1_62 = arith.constant 1 : index
    %c0_63 = arith.constant 0 : index
    %c0_64 = arith.constant 0 : index
    %70 = vector.load %arg3[%c2_61, %c1_62, %c0_63, %c0_64] : memref<3x3x72x512xbf16, #tpu.memory_space<vmem>>, vector<1x1x72x256xbf16>
    %71 = vector.shape_cast %70 : vector<1x1x72x256xbf16> to vector<72x256xbf16>
    %cst_65 = arith.constant dense<0.000000e+00> : vector<64x256xf32>
    %72 = tpu.matmul %69, %71, %cst_65 {dimension_numbers = #tpu.dot_dimension_numbers<[1], [0], [0], [1], [0, 0, 1, 1], [], []>} : vector<64x72xbf16>, vector<72x256xbf16>, vector<64x256xf32> -> vector<64x256xf32>
    %73 = arith.addf %64, %72 : vector<64x256xf32>
    %c2_i32_66 = arith.constant 2 : i32
    %74 = arith.addi %0, %c2_i32_66 : i32
    %c0_67 = arith.constant 0 : index
    %75 = arith.index_cast %74 : i32 to index
    %c2_68 = arith.constant 2 : index
    %c0_69 = arith.constant 0 : index
    %76 = vector.load %arg2[%c0_67, %75, %c2_68, %c0_69] : memref<1x18x18x72xbf16, #tpu.memory_space<vmem>>, vector<1x4x16x72xbf16>
    %77 = vector.shape_cast %76 : vector<1x4x16x72xbf16> to vector<4x16x72xbf16>
    %78 = vector.shape_cast %77 : vector<4x16x72xbf16> to vector<64x72xbf16>
    %c2_70 = arith.constant 2 : index
    %c2_71 = arith.constant 2 : index
    %c0_72 = arith.constant 0 : index
    %c0_73 = arith.constant 0 : index
    %79 = vector.load %arg3[%c2_70, %c2_71, %c0_72, %c0_73] : memref<3x3x72x512xbf16, #tpu.memory_space<vmem>>, vector<1x1x72x256xbf16>
    %80 = vector.shape_cast %79 : vector<1x1x72x256xbf16> to vector<72x256xbf16>
    %cst_74 = arith.constant dense<0.000000e+00> : vector<64x256xf32>
    %81 = tpu.matmul %78, %80, %cst_74 {dimension_numbers = #tpu.dot_dimension_numbers<[1], [0], [0], [1], [0, 0, 1, 1], [], []>} : vector<64x72xbf16>, vector<72x256xbf16>, vector<64x256xf32> -> vector<64x256xf32>
    %82 = arith.addf %73, %81 : vector<64x256xf32>
    %c0_75 = arith.constant 0 : index
    %c0_76 = arith.constant 0 : index
    %83 = vector.load %arg4[%c0_75, %c0_76] : memref<1x512xf32, #tpu.memory_space<vmem>>, vector<1x256xf32>
    %84 = vector.shape_cast %83 : vector<1x256xf32> to vector<256xf32>
    %85 = vector.shape_cast %84 : vector<256xf32> to vector<1x256xf32>
    %86 = vector.broadcast %85 : vector<1x256xf32> to vector<64x256xf32>
    %87 = arith.addf %82, %86 : vector<64x256xf32>
    %cst_77 = arith.constant 0.000000e+00 : f32
    %88 = vector.broadcast %cst_77 : f32 to vector<64x256xf32>
    %89 = arith.maximumf %87, %88 : vector<64x256xf32>
    %c0_78 = arith.constant 0 : index
    %c0_79 = arith.constant 0 : index
    %c0_80 = arith.constant 0 : index
    %90 = vector.load %arg5[%c0_78, %c0_79, %c0_80] : memref<1x64x512xf32, #tpu.memory_space<vmem>>, vector<1x64x256xf32>
    %91 = vector.shape_cast %90 : vector<1x64x256xf32> to vector<64x256xf32>
    %92 = vector.shape_cast %89 : vector<64x256xf32> to vector<1x64x256xf32>
    tpu.vector_store %arg5[%c0_78, %c0_79, %c0_80], %92 {strides = array<i32>} : memref<1x64x512xf32, #tpu.memory_space<vmem>>, vector<1x64x256xf32>,
    %cst_81 = arith.constant 0.000000e+00 : f32
    %93 = vector.broadcast %cst_81 : f32 to vector<64x256xf32>
    %c0_i32_82 = arith.constant 0 : i32
    %94 = arith.addi %0, %c0_i32_82 : i32
    %c0_83 = arith.constant 0 : index
    %95 = arith.index_cast %94 : i32 to index
    %c0_84 = arith.constant 0 : index
    %c0_85 = arith.constant 0 : index
    %96 = vector.load %arg2[%c0_83, %95, %c0_84, %c0_85] : memref<1x18x18x72xbf16, #tpu.memory_space<vmem>>, vector<1x4x16x72xbf16>
    %97 = vector.shape_cast %96 : vector<1x4x16x72xbf16> to vector<4x16x72xbf16>
    %98 = vector.shape_cast %97 : vector<4x16x72xbf16> to vector<64x72xbf16>
    %c0_86 = arith.constant 0 : index
    %c0_87 = arith.constant 0 : index
    %c0_88 = arith.constant 0 : index
    %c256 = arith.constant 256 : index
    %99 = vector.load %arg3[%c0_86, %c0_87, %c0_88, %c256] : memref<3x3x72x512xbf16, #tpu.memory_space<vmem>>, vector<1x1x72x256xbf16>
    %100 = vector.shape_cast %99 : vector<1x1x72x256xbf16> to vector<72x256xbf16>
    %cst_89 = arith.constant dense<0.000000e+00> : vector<64x256xf32>
    %101 = tpu.matmul %98, %100, %cst_89 {dimension_numbers = #tpu.dot_dimension_numbers<[1], [0], [0], [1], [0, 0, 1, 1], [], []>} : vector<64x72xbf16>, vector<72x256xbf16>, vector<64x256xf32> -> vector<64x256xf32>
    %102 = arith.addf %93, %101 : vector<64x256xf32>
    %c0_i32_90 = arith.constant 0 : i32
    %103 = arith.addi %0, %c0_i32_90 : i32
    %c0_91 = arith.constant 0 : index
    %104 = arith.index_cast %103 : i32 to index
    %c1_92 = arith.constant 1 : index
    %c0_93 = arith.constant 0 : index
    %105 = vector.load %arg2[%c0_91, %104, %c1_92, %c0_93] : memref<1x18x18x72xbf16, #tpu.memory_space<vmem>>, vector<1x4x16x72xbf16>
    %106 = vector.shape_cast %105 : vector<1x4x16x72xbf16> to vector<4x16x72xbf16>
    %107 = vector.shape_cast %106 : vector<4x16x72xbf16> to vector<64x72xbf16>
    %c0_94 = arith.constant 0 : index
    %c1_95 = arith.constant 1 : index
    %c0_96 = arith.constant 0 : index
    %c256_97 = arith.constant 256 : index
    %108 = vector.load %arg3[%c0_94, %c1_95, %c0_96, %c256_97] : memref<3x3x72x512xbf16, #tpu.memory_space<vmem>>, vector<1x1x72x256xbf16>
    %109 = vector.shape_cast %108 : vector<1x1x72x256xbf16> to vector<72x256xbf16>
    %cst_98 = arith.constant dense<0.000000e+00> : vector<64x256xf32>
    %110 = tpu.matmul %107, %109, %cst_98 {dimension_numbers = #tpu.dot_dimension_numbers<[1], [0], [0], [1], [0, 0, 1, 1], [], []>} : vector<64x72xbf16>, vector<72x256xbf16>, vector<64x256xf32> -> vector<64x256xf32>
    %111 = arith.addf %102, %110 : vector<64x256xf32>
    %c0_i32_99 = arith.constant 0 : i32
    %112 = arith.addi %0, %c0_i32_99 : i32
    %c0_100 = arith.constant 0 : index
    %113 = arith.index_cast %112 : i32 to index
    %c2_101 = arith.constant 2 : index
    %c0_102 = arith.constant 0 : index
    %114 = vector.load %arg2[%c0_100, %113, %c2_101, %c0_102] : memref<1x18x18x72xbf16, #tpu.memory_space<vmem>>, vector<1x4x16x72xbf16>
    %115 = vector.shape_cast %114 : vector<1x4x16x72xbf16> to vector<4x16x72xbf16>
    %116 = vector.shape_cast %115 : vector<4x16x72xbf16> to vector<64x72xbf16>
    %c0_103 = arith.constant 0 : index
    %c2_104 = arith.constant 2 : index
    %c0_105 = arith.constant 0 : index
    %c256_106 = arith.constant 256 : index
    %117 = vector.load %arg3[%c0_103, %c2_104, %c0_105, %c256_106] : memref<3x3x72x512xbf16, #tpu.memory_space<vmem>>, vector<1x1x72x256xbf16>
    %118 = vector.shape_cast %117 : vector<1x1x72x256xbf16> to vector<72x256xbf16>
    %cst_107 = arith.constant dense<0.000000e+00> : vector<64x256xf32>
    %119 = tpu.matmul %116, %118, %cst_107 {dimension_numbers = #tpu.dot_dimension_numbers<[1], [0], [0], [1], [0, 0, 1, 1], [], []>} : vector<64x72xbf16>, vector<72x256xbf16>, vector<64x256xf32> -> vector<64x256xf32>
    %120 = arith.addf %111, %119 : vector<64x256xf32>
    %c1_i32_108 = arith.constant 1 : i32
    %121 = arith.addi %0, %c1_i32_108 : i32
    %c0_109 = arith.constant 0 : index
    %122 = arith.index_cast %121 : i32 to index
    %c0_110 = arith.constant 0 : index
    %c0_111 = arith.constant 0 : index
    %123 = vector.load %arg2[%c0_109, %122, %c0_110, %c0_111] : memref<1x18x18x72xbf16, #tpu.memory_space<vmem>>, vector<1x4x16x72xbf16>
    %124 = vector.shape_cast %123 : vector<1x4x16x72xbf16> to vector<4x16x72xbf16>
    %125 = vector.shape_cast %124 : vector<4x16x72xbf16> to vector<64x72xbf16>
    %c1_112 = arith.constant 1 : index
    %c0_113 = arith.constant 0 : index
    %c0_114 = arith.constant 0 : index
    %c256_115 = arith.constant 256 : index
    %126 = vector.load %arg3[%c1_112, %c0_113, %c0_114, %c256_115] : memref<3x3x72x512xbf16, #tpu.memory_space<vmem>>, vector<1x1x72x256xbf16>
    %127 = vector.shape_cast %126 : vector<1x1x72x256xbf16> to vector<72x256xbf16>
    %cst_116 = arith.constant dense<0.000000e+00> : vector<64x256xf32>
    %128 = tpu.matmul %125, %127, %cst_116 {dimension_numbers = #tpu.dot_dimension_numbers<[1], [0], [0], [1], [0, 0, 1, 1], [], []>} : vector<64x72xbf16>, vector<72x256xbf16>, vector<64x256xf32> -> vector<64x256xf32>
    %129 = arith.addf %120, %128 : vector<64x256xf32>
    %c1_i32_117 = arith.constant 1 : i32
    %130 = arith.addi %0, %c1_i32_117 : i32
    %c0_118 = arith.constant 0 : index
    %131 = arith.index_cast %130 : i32 to index
    %c1_119 = arith.constant 1 : index
    %c0_120 = arith.constant 0 : index
    %132 = vector.load %arg2[%c0_118, %131, %c1_119, %c0_120] : memref<1x18x18x72xbf16, #tpu.memory_space<vmem>>, vector<1x4x16x72xbf16>
    %133 = vector.shape_cast %132 : vector<1x4x16x72xbf16> to vector<4x16x72xbf16>
    %134 = vector.shape_cast %133 : vector<4x16x72xbf16> to vector<64x72xbf16>
    %c1_121 = arith.constant 1 : index
    %c1_122 = arith.constant 1 : index
    %c0_123 = arith.constant 0 : index
    %c256_124 = arith.constant 256 : index
    %135 = vector.load %arg3[%c1_121, %c1_122, %c0_123, %c256_124] : memref<3x3x72x512xbf16, #tpu.memory_space<vmem>>, vector<1x1x72x256xbf16>
    %136 = vector.shape_cast %135 : vector<1x1x72x256xbf16> to vector<72x256xbf16>
    %cst_125 = arith.constant dense<0.000000e+00> : vector<64x256xf32>
    %137 = tpu.matmul %134, %136, %cst_125 {dimension_numbers = #tpu.dot_dimension_numbers<[1], [0], [0], [1], [0, 0, 1, 1], [], []>} : vector<64x72xbf16>, vector<72x256xbf16>, vector<64x256xf32> -> vector<64x256xf32>
    %138 = arith.addf %129, %137 : vector<64x256xf32>
    %c1_i32_126 = arith.constant 1 : i32
    %139 = arith.addi %0, %c1_i32_126 : i32
    %c0_127 = arith.constant 0 : index
    %140 = arith.index_cast %139 : i32 to index
    %c2_128 = arith.constant 2 : index
    %c0_129 = arith.constant 0 : index
    %141 = vector.load %arg2[%c0_127, %140, %c2_128, %c0_129] : memref<1x18x18x72xbf16, #tpu.memory_space<vmem>>, vector<1x4x16x72xbf16>
    %142 = vector.shape_cast %141 : vector<1x4x16x72xbf16> to vector<4x16x72xbf16>
    %143 = vector.shape_cast %142 : vector<4x16x72xbf16> to vector<64x72xbf16>
    %c1_130 = arith.constant 1 : index
    %c2_131 = arith.constant 2 : index
    %c0_132 = arith.constant 0 : index
    %c256_133 = arith.constant 256 : index
    %144 = vector.load %arg3[%c1_130, %c2_131, %c0_132, %c256_133] : memref<3x3x72x512xbf16, #tpu.memory_space<vmem>>, vector<1x1x72x256xbf16>
    %145 = vector.shape_cast %144 : vector<1x1x72x256xbf16> to vector<72x256xbf16>
    %cst_134 = arith.constant dense<0.000000e+00> : vector<64x256xf32>
    %146 = tpu.matmul %143, %145, %cst_134 {dimension_numbers = #tpu.dot_dimension_numbers<[1], [0], [0], [1], [0, 0, 1, 1], [], []>} : vector<64x72xbf16>, vector<72x256xbf16>, vector<64x256xf32> -> vector<64x256xf32>
    %147 = arith.addf %138, %146 : vector<64x256xf32>
    %c2_i32_135 = arith.constant 2 : i32
    %148 = arith.addi %0, %c2_i32_135 : i32
    %c0_136 = arith.constant 0 : index
    %149 = arith.index_cast %148 : i32 to index
    %c0_137 = arith.constant 0 : index
    %c0_138 = arith.constant 0 : index
    %150 = vector.load %arg2[%c0_136, %149, %c0_137, %c0_138] : memref<1x18x18x72xbf16, #tpu.memory_space<vmem>>, vector<1x4x16x72xbf16>
    %151 = vector.shape_cast %150 : vector<1x4x16x72xbf16> to vector<4x16x72xbf16>
    %152 = vector.shape_cast %151 : vector<4x16x72xbf16> to vector<64x72xbf16>
    %c2_139 = arith.constant 2 : index
    %c0_140 = arith.constant 0 : index
    %c0_141 = arith.constant 0 : index
    %c256_142 = arith.constant 256 : index
    %153 = vector.load %arg3[%c2_139, %c0_140, %c0_141, %c256_142] : memref<3x3x72x512xbf16, #tpu.memory_space<vmem>>, vector<1x1x72x256xbf16>
    %154 = vector.shape_cast %153 : vector<1x1x72x256xbf16> to vector<72x256xbf16>
    %cst_143 = arith.constant dense<0.000000e+00> : vector<64x256xf32>
    %155 = tpu.matmul %152, %154, %cst_143 {dimension_numbers = #tpu.dot_dimension_numbers<[1], [0], [0], [1], [0, 0, 1, 1], [], []>} : vector<64x72xbf16>, vector<72x256xbf16>, vector<64x256xf32> -> vector<64x256xf32>
    %156 = arith.addf %147, %155 : vector<64x256xf32>
    %c2_i32_144 = arith.constant 2 : i32
    %157 = arith.addi %0, %c2_i32_144 : i32
    %c0_145 = arith.constant 0 : index
    %158 = arith.index_cast %157 : i32 to index
    %c1_146 = arith.constant 1 : index
    %c0_147 = arith.constant 0 : index
    %159 = vector.load %arg2[%c0_145, %158, %c1_146, %c0_147] : memref<1x18x18x72xbf16, #tpu.memory_space<vmem>>, vector<1x4x16x72xbf16>
    %160 = vector.shape_cast %159 : vector<1x4x16x72xbf16> to vector<4x16x72xbf16>
    %161 = vector.shape_cast %160 : vector<4x16x72xbf16> to vector<64x72xbf16>
    %c2_148 = arith.constant 2 : index
    %c1_149 = arith.constant 1 : index
    %c0_150 = arith.constant 0 : index
    %c256_151 = arith.constant 256 : index
    %162 = vector.load %arg3[%c2_148, %c1_149, %c0_150, %c256_151] : memref<3x3x72x512xbf16, #tpu.memory_space<vmem>>, vector<1x1x72x256xbf16>
    %163 = vector.shape_cast %162 : vector<1x1x72x256xbf16> to vector<72x256xbf16>
    %cst_152 = arith.constant dense<0.000000e+00> : vector<64x256xf32>
    %164 = tpu.matmul %161, %163, %cst_152 {dimension_numbers = #tpu.dot_dimension_numbers<[1], [0], [0], [1], [0, 0, 1, 1], [], []>} : vector<64x72xbf16>, vector<72x256xbf16>, vector<64x256xf32> -> vector<64x256xf32>
    %165 = arith.addf %156, %164 : vector<64x256xf32>
    %c2_i32_153 = arith.constant 2 : i32
    %166 = arith.addi %0, %c2_i32_153 : i32
    %c0_154 = arith.constant 0 : index
    %167 = arith.index_cast %166 : i32 to index
    %c2_155 = arith.constant 2 : index
    %c0_156 = arith.constant 0 : index
    %168 = vector.load %arg2[%c0_154, %167, %c2_155, %c0_156] : memref<1x18x18x72xbf16, #tpu.memory_space<vmem>>, vector<1x4x16x72xbf16>
    %169 = vector.shape_cast %168 : vector<1x4x16x72xbf16> to vector<4x16x72xbf16>
    %170 = vector.shape_cast %169 : vector<4x16x72xbf16> to vector<64x72xbf16>
    %c2_157 = arith.constant 2 : index
    %c2_158 = arith.constant 2 : index
    %c0_159 = arith.constant 0 : index
    %c256_160 = arith.constant 256 : index
    %171 = vector.load %arg3[%c2_157, %c2_158, %c0_159, %c256_160] : memref<3x3x72x512xbf16, #tpu.memory_space<vmem>>, vector<1x1x72x256xbf16>
    %172 = vector.shape_cast %171 : vector<1x1x72x256xbf16> to vector<72x256xbf16>
    %cst_161 = arith.constant dense<0.000000e+00> : vector<64x256xf32>
    %173 = tpu.matmul %170, %172, %cst_161 {dimension_numbers = #tpu.dot_dimension_numbers<[1], [0], [0], [1], [0, 0, 1, 1], [], []>} : vector<64x72xbf16>, vector<72x256xbf16>, vector<64x256xf32> -> vector<64x256xf32>
    %174 = arith.addf %165, %173 : vector<64x256xf32>
    %c0_162 = arith.constant 0 : index
    %c256_163 = arith.constant 256 : index
    %175 = vector.load %arg4[%c0_162, %c256_163] : memref<1x512xf32, #tpu.memory_space<vmem>>, vector<1x256xf32>
    %176 = vector.shape_cast %175 : vector<1x256xf32> to vector<256xf32>
    %177 = vector.shape_cast %176 : vector<256xf32> to vector<1x256xf32>
    %178 = vector.broadcast %177 : vector<1x256xf32> to vector<64x256xf32>
    %179 = arith.addf %174, %178 : vector<64x256xf32>
    %cst_164 = arith.constant 0.000000e+00 : f32
    %180 = vector.broadcast %cst_164 : f32 to vector<64x256xf32>
    %181 = arith.maximumf %179, %180 : vector<64x256xf32>
    %c0_165 = arith.constant 0 : index
    %c0_166 = arith.constant 0 : index
    %c256_167 = arith.constant 256 : index
    %182 = vector.load %arg5[%c0_165, %c0_166, %c256_167] : memref<1x64x512xf32, #tpu.memory_space<vmem>>, vector<1x64x256xf32>
    %183 = vector.shape_cast %182 : vector<1x64x256xf32> to vector<64x256xf32>
    %184 = vector.shape_cast %181 : vector<64x256xf32> to vector<1x64x256xf32>
    tpu.vector_store %arg5[%c0_165, %c0_166, %c256_167], %184 {strides = array<i32>} : memref<1x64x512xf32, #tpu.memory_space<vmem>>, vector<1x64x256xf32>,
    return
  }
  func.func @transform_0(%arg0: i32, %arg1: i32) -> (i32, i32, i32, i32) {
    %c0_i32 = arith.constant 0 : i32
    %c0_i32_0 = arith.constant 0 : i32
    %c0_i32_1 = arith.constant 0 : i32
    %c0_i32_2 = arith.constant 0 : i32
    return %arg0, %c0_i32, %c0_i32_0, %c0_i32_1 : i32, i32, i32, i32
  }
  func.func @transform_1(%arg0: i32, %arg1: i32) -> (i32, i32, i32, i32) {
    %c0_i32 = arith.constant 0 : i32
    %c0_i32_0 = arith.constant 0 : i32
    %c0_i32_1 = arith.constant 0 : i32
    %c0_i32_2 = arith.constant 0 : i32
    %c0_i32_3 = arith.constant 0 : i32
    return %c0_i32, %c0_i32_0, %c0_i32_1, %c0_i32_2 : i32, i32, i32, i32
  }
  func.func @transform_2(%arg0: i32, %arg1: i32) -> (i32, i32) {
    %c0_i32 = arith.constant 0 : i32
    %c0_i32_0 = arith.constant 0 : i32
    %c0_i32_1 = arith.constant 0 : i32
    return %c0_i32, %c0_i32_0 : i32, i32
  }
  func.func @transform_3(%arg0: i32, %arg1: i32) -> (i32, i32, i32) {
    %c0_i32 = arith.constant 0 : i32
    %c0_i32_0 = arith.constant 0 : i32
    return %arg0, %arg1, %c0_i32 : i32, i32, i32
  }
}

</mosaic_0001>

<llo_original>
// kernel: tile.8
$region0: #{tile.8}
  #allocation0 [shape = 's32[1]{0}', space=sflag, size = 0x4, scoped, tag = 'scoped memory for tile.8']
  %s0 = inlined_call_operand.vmem [shape: f32[32], index: 0, kind: input, shape index: {}]
  %s1 = inlined_call_operand.vmem [shape: f32[16,32], index: 1, kind: output, shape index: {}]
  // Predicated region
  $region2: #{tile.8} parent=0 // pred_check
    _
  $region3: #{tile.8} parent=0 // pred_check_branch
    %3 = sbr.rel (0) target = $region5
  $region4: #{tile.8} parent=0 // pred_region
    _
  $region5: #{tile.8} parent=0 // pred_fallthru
    _
  %v4 = vld [vmem:[%s0] ss:$0 sm:$0xff]
  %5 = vst [vmem:[%s1] sm:$0xff] %v4
  %s6 = scalar_lea.vmem %s1, 8
  %7 = vst [vmem:[%s6] sm:$0xff] %v4

// kernel: tile.9
$region0: #{tile.9}
  %s0 = inlined_call_operand.vmem [shape: f32[16,32], index: 0, kind: input, shape index: {}]
  %s1 = inlined_call_operand.vmem [shape: f32[1,512], index: 1, kind: output, shape index: {}]
  $region1: #{tile.9} parent=0
    #allocation0 [shape = 'u8[16384]{0}', space=vmem, size = 0x4000, scoped, tag = 'scoped mem for output reshape']
    %v2 = vld [vmem:[%s0] ss:$4 sm:$0xf]
    %vm3 = vcmask 261120
    %4 = vst.msk [vmem:[#allocation0] ss:$8 sm:$0xf] %vm3, %v2
    %s5 = scalar_lea.vmem %s0, 3
    %v6 = vld [vmem:[%s5] ss:$4 sm:$0xf]
    %7 = vrot.lane.b32.xlu0 %v6, 96
    %v8 = vpop.permute.xlu0 %7
    %vm9 = vcmask 1048320
    %10 = vst.msk [vmem:[#allocation0] ss:$8 sm:$0xf] %vm9, %v8
    %s11 = scalar_lea.vmem %s0, 2
    %v12 = vld [vmem:[%s11] ss:$4 sm:$0xf]
    %13 = vrot.lane.b32.xlu0 %v12, 64
    %v14 = vpop.permute.xlu0 %13
    %vm15 = vcmask 785920
    %16 = vst.msk [vmem:[#allocation0] ss:$8 sm:$0xf] %vm15, %v14
    %s17 = scalar_lea.vmem %s0, 1
    %v18 = vld [vmem:[%s17] ss:$4 sm:$0xf]
    %19 = vrot.lane.b32.xlu0 %v18, 32
    %v20 = vpop.permute.xlu0 %19
    %vm21 = vcmask 523520
    %22 = vst.msk [vmem:[#allocation0] ss:$8 sm:$0xf] %vm21, %v20
    %s24 = ssub.s32 2, 1
    %v25 = vld [vmem:[#allocation0] sm:%s24]
    %s27 = ssub.s32 2, 1
    %28 = vst [vmem:[%s1] sm:%s27] %v25
    %s29 = scalar_lea.vmem [#allocation0], 8
    %v30 = vld [vmem:[%s29] sm:%s24]
    %s32 = ssub.s32 2, 1
    %s33 = scalar_lea.vmem %s1, 1
    %34 = vst [vmem:[%s33] sm:%s32] %v30
    %s35 = scalar_lea.vmem [#allocation0], 16
    %v36 = vld [vmem:[%s35] sm:%s24]
    %s38 = ssub.s32 2, 1
    %s39 = scalar_lea.vmem %s1, 2
    %40 = vst [vmem:[%s39] sm:%s38] %v36
    %s41 = scalar_lea.vmem [#allocation0], 24
    %v42 = vld [vmem:[%s41] sm:%s24]
    %s44 = ssub.s32 2, 1
    %s45 = scalar_lea.vmem %s1, 3
    %46 = vst [vmem:[%s45] sm:%s44] %v42

// kernel: basic3x3_forward.1
$region0: #{basic3x3_forward.1}
  #allocation0 [shape = 'u32[]', space=smem, size = 0x4, offset = 0x4, fixed_abs, tag = 'smem constant byte address 0x4 - core index']
  #allocation1 [shape = 'u32[72,128]{1,0:T(1,128)}', space=vmem, size = 0x9000, scoped, tag = 'internal scratch']
  %s0 = inlined_call_operand.vmem [shape: bf16[2,18,18,72], index: 0, kind: input, shape index: {}]
  %s1 = inlined_call_operand.vmem [shape: bf16[3,3,72,512], index: 1, kind: input, shape index: {}]
  %s2 = inlined_call_operand.vmem [shape: f32[1,512], index: 2, kind: input, shape index: {}]
  %s3 = inlined_call_operand.vmem [shape: f32[2,256,512], index: 3, kind: output, shape index: {}]
  %s4 = sld [smem:[#allocation0]]
  $region45: #{basic3x3_forward.1} parent=0
    _
  %s6 = ssub.s32 1, %s4
  %s7 = scalar_select 0, %s6, %s4
  loop: start=0, step=1, limit=10
  $region2: #{basic3x3_forward.1} parent=0 // loop_pre_header
    _
  $region3: #{basic3x3_forward.1} parent=0 // loop_header
    %s9 = sphi 0, %s13
    %p10 = scmp.ge.s32.totalorder %s9, 10
    %s16 = sphi 0, %s28
    %s17 = sphi 0, %s24
    %s18 = sphi 0, %s16
    %s19 = sphi 0, %s17
    %s20 = sphi 0, %s18
    %s21 = sphi 0, %s19
    %s31 = sphi 0, %s33
    %s34 = sphi 0, %s31
    %s35 = sphi 0, %s34
    %s51 = sphi 0, %s35
    %s55 = sphi 0, %s55
    %s57 = sphi 0, %s55
    %s58 = sphi 0, %s57
    %s72 = sphi 0, %s58
    %s76 = sphi 0, %s76
    %s78 = sphi 0, %s76
    %s79 = sphi 0, %s78
    %s93 = sphi 0, %s79
    %s101 = sphi 0, %s103
    %s104 = sphi 0, %s101
    %s105 = sphi 0, %s104
    %s121 = sphi 0, %s105
  $region4: #{basic3x3_forward.1} parent=0 // loop_header_branch
    %12 = sbr.rel (%p10) target = $region8
  $region5: #{basic3x3_forward.1} parent=0 // loop_body
    %s14 = ssub.s32 %s9, 1
    %s15 = ssub.s32 %s9, 2
    %s22 = sadd.s32 1, %s17
    %p23 = scmp.ge.s32.totalorder %s22, 4
    %s24 = scalar_select %p23, 0, %s22
    %s25 = sadd.s32 1, %s16
    %s26 = scalar_select %p23, %s25, %s16
    %p27 = scmp.ge.s32.totalorder %s26, 2
    %s28 = scalar_select %p27, 0, %s26
    %s29 = ssub.s32 %s16, %s28
    %p30 = scmp.eq.s32.totalorder %s29, 0
    %s32 = sadd.s32 %s31, 1
    %s33 = scalar_select %p30, %s31, %s32
    %p36 = pneg %p30
    %p37 = scmp.eq.s32.totalorder %s9, 7
    %p38 = por %p36, %p37
    %p39 = scmp.ne.s32.totalorder %s31, %s34
    %p40 = scmp.eq.s32.totalorder %s9, 0
    %p41 = por %p39, %p40
    %p42 = scmp.ne.s32.totalorder %s31, %s34
    %p43 = scmp.eq.s32.totalorder %s14, 7
    %p44 = por %p42, %p43
    %p45 = scmp.ne.s32.totalorder %s34, %s35
    %p46 = scmp.eq.s32.totalorder %s14, 0
    %p47 = por %p45, %p46
    %p48 = scmp.ne.s32.totalorder %s34, %s35
    %p49 = scmp.eq.s32.totalorder %s15, 7
    %p50 = por %p48, %p49
    %p52 = scmp.ne.s32.totalorder %s35, %s51
    %p53 = scmp.eq.s32.totalorder %s15, 0
    %p54 = por %p52, %p53
    %s56 = sadd.s32 %s55, 1
    %p59 = scmp.eq.s32.totalorder %s9, 7
    %p60 = scmp.ne.s32.totalorder %s55, %s57
    %p61 = scmp.eq.s32.totalorder %s9, 0
    %p62 = por %p60, %p61
    %p63 = scmp.ne.s32.totalorder %s55, %s57
    %p64 = scmp.eq.s32.totalorder %s14, 7
    %p65 = por %p63, %p64
    %p66 = scmp.ne.s32.totalorder %s57, %s58
    %p67 = scmp.eq.s32.totalorder %s14, 0
    %p68 = por %p66, %p67
    %p69 = scmp.ne.s32.totalorder %s57, %s58
    %p70 = scmp.eq.s32.totalorder %s15, 7
    %p71 = por %p69, %p70
    %p73 = scmp.ne.s32.totalorder %s58, %s72
    %p74 = scmp.eq.s32.totalorder %s15, 0
    %p75 = por %p73, %p74
    %s77 = sadd.s32 %s76, 1
    %p80 = scmp.eq.s32.totalorder %s9, 7
    %p81 = scmp.ne.s32.totalorder %s76, %s78
    %p82 = scmp.eq.s32.totalorder %s9, 0
    %p83 = por %p81, %p82
    %p84 = scmp.ne.s32.totalorder %s76, %s78
    %p85 = scmp.eq.s32.totalorder %s14, 7
    %p86 = por %p84, %p85
    %p87 = scmp.ne.s32.totalorder %s78, %s79
    %p88 = scmp.eq.s32.totalorder %s14, 0
    %p89 = por %p87, %p88
    %p90 = scmp.ne.s32.totalorder %s78, %s79
    %p91 = scmp.eq.s32.totalorder %s15, 7
    %p92 = por %p90, %p91
    %p94 = scmp.ne.s32.totalorder %s79, %s93
    %p95 = scmp.eq.s32.totalorder %s15, 0
    %p96 = por %p94, %p95
    %s97 = ssub.s32 %s16, %s28
    %s98 = ssub.s32 %s17, %s24
    %s99 = sor.u32 %s97, %s98
    %p100 = scmp.eq.s32.totalorder %s99, 0
    %s102 = sadd.s32 %s101, 1
    %s103 = scalar_select %p100, %s101, %s102
    %p106 = pneg %p100
    %p107 = scmp.eq.s32.totalorder %s9, 7
    %p108 = por %p106, %p107
    %p109 = scmp.ne.s32.totalorder %s101, %s104
    %p110 = scmp.eq.s32.totalorder %s9, 0
    %p111 = por %p109, %p110
    %p112 = scmp.ne.s32.totalorder %s101, %s104
    %p113 = scmp.eq.s32.totalorder %s14, 7
    %p114 = por %p112, %p113
    %p115 = scmp.ne.s32.totalorder %s104, %s105
    %p116 = scmp.eq.s32.totalorder %s14, 0
    %p117 = por %p115, %p116
    %p118 = scmp.ne.s32.totalorder %s104, %s105
    %p119 = scmp.eq.s32.totalorder %s15, 7
    %p120 = por %p118, %p119
    %p122 = scmp.ne.s32.totalorder %s105, %s121
    %p123 = scmp.eq.s32.totalorder %s15, 0
    %p124 = por %p122, %p123
    %p125 = scmp.le.s32.totalorder 1, %s9
    %p126 = scmp.lt.s32.totalorder %s9, 9
    %p127 = pnand %p125, %p126
    %p128 = pneg %p127
    // Predicated region
    $region9: #{basic3x3_forward.1} parent=5 // pred_check
      _
    $region10: #{basic3x3_forward.1} parent=5 // pred_check_branch
      %130 = sbr.rel (%p127) target = $region12
    $region11: #{basic3x3_forward.1} parent=5 // pred_region
      %s131 = ssub.s32 %s9, 1
      // Predicated region
      $region13: #{basic3x3_forward.1} parent=11 // pred_check
        %p132 = pneg %p68
      $region14: #{basic3x3_forward.1} parent=11 // pred_check_branch
        %134 = sbr.rel (%p132) target = $region16
      $region15: #{basic3x3_forward.1} parent=11 // pred_region
        _
      $region16: #{basic3x3_forward.1} parent=11 // pred_fallthru
        _
      // Predicated region
      $region17: #{basic3x3_forward.1} parent=11 // pred_check
        %p135 = pneg %p89
      $region18: #{basic3x3_forward.1} parent=11 // pred_check_branch
        %137 = sbr.rel (%p135) target = $region20
      $region19: #{basic3x3_forward.1} parent=11 // pred_region
        _
      $region20: #{basic3x3_forward.1} parent=11 // pred_fallthru
        _
    $region12: #{basic3x3_forward.1} parent=5 // pred_fallthru
      _
    %p138 = scmp.lt.s32.totalorder %s9, 8
    // Predicated region
    $region21: #{basic3x3_forward.1} parent=5 // pred_check
      %p139 = pneg %p138
    $region22: #{basic3x3_forward.1} parent=5 // pred_check_branch
      %141 = sbr.rel (%p139) target = $region24
    $region23: #{basic3x3_forward.1} parent=5 // pred_region
      // Predicated region
      $region25: #{basic3x3_forward.1} parent=23 // pred_check
        %p142 = pneg %p41
      $region26: #{basic3x3_forward.1} parent=23 // pred_check_branch
        %144 = sbr.rel (%p142) target = $region28
      $region27: #{basic3x3_forward.1} parent=23 // pred_region
        %p145 = scmp.lt.s32.totalorder %s16, 1
        %s146 = scalar_select %p145, %s16, 1
        %s147 = smul.addr %s146, 54
        %s148 = smul.addr %s147, 4
        %s149 = scalar_lea.vmem %s0, %s148
      $region28: #{basic3x3_forward.1} parent=23 // pred_fallthru
        _
    $region24: #{basic3x3_forward.1} parent=5 // pred_fallthru
      _
    %p150 = scmp.le.s32.totalorder 1, %s9
    %p151 = scmp.lt.s32.totalorder %s9, 9
    %p152 = pnand %p150, %p151
    %p153 = pneg %p152
    // Predicated region
    $region29: #{basic3x3_forward.1} parent=5 // pred_check
      _
    $region30: #{basic3x3_forward.1} parent=5 // pred_check_branch
      %155 = sbr.rel (%p152) target = $region32
    $region31: #{basic3x3_forward.1} parent=5 // pred_region
      %s156 = ssub.s32 %s9, 1
      %p157 = scmp.lt.s32.totalorder %s18, 1
      %s158 = scalar_select %p157, %s18, 1
      %s159 = smul.addr %s158, 54
      %s160 = smul.addr %s159, 4
      %s161 = scalar_lea.vmem %s0, %s160
      %p162 = pneg %p47
      %p163 = pneg %p44
      %p164 = pneg %p68
      %p165 = pneg %p65
      %p166 = pneg %p89
      %p167 = pneg %p86
      %p168 = pneg %p117
      %p169 = pneg %p114
      %s170 = smul.u32 8, %s19
      %p171 = scmp.lt.s32.totalorder %s18, 1
      %s172 = scalar_select %p171, %s18, 1
      %p173 = scmp.lt.s32.totalorder %s170, 31
      %s174 = scalar_select %p173, %s170, 31
      %s175 = smul.addr %s174, 4
      %s176 = smul.addr %s172, 128
      %s177 = sadd.s32 %s175, %s176
      %s178 = smul.addr %s177, 8
      %s179 = scalar_lea.vmem %s3, %s178
      %p180 = scmp.lt.s32.totalorder %s18, 1
      %s181 = scalar_select %p180, %s18, 1
      %s182 = smul.addr %s181, 54
      %s183 = smul.addr %s182, 4
      %s184 = scalar_lea.vmem %s0, %s183
      %s185 = smul.u32 8, %s19
      %p186 = scmp.lt.s32.totalorder %s18, 1
      %s187 = scalar_select %p186, %s18, 1
      %p188 = scmp.lt.s32.totalorder %s185, 31
      %s189 = scalar_select %p188, %s185, 31
      %s190 = smul.addr %s189, 4
      %s191 = smul.addr %s187, 128
      %s192 = sadd.s32 %s190, %s191
      %s193 = smul.addr %s192, 8
      %s194 = scalar_lea.vmem %s3, %s193
      %s195 = smul.u32 8, %s19
      %s197 = smul.u32 %s19, 4
      %s198 = smul.u32 %s197, 3
      %s199 = smul.addr %s198, 4
      %s200 = scalar_lea.vmem %s184, %s199
      %v201 = vld [vmem:[%s200] sm:$0xf]
      %v202 = vld [vmem:[%s200 + $0x4] sm:$0xf]
      %v203 = vld [vmem:[%s200 + $0xc] sm:$0xf]
      %v204 = vld [vmem:[%s200 + $0x10] sm:$0xf]
      %v205 = vld [vmem:[%s200 + $0x18] sm:$0xf]
      %v206 = vld [vmem:[%s200 + $0x1c] sm:$0xf]
      %v207 = vld [vmem:[%s200 + $0x24] sm:$0xf]
      %v208 = vld [vmem:[%s200 + $0x28] sm:$0xf]
      %v209 = vld [vmem:[%s1] sm:$0xff]
      %v210 = vld [vmem:[%s1 + $0x10] sm:$0xff]
      %v211 = vld [vmem:[%s1 + $0x20] sm:$0xff]
      %v212 = vld [vmem:[%s1 + $0x30] sm:$0xff]
      %v213 = vld [vmem:[%s1 + $0x40] sm:$0xff]
      %v214 = vld [vmem:[%s1 + $0x50] sm:$0xff]
      %v215 = vld [vmem:[%s1 + $0x60] sm:$0xff]
      %v216 = vld [vmem:[%s1 + $0x70] sm:$0xff]
      %v217 = vld [vmem:[%s1 + $0x80] sm:$0xff]
      %v218 = vld [vmem:[%s200 + $0x8] sm:$0x1]
      %v219 = vld [vmem:[%s200 + $0x14] sm:$0x1]
      %v220 = vld [vmem:[%s200 + $0x20] sm:$0x1]
      %v221 = vld [vmem:[%s200 + $0x2c] sm:$0x1]
      %vm222 = vsmask.f32 3328
      %vm223 = vsmask.f32 7440
      %vm224 = vmor %vm222, %vm223
      %v226 = vshrl.u32 %v201, 16
      %v228 = vrot.slane %v226, 4
      %v229 = vshll.u32 %v201, 16
      %v231 = vrot.slane %v229, 5
      %v232 = vor.u32 %v228, %v231
      %v233 = vrot.slane %v232, 4
      %v235 = vshll.u32 %v202, 16
      %v237 = vrot.slane %v235, 5
      %v238 = vsel %vm224, %v233, %v237
      %v239 = vshrl.u32 %v202, 16
      %v241 = vrot.slane %v239, 4
      %v242 = vor.u32 %v241, %v237
      %v243 = vrot.slane %v242, 4
      %v245 = vshll.u32 %v218, 16
      %v247 = vrot.slane %v245, 5
      %v248 = vsel %vm224, %v243, %v247
      %v250 = vshrl.u32 %v203, 16
      %v252 = vrot.slane %v250, 4
      %v253 = vshll.u32 %v203, 16
      %v255 = vrot.slane %v253, 5
      %v256 = vor.u32 %v252, %v255
      %v257 = vrot.slane %v256, 4
      %v259 = vshll.u32 %v204, 16
      %v261 = vrot.slane %v259, 5
      %v262 = vsel %vm224, %v257, %v261
      %v263 = vshrl.u32 %v204, 16
      %v265 = vrot.slane %v263, 4
      %v266 = vor.u32 %v265, %v261
      %v267 = vrot.slane %v266, 4
      %v269 = vshll.u32 %v219, 16
      %v271 = vrot.slane %v269, 5
      %v272 = vsel %vm224, %v267, %v271
      %v274 = vshrl.u32 %v205, 16
      %v276 = vrot.slane %v274, 4
      %v277 = vshll.u32 %v205, 16
      %v279 = vrot.slane %v277, 5
      %v280 = vor.u32 %v276, %v279
      %v281 = vrot.slane %v280, 4
      %v283 = vshll.u32 %v206, 16
      %v285 = vrot.slane %v283, 5
      %v286 = vsel %vm224, %v281, %v285
      %v287 = vshrl.u32 %v206, 16
      %v289 = vrot.slane %v287, 4
      %v290 = vor.u32 %v289, %v285
      %v291 = vrot.slane %v290, 4
      %v293 = vshll.u32 %v220, 16
      %v295 = vrot.slane %v293, 5
      %v296 = vsel %vm224, %v291, %v295
      %v298 = vshrl.u32 %v207, 16
      %v300 = vrot.slane %v298, 4
      %v301 = vshll.u32 %v207, 16
      %v303 = vrot.slane %v301, 5
      %v304 = vor.u32 %v300, %v303
      %v305 = vrot.slane %v304, 4
      %v307 = vshll.u32 %v208, 16
      %v309 = vrot.slane %v307, 5
      %v310 = vsel %vm224, %v305, %v309
      %v311 = vshrl.u32 %v208, 16
      %v313 = vrot.slane %v311, 4
      %v314 = vor.u32 %v313, %v309
      %v315 = vrot.slane %v314, 4
      %v317 = vshll.u32 %v221, 16
      %v319 = vrot.slane %v317, 5
      %v320 = vsel %vm224, %v315, %v319
      %s321 = scalar_lea.vmem %s1, 144
      %v322 = vld [vmem:[%s321] sm:$0xff]
      %v323 = vld [vmem:[%s321 + $0x10] sm:$0xff]
      %v324 = vld [vmem:[%s321 + $0x20] sm:$0xff]
      %v325 = vld [vmem:[%s321 + $0x30] sm:$0xff]
      %v326 = vld [vmem:[%s321 + $0x40] sm:$0xff]
      %v327 = vld [vmem:[%s321 + $0x50] sm:$0xff]
      %v328 = vld [vmem:[%s321 + $0x60] sm:$0xff]
      %v329 = vld [vmem:[%s321 + $0x70] sm:$0xff]
      %v330 = vld [vmem:[%s321 + $0x80] sm:$0xff]
      %v331 = vunpack.c.l.b16 %v238
      %v332 = vunpack.c.l.b16 %v248
      %v333 = vunpack.c.l.b16 %v262
      %v334 = vunpack.c.l.b16 %v272
      %v335 = vunpack.c.l.b16 %v286
      %v336 = vunpack.c.l.b16 %v296
      %v337 = vunpack.c.l.b16 %v310
      %v338 = vunpack.c.l.b16 %v320
      %v339 = vpack.c.b16 %v332, %v331
      %v340 = vpack.c.b16 %v334, %v333
      %v341 = vpack.c.b16 %v336, %v335
      %v342 = vpack.c.b16 %v338, %v337
      %v352 = vunpack.c.l.b16 %v322
      %v353 = vunpack.c.h.b16 %v322
      %v354 = vunpack.c.l.b16 %v323
      %v355 = vunpack.c.h.b16 %v323
      %v356 = vunpack.c.l.b16 %v324
      %v357 = vunpack.c.h.b16 %v324
      %v358 = vunpack.c.l.b16 %v325
      %v359 = vunpack.c.h.b16 %v325
      %v360 = vunpack.c.l.b16 %v326
      %v361 = vunpack.c.h.b16 %v326
      %v362 = vunpack.c.l.b16 %v327
      %v363 = vunpack.c.h.b16 %v327
      %v364 = vunpack.c.l.b16 %v328
      %v365 = vunpack.c.h.b16 %v328
      %v366 = vunpack.c.l.b16 %v329
      %v367 = vunpack.c.h.b16 %v329
      %v368 = vunpack.c.l.b16 %v330
      %v369 = vunpack.c.h.b16 %v330
      %v370 = vpack.c.b16 %v354, %v352
      %v371 = vpack.c.b16 %v355, %v353
      %v372 = vpack.c.b16 %v358, %v356
      %v373 = vpack.c.b16 %v359, %v357
      %v374 = vpack.c.b16 %v362, %v360
      %v375 = vpack.c.b16 %v363, %v361
      %v376 = vpack.c.b16 %v366, %v364
      %v377 = vpack.c.b16 %v367, %v365
      %v378 = vpack.c.b16 %v368, %v368
      %v379 = vpack.c.b16 %v369, %v369
      %vm388 = vcmask 588800
      %v390 = vsel %vm388, %v339, 0
      %v393 = vsel %vm388, %v340, 0
      %v396 = vsel %vm388, %v341, 0
      %v399 = vsel %vm388, %v342, 0
      %vm401 = vcmask 1043456
      %v403 = vsel %vm401, %v378, 0
      %v406 = vsel %vm401, %v379, 0
      %408 = vmatpush.bf16.msra.mxu0 0
      %409 = vmatpush.bf16.msra.mxu0 0
      %410 = vmatpush.bf16.msra.mxu0 0
      %411 = vmatpush.bf16.msra.mxu0 %v403
      %412 = vmatpush.bf16.msra.mxu0 %v376
      %413 = vmatpush.bf16.msra.mxu0 %v374
      %414 = vmatpush.bf16.msra.mxu0 %v372
      %415 = vmatpush.bf16.msra.mxu0 %v370
      %416 = vmatmul.bf16.gmra.mxu0 %v390
      %v417 = vpop.f32.mrf.mxu0
      %v418 = vadd.f32 0.0, %v417
      %v419 = vpop.f32.mrf.mxu0
      %v420 = vadd.f32 0.0, %v419
      %421 = vmatmul.bf16.gmra.mxu0 %v393
      %v422 = vpop.f32.mrf.mxu0
      %v423 = vadd.f32 0.0, %v422
      %v424 = vpop.f32.mrf.mxu0
      %v425 = vadd.f32 0.0, %v424
      %426 = vmatmul.bf16.gmra.mxu0 %v396
      %v427 = vpop.f32.mrf.mxu0
      %v428 = vadd.f32 0.0, %v427
      %v429 = vpop.f32.mrf.mxu0
      %v430 = vadd.f32 0.0, %v429
      %431 = vmatmul.bf16.gmra.mxu0 %v399
      %v432 = vpop.f32.mrf.mxu0
      %v433 = vadd.f32 0.0, %v432
      %v434 = vpop.f32.mrf.mxu0
      %v435 = vadd.f32 0.0, %v434
      %436 = vdwg.mxu0
      %437 = vmatpush.bf16.msra.mxu0 0
      %438 = vmatpush.bf16.msra.mxu0 0
      %439 = vmatpush.bf16.msra.mxu0 0
      %440 = vmatpush.bf16.msra.mxu0 %v406
      %441 = vmatpush.bf16.msra.mxu0 %v377
      %442 = vmatpush.bf16.msra.mxu0 %v375
      %443 = vmatpush.bf16.msra.mxu0 %v373
      %444 = vmatpush.bf16.msra.mxu0 %v371
      %445 = vmatmul.bf16.gmra.mxu0 %v390
      %v446 = vpop.f32.mrf.mxu0
      %v447 = vadd.f32 0.0, %v446
      %v448 = vpop.f32.mrf.mxu0
      %v449 = vadd.f32 0.0, %v448
      %450 = vmatmul.bf16.gmra.mxu0 %v393
      %v451 = vpop.f32.mrf.mxu0
      %v452 = vadd.f32 0.0, %v451
      %v453 = vpop.f32.mrf.mxu0
      %v454 = vadd.f32 0.0, %v453
      %455 = vmatmul.bf16.gmra.mxu0 %v396
      %v456 = vpop.f32.mrf.mxu0
      %v457 = vadd.f32 0.0, %v456
      %v458 = vpop.f32.mrf.mxu0
      %v459 = vadd.f32 0.0, %v458
      %460 = vmatmul.bf16.gmra.mxu0 %v399
      %v461 = vpop.f32.mrf.mxu0
      %v462 = vadd.f32 0.0, %v461
      %v463 = vpop.f32.mrf.mxu0
      %v464 = vadd.f32 0.0, %v463
      %465 = vdwg.mxu0
      %v474 = vunpack.c.l.b16 %v201
      %v475 = vunpack.c.l.b16 %v202
      %v476 = vunpack.c.l.b16 %v203
      %v477 = vunpack.c.l.b16 %v204
      %v478 = vunpack.c.l.b16 %v205
      %v479 = vunpack.c.l.b16 %v206
      %v480 = vunpack.c.l.b16 %v207
      %v481 = vunpack.c.l.b16 %v208
      %v482 = vpack.c.b16 %v475, %v474
      %v483 = vpack.c.b16 %v477, %v476
      %v484 = vpack.c.b16 %v479, %v478
      %v485 = vpack.c.b16 %v481, %v480
      %v495 = vunpack.c.l.b16 %v209
      %v496 = vunpack.c.h.b16 %v209
      %v497 = vunpack.c.l.b16 %v210
      %v498 = vunpack.c.h.b16 %v210
      %v499 = vunpack.c.l.b16 %v211
      %v500 = vunpack.c.h.b16 %v211
      %v501 = vunpack.c.l.b16 %v212
      %v502 = vunpack.c.h.b16 %v212
      %v503 = vunpack.c.l.b16 %v213
      %v504 = vunpack.c.h.b16 %v213
      %v505 = vunpack.c.l.b16 %v214
      %v506 = vunpack.c.h.b16 %v214
      %v507 = vunpack.c.l.b16 %v215
      %v508 = vunpack.c.h.b16 %v215
      %v509 = vunpack.c.l.b16 %v216
      %v510 = vunpack.c.h.b16 %v216
      %v511 = vunpack.c.l.b16 %v217
      %v512 = vunpack.c.h.b16 %v217
      %v513 = vpack.c.b16 %v497, %v495
      %v514 = vpack.c.b16 %v498, %v496
      %v515 = vpack.c.b16 %v501, %v499
      %v516 = vpack.c.b16 %v502, %v500
      %v517 = vpack.c.b16 %v505, %v503
      %v518 = vpack.c.b16 %v506, %v504
      %v519 = vpack.c.b16 %v509, %v507
      %v520 = vpack.c.b16 %v510, %v508
      %v521 = vpack.c.b16 %v511, %v511
      %v522 = vpack.c.b16 %v512, %v512
      %v532 = vsel %vm388, %v482, 0
      %v535 = vsel %vm388, %v483, 0
      %v538 = vsel %vm388, %v484, 0
      %v541 = vsel %vm388, %v485, 0
      %v544 = vsel %vm401, %v521, 0
      %v547 = vsel %vm401, %v522, 0
      %549 = vmatpush.bf16.msra.mxu0 0
      %550 = vmatpush.bf16.msra.mxu0 0
      %551 = vmatpush.bf16.msra.mxu0 0
      %552 = vmatpush.bf16.msra.mxu0 %v544
      %553 = vmatpush.bf16.msra.mxu0 %v519
      %554 = vmatpush.bf16.msra.mxu0 %v517
      %555 = vmatpush.bf16.msra.mxu0 %v515
      %556 = vmatpush.bf16.msra.mxu0 %v513
      %557 = vmatmul.bf16.gmra.mxu0 %v532
      %v558 = vpop.f32.mrf.mxu0
      %v559 = vadd.f32 %v418, %v558
      %v560 = vpop.f32.mrf.mxu0
      %v561 = vadd.f32 %v420, %v560
      %562 = vmatmul.bf16.gmra.mxu0 %v535
      %v563 = vpop.f32.mrf.mxu0
      %v564 = vadd.f32 %v423, %v563
      %v565 = vpop.f32.mrf.mxu0
      %v566 = vadd.f32 %v425, %v565
      %567 = vmatmul.bf16.gmra.mxu0 %v538
      %v568 = vpop.f32.mrf.mxu0
      %v569 = vadd.f32 %v428, %v568
      %v570 = vpop.f32.mrf.mxu0
      %v571 = vadd.f32 %v430, %v570
      %572 = vmatmul.bf16.gmra.mxu0 %v541
      %v573 = vpop.f32.mrf.mxu0
      %v574 = vadd.f32 %v433, %v573
      %v575 = vpop.f32.mrf.mxu0
      %v576 = vadd.f32 %v435, %v575
      %577 = vdwg.mxu0
      %578 = vmatpush.bf16.msra.mxu0 0
      %579 = vmatpush.bf16.msra.mxu0 0
      %580 = vmatpush.bf16.msra.mxu0 0
      %581 = vmatpush.bf16.msra.mxu0 %v547
      %582 = vmatpush.bf16.msra.mxu0 %v520
      %583 = vmatpush.bf16.msra.mxu0 %v518
      %584 = vmatpush.bf16.msra.mxu0 %v516
      %585 = vmatpush.bf16.msra.mxu0 %v514
      %586 = vmatmul.bf16.gmra.mxu0 %v532
      %v587 = vpop.f32.mrf.mxu0
      %v588 = vadd.f32 %v447, %v587
      %v589 = vpop.f32.mrf.mxu0
      %v590 = vadd.f32 %v449, %v589
      %591 = vmatmul.bf16.gmra.mxu0 %v535
      %v592 = vpop.f32.mrf.mxu0
      %v593 = vadd.f32 %v452, %v592
      %v594 = vpop.f32.mrf.mxu0
      %v595 = vadd.f32 %v454, %v594
      %596 = vmatmul.bf16.gmra.mxu0 %v538
      %v597 = vpop.f32.mrf.mxu0
      %v598 = vadd.f32 %v457, %v597
      %v599 = vpop.f32.mrf.mxu0
      %v600 = vadd.f32 %v459, %v599
      %601 = vmatmul.bf16.gmra.mxu0 %v541
      %v602 = vpop.f32.mrf.mxu0
      %v603 = vadd.f32 %v462, %v602
      %v604 = vpop.f32.mrf.mxu0
      %v605 = vadd.f32 %v464, %v604
      %606 = vdwg.mxu0
      %v607 = vld [vmem:[%s200] sm:$0xe]
      %v608 = vld [vmem:[%s200 + $0xc] sm:$0xe]
      %v609 = vld [vmem:[%s200 + $0x18] sm:$0xe]
      %v610 = vld [vmem:[%s200 + $0x24] sm:$0xe]
      %vm619 = vcmask 1042432
      %vm620 = vcmask 1046532
      %vm621 = vmor %vm619, %vm620
      %v622 = vrot.slane %v607, 5
      %v623 = vrot.slane %v622, 4
      %v624 = vrot.slane %v202, 5
      %v625 = vsel %vm621, %v623, %v624
      %v626 = vrot.slane %v624, 4
      %v627 = vrot.slane %v218, 5
      %v628 = vsel %vm621, %v626, %v627
      %v629 = vrot.slane %v608, 5
      %v630 = vrot.slane %v629, 4
      %v631 = vrot.slane %v204, 5
      %v632 = vsel %vm621, %v630, %v631
      %v633 = vrot.slane %v631, 4
      %v634 = vrot.slane %v219, 5
      %v635 = vsel %vm621, %v633, %v634
      %v636 = vrot.slane %v609, 5
      %v637 = vrot.slane %v636, 4
      %v638 = vrot.slane %v206, 5
      %v639 = vsel %vm621, %v637, %v638
      %v640 = vrot.slane %v638, 4
      %v641 = vrot.slane %v220, 5
      %v642 = vsel %vm621, %v640, %v641
      %v643 = vrot.slane %v610, 5
      %v644 = vrot.slane %v643, 4
      %v645 = vrot.slane %v208, 5
      %v646 = vsel %vm621, %v644, %v645
      %v647 = vrot.slane %v645, 4
      %v648 = vrot.slane %v221, 5
      %v649 = vsel %vm621, %v647, %v648
      %s650 = scalar_lea.vmem %s1, 288
      %v651 = vld [vmem:[%s650] sm:$0xff]
      %v652 = vld [vmem:[%s650 + $0x10] sm:$0xff]
      %v653 = vld [vmem:[%s650 + $0x20] sm:$0xff]
      %v654 = vld [vmem:[%s650 + $0x30] sm:$0xff]
      %v655 = vld [vmem:[%s650 + $0x40] sm:$0xff]
      %v656 = vld [vmem:[%s650 + $0x50] sm:$0xff]
      %v657 = vld [vmem:[%s650 + $0x60] sm:$0xff]
      %v658 = vld [vmem:[%s650 + $0x70] sm:$0xff]
      %v659 = vld [vmem:[%s650 + $0x80] sm:$0xff]
      %v660 = vunpack.c.l.b16 %v625
      %v661 = vunpack.c.l.b16 %v628
      %v662 = vunpack.c.l.b16 %v632
      %v663 = vunpack.c.l.b16 %v635
      %v664 = vunpack.c.l.b16 %v639
      %v665 = vunpack.c.l.b16 %v642
      %v666 = vunpack.c.l.b16 %v646
      %v667 = vunpack.c.l.b16 %v649
      %v668 = vpack.c.b16 %v661, %v660
      %v669 = vpack.c.b16 %v663, %v662
      %v670 = vpack.c.b16 %v665, %v664
      %v671 = vpack.c.b16 %v667, %v666
      %v681 = vunpack.c.l.b16 %v651
      %v682 = vunpack.c.h.b16 %v651
      %v683 = vunpack.c.l.b16 %v652
      %v684 = vunpack.c.h.b16 %v652
      %v685 = vunpack.c.l.b16 %v653
      %v686 = vunpack.c.h.b16 %v653
      %v687 = vunpack.c.l.b16 %v654
      %v688 = vunpack.c.h.b16 %v654
      %v689 = vunpack.c.l.b16 %v655
      %v690 = vunpack.c.h.b16 %v655
      %v691 = vunpack.c.l.b16 %v656
      %v692 = vunpack.c.h.b16 %v656
      %v693 = vunpack.c.l.b16 %v657
      %v694 = vunpack.c.h.b16 %v657
      %v695 = vunpack.c.l.b16 %v658
      %v696 = vunpack.c.h.b16 %v658
      %v697 = vunpack.c.l.b16 %v659
      %v698 = vunpack.c.h.b16 %v659
      %v699 = vpack.c.b16 %v683, %v681
      %v700 = vpack.c.b16 %v684, %v682
      %v701 = vpack.c.b16 %v687, %v685
      %v702 = vpack.c.b16 %v688, %v686
      %v703 = vpack.c.b16 %v691, %v689
      %v704 = vpack.c.b16 %v692, %v690
      %v705 = vpack.c.b16 %v695, %v693
      %v706 = vpack.c.b16 %v696, %v694
      %v707 = vpack.c.b16 %v697, %v697
      %v708 = vpack.c.b16 %v698, %v698
      %v718 = vsel %vm388, %v668, 0
      %v721 = vsel %vm388, %v669, 0
      %v724 = vsel %vm388, %v670, 0
      %v727 = vsel %vm388, %v671, 0
      %v730 = vsel %vm401, %v707, 0
      %v733 = vsel %vm401, %v708, 0
      %735 = vmatpush.bf16.msra.mxu0 0
      %736 = vmatpush.bf16.msra.mxu0 0
      %737 = vmatpush.bf16.msra.mxu0 0
      %738 = vmatpush.bf16.msra.mxu0 %v730
      %739 = vmatpush.bf16.msra.mxu0 %v705
      %740 = vmatpush.bf16.msra.mxu0 %v703
      %741 = vmatpush.bf16.msra.mxu0 %v701
      %742 = vmatpush.bf16.msra.mxu0 %v699
      %743 = vmatmul.bf16.gmra.mxu0 %v718
      %v744 = vpop.f32.mrf.mxu0
      %v745 = vadd.f32 0.0, %v744
      %v746 = vpop.f32.mrf.mxu0
      %v747 = vadd.f32 0.0, %v746
      %748 = vmatmul.bf16.gmra.mxu0 %v721
      %v749 = vpop.f32.mrf.mxu0
      %v750 = vadd.f32 0.0, %v749
      %v751 = vpop.f32.mrf.mxu0
      %v752 = vadd.f32 0.0, %v751
      %753 = vmatmul.bf16.gmra.mxu0 %v724
      %v754 = vpop.f32.mrf.mxu0
      %v755 = vadd.f32 0.0, %v754
      %v756 = vpop.f32.mrf.mxu0
      %v757 = vadd.f32 0.0, %v756
      %758 = vmatmul.bf16.gmra.mxu0 %v727
      %v759 = vpop.f32.mrf.mxu0
      %v760 = vadd.f32 0.0, %v759
      %v761 = vpop.f32.mrf.mxu0
      %v762 = vadd.f32 0.0, %v761
      %763 = vdwg.mxu0
      %764 = vmatpush.bf16.msra.mxu0 0
      %765 = vmatpush.bf16.msra.mxu0 0
      %766 = vmatpush.bf16.msra.mxu0 0
      %767 = vmatpush.bf16.msra.mxu0 %v733
      %768 = vmatpush.bf16.msra.mxu0 %v706
      %769 = vmatpush.bf16.msra.mxu0 %v704
      %770 = vmatpush.bf16.msra.mxu0 %v702
      %771 = vmatpush.bf16.msra.mxu0 %v700
      %772 = vmatmul.bf16.gmra.mxu0 %v718
      %v773 = vpop.f32.mrf.mxu0
      %v774 = vadd.f32 0.0, %v773
      %v775 = vpop.f32.mrf.mxu0
      %v776 = vadd.f32 0.0, %v775
      %777 = vmatmul.bf16.gmra.mxu0 %v721
      %v778 = vpop.f32.mrf.mxu0
      %v779 = vadd.f32 0.0, %v778
      %v780 = vpop.f32.mrf.mxu0
      %v781 = vadd.f32 0.0, %v780
      %782 = vmatmul.bf16.gmra.mxu0 %v724
      %v783 = vpop.f32.mrf.mxu0
      %v784 = vadd.f32 0.0, %v783
      %v785 = vpop.f32.mrf.mxu0
      %v786 = vadd.f32 0.0, %v785
      %787 = vmatmul.bf16.gmra.mxu0 %v727
      %v788 = vpop.f32.mrf.mxu0
      %v789 = vadd.f32 0.0, %v788
      %v790 = vpop.f32.mrf.mxu0
      %v791 = vadd.f32 0.0, %v790
      %792 = vdwg.mxu0
      %v793 = vadd.f32 %v559, %v745
      %v794 = vadd.f32 %v588, %v774
      %v795 = vadd.f32 %v561, %v747
      %v796 = vadd.f32 %v590, %v776
      %v797 = vadd.f32 %v564, %v750
      %v798 = vadd.f32 %v593, %v779
      %v799 = vadd.f32 %v566, %v752
      %v800 = vadd.f32 %v595, %v781
      %v801 = vadd.f32 %v569, %v755
      %v802 = vadd.f32 %v598, %v784
      %v803 = vadd.f32 %v571, %v757
      %v804 = vadd.f32 %v600, %v786
      %v805 = vadd.f32 %v574, %v760
      %v806 = vadd.f32 %v603, %v789
      %v807 = vadd.f32 %v576, %v762
      %v808 = vadd.f32 %v605, %v791
      %s809 = sadd.s32 %s197, 1
      %s810 = smul.u32 %s809, 3
      %s811 = smul.addr %s810, 4
      %s812 = scalar_lea.vmem %s184, %s811
      %v813 = vld [vmem:[%s812] sm:$0xf]
      %v814 = vld [vmem:[%s812 + $0x4] sm:$0xf]
      %v815 = vld [vmem:[%s812 + $0xc] sm:$0xf]
      %v816 = vld [vmem:[%s812 + $0x10] sm:$0xf]
      %v817 = vld [vmem:[%s812 + $0x18] sm:$0xf]
      %v818 = vld [vmem:[%s812 + $0x1c] sm:$0xf]
      %v819 = vld [vmem:[%s812 + $0x24] sm:$0xf]
      %v820 = vld [vmem:[%s812 + $0x28] sm:$0xf]
      %s821 = scalar_lea.vmem %s1, 432
      %v822 = vld [vmem:[%s821] sm:$0xff]
      %v823 = vld [vmem:[%s821 + $0x10] sm:$0xff]
      %v824 = vld [vmem:[%s821 + $0x20] sm:$0xff]
      %v825 = vld [vmem:[%s821 + $0x30] sm:$0xff]
      %v826 = vld [vmem:[%s821 + $0x40] sm:$0xff]
      %v827 = vld [vmem:[%s821 + $0x50] sm:$0xff]
      %v828 = vld [vmem:[%s821 + $0x60] sm:$0xff]
      %v829 = vld [vmem:[%s821 + $0x70] sm:$0xff]
      %v830 = vld [vmem:[%s821 + $0x80] sm:$0xff]
      %v839 = vunpack.c.l.b16 %v813
      %v840 = vunpack.c.l.b16 %v814
      %v841 = vunpack.c.l.b16 %v815
      %v842 = vunpack.c.l.b16 %v816
      %v843 = vunpack.c.l.b16 %v817
      %v844 = vunpack.c.l.b16 %v818
      %v845 = vunpack.c.l.b16 %v819
      %v846 = vunpack.c.l.b16 %v820
      %v847 = vpack.c.b16 %v840, %v839
      %v848 = vpack.c.b16 %v842, %v841
      %v849 = vpack.c.b16 %v844, %v843
      %v850 = vpack.c.b16 %v846, %v845
      %v860 = vunpack.c.l.b16 %v822
      %v861 = vunpack.c.h.b16 %v822
      %v862 = vunpack.c.l.b16 %v823
      %v863 = vunpack.c.h.b16 %v823
      %v864 = vunpack.c.l.b16 %v824
      %v865 = vunpack.c.h.b16 %v824
      %v866 = vunpack.c.l.b16 %v825
      %v867 = vunpack.c.h.b16 %v825
      %v868 = vunpack.c.l.b16 %v826
      %v869 = vunpack.c.h.b16 %v826
      %v870 = vunpack.c.l.b16 %v827
      %v871 = vunpack.c.h.b16 %v827
      %v872 = vunpack.c.l.b16 %v828
      %v873 = vunpack.c.h.b16 %v828
      %v874 = vunpack.c.l.b16 %v829
      %v875 = vunpack.c.h.b16 %v829
      %v876 = vunpack.c.l.b16 %v830
      %v877 = vunpack.c.h.b16 %v830
      %v878 = vpack.c.b16 %v862, %v860
      %v879 = vpack.c.b16 %v863, %v861
      %v880 = vpack.c.b16 %v866, %v864
      %v881 = vpack.c.b16 %v867, %v865
      %v882 = vpack.c.b16 %v870, %v868
      %v883 = vpack.c.b16 %v871, %v869
      %v884 = vpack.c.b16 %v874, %v872
      %v885 = vpack.c.b16 %v875, %v873
      %v886 = vpack.c.b16 %v876, %v876
      %v887 = vpack.c.b16 %v877, %v877
      %v897 = vsel %vm388, %v847, 0
      %v900 = vsel %vm388, %v848, 0
      %v903 = vsel %vm388, %v849, 0
      %v906 = vsel %vm388, %v850, 0
      %v909 = vsel %vm401, %v886, 0
      %v912 = vsel %vm401, %v887, 0
      %914 = vmatpush.bf16.msra.mxu0 0
      %915 = vmatpush.bf16.msra.mxu0 0
      %916 = vmatpush.bf16.msra.mxu0 0
      %917 = vmatpush.bf16.msra.mxu0 %v909
      %918 = vmatpush.bf16.msra.mxu0 %v884
      %919 = vmatpush.bf16.msra.mxu0 %v882
      %920 = vmatpush.bf16.msra.mxu0 %v880
      %921 = vmatpush.bf16.msra.mxu0 %v878
      %922 = vmatmul.bf16.gmra.mxu0 %v897
      %v923 = vpop.f32.mrf.mxu0
      %v924 = vadd.f32 0.0, %v923
      %v925 = vpop.f32.mrf.mxu0
      %v926 = vadd.f32 0.0, %v925
      %927 = vmatmul.bf16.gmra.mxu0 %v900
      %v928 = vpop.f32.mrf.mxu0
      %v929 = vadd.f32 0.0, %v928
      %v930 = vpop.f32.mrf.mxu0
      %v931 = vadd.f32 0.0, %v930
      %932 = vmatmul.bf16.gmra.mxu0 %v903
      %v933 = vpop.f32.mrf.mxu0
      %v934 = vadd.f32 0.0, %v933
      %v935 = vpop.f32.mrf.mxu0
      %v936 = vadd.f32 0.0, %v935
      %937 = vmatmul.bf16.gmra.mxu0 %v906
      %v938 = vpop.f32.mrf.mxu0
      %v939 = vadd.f32 0.0, %v938
      %v940 = vpop.f32.mrf.mxu0
      %v941 = vadd.f32 0.0, %v940
      %942 = vdwg.mxu0
      %943 = vmatpush.bf16.msra.mxu0 0
      %944 = vmatpush.bf16.msra.mxu0 0
      %945 = vmatpush.bf16.msra.mxu0 0
      %946 = vmatpush.bf16.msra.mxu0 %v912
      %947 = vmatpush.bf16.msra.mxu0 %v885
      %948 = vmatpush.bf16.msra.mxu0 %v883
      %949 = vmatpush.bf16.msra.mxu0 %v881
      %950 = vmatpush.bf16.msra.mxu0 %v879
      %951 = vmatmul.bf16.gmra.mxu0 %v897
      %v952 = vpop.f32.mrf.mxu0
      %v953 = vadd.f32 0.0, %v952
      %v954 = vpop.f32.mrf.mxu0
      %v955 = vadd.f32 0.0, %v954
      %956 = vmatmul.bf16.gmra.mxu0 %v900
      %v957 = vpop.f32.mrf.mxu0
      %v958 = vadd.f32 0.0, %v957
      %v959 = vpop.f32.mrf.mxu0
      %v960 = vadd.f32 0.0, %v959
      %961 = vmatmul.bf16.gmra.mxu0 %v903
      %v962 = vpop.f32.mrf.mxu0
      %v963 = vadd.f32 0.0, %v962
      %v964 = vpop.f32.mrf.mxu0
      %v965 = vadd.f32 0.0, %v964
      %966 = vmatmul.bf16.gmra.mxu0 %v906
      %v967 = vpop.f32.mrf.mxu0
      %v968 = vadd.f32 0.0, %v967
      %v969 = vpop.f32.mrf.mxu0
      %v970 = vadd.f32 0.0, %v969
      %971 = vdwg.mxu0
      %v972 = vadd.f32 %v793, %v924
      %v973 = vadd.f32 %v794, %v953
      %v974 = vadd.f32 %v795, %v926
      %v975 = vadd.f32 %v796, %v955
      %v976 = vadd.f32 %v797, %v929
      %v977 = vadd.f32 %v798, %v958
      %v978 = vadd.f32 %v799, %v931
      %v979 = vadd.f32 %v800, %v960
      %v980 = vadd.f32 %v801, %v934
      %v981 = vadd.f32 %v802, %v963
      %v982 = vadd.f32 %v803, %v936
      %v983 = vadd.f32 %v804, %v965
      %v984 = vadd.f32 %v805, %v939
      %v985 = vadd.f32 %v806, %v968
      %v986 = vadd.f32 %v807, %v941
      %v987 = vadd.f32 %v808, %v970
      %v988 = vld [vmem:[%s812] sm:$0xf]
      %v989 = vld [vmem:[%s812 + $0x4] sm:$0xf]
      %v990 = vld [vmem:[%s812 + $0x8] sm:$0x1]
      %v991 = vld [vmem:[%s812 + $0xc] sm:$0xf]
      %v992 = vld [vmem:[%s812 + $0x10] sm:$0xf]
      %v993 = vld [vmem:[%s812 + $0x14] sm:$0x1]
      %v994 = vld [vmem:[%s812 + $0x18] sm:$0xf]
      %v995 = vld [vmem:[%s812 + $0x1c] sm:$0xf]
      %v996 = vld [vmem:[%s812 + $0x20] sm:$0x1]
      %v997 = vld [vmem:[%s812 + $0x24] sm:$0xf]
      %v998 = vld [vmem:[%s812 + $0x28] sm:$0xf]
      %v999 = vld [vmem:[%s812 + $0x2c] sm:$0x1]
      %v1001 = vshrl.u32 %v988, 16
      %v1003 = vrot.slane %v1001, 4
      %v1004 = vshll.u32 %v988, 16
      %v1006 = vrot.slane %v1004, 5
      %v1007 = vor.u32 %v1003, %v1006
      %v1008 = vrot.slane %v1007, 4
      %v1010 = vshll.u32 %v989, 16
      %v1012 = vrot.slane %v1010, 5
      %v1013 = vsel %vm224, %v1008, %v1012
      %v1014 = vshrl.u32 %v989, 16
      %v1016 = vrot.slane %v1014, 4
      %v1017 = vor.u32 %v1016, %v1012
      %v1018 = vrot.slane %v1017, 4
      %v1020 = vshll.u32 %v990, 16
      %v1022 = vrot.slane %v1020, 5
      %v1023 = vsel %vm224, %v1018, %v1022
      %v1025 = vshrl.u32 %v991, 16
      %v1027 = vrot.slane %v1025, 4
      %v1028 = vshll.u32 %v991, 16
      %v1030 = vrot.slane %v1028, 5
      %v1031 = vor.u32 %v1027, %v1030
      %v1032 = vrot.slane %v1031, 4
      %v1034 = vshll.u32 %v992, 16
      %v1036 = vrot.slane %v1034, 5
      %v1037 = vsel %vm224, %v1032, %v1036
      %v1038 = vshrl.u32 %v992, 16
      %v1040 = vrot.slane %v1038, 4
      %v1041 = vor.u32 %v1040, %v1036
      %v1042 = vrot.slane %v1041, 4
      %v1044 = vshll.u32 %v993, 16
      %v1046 = vrot.slane %v1044, 5
      %v1047 = vsel %vm224, %v1042, %v1046
      %v1049 = vshrl.u32 %v994, 16
      %v1051 = vrot.slane %v1049, 4
      %v1052 = vshll.u32 %v994, 16
      %v1054 = vrot.slane %v1052, 5
      %v1055 = vor.u32 %v1051, %v1054
      %v1056 = vrot.slane %v1055, 4
      %v1058 = vshll.u32 %v995, 16
      %v1060 = vrot.slane %v1058, 5
      %v1061 = vsel %vm224, %v1056, %v1060
      %v1062 = vshrl.u32 %v995, 16
      %v1064 = vrot.slane %v1062, 4
      %v1065 = vor.u32 %v1064, %v1060
      %v1066 = vrot.slane %v1065, 4
      %v1068 = vshll.u32 %v996, 16
      %v1070 = vrot.slane %v1068, 5
      %v1071 = vsel %vm224, %v1066, %v1070
      %v1073 = vshrl.u32 %v997, 16
      %v1075 = vrot.slane %v1073, 4
      %v1076 = vshll.u32 %v997, 16
      %v1078 = vrot.slane %v1076, 5
      %v1079 = vor.u32 %v1075, %v1078
      %v1080 = vrot.slane %v1079, 4
      %v1082 = vshll.u32 %v998, 16
      %v1084 = vrot.slane %v1082, 5
      %v1085 = vsel %vm224, %v1080, %v1084
      %v1086 = vshrl.u32 %v998, 16
      %v1088 = vrot.slane %v1086, 4
      %v1089 = vor.u32 %v1088, %v1084
      %v1090 = vrot.slane %v1089, 4
      %v1092 = vshll.u32 %v999, 16
      %v1094 = vrot.slane %v1092, 5
      %v1095 = vsel %vm224, %v1090, %v1094
      %s1096 = scalar_lea.vmem %s1, 576
      %v1097 = vld [vmem:[%s1096] sm:$0xff]
      %v1098 = vld [vmem:[%s1096 + $0x10] sm:$0xff]
      %v1099 = vld [vmem:[%s1096 + $0x20] sm:$0xff]
      %v1100 = vld [vmem:[%s1096 + $0x30] sm:$0xff]
      %v1101 = vld [vmem:[%s1096 + $0x40] sm:$0xff]
      %v1102 = vld [vmem:[%s1096 + $0x50] sm:$0xff]
      %v1103 = vld [vmem:[%s1096 + $0x60] sm:$0xff]
      %v1104 = vld [vmem:[%s1096 + $0x70] sm:$0xff]
      %v1105 = vld [vmem:[%s1096 + $0x80] sm:$0xff]
      %v1106 = vunpack.c.l.b16 %v1013
      %v1107 = vunpack.c.l.b16 %v1023
      %v1108 = vunpack.c.l.b16 %v1037
      %v1109 = vunpack.c.l.b16 %v1047
      %v1110 = vunpack.c.l.b16 %v1061
      %v1111 = vunpack.c.l.b16 %v1071
      %v1112 = vunpack.c.l.b16 %v1085
      %v1113 = vunpack.c.l.b16 %v1095
      %v1114 = vpack.c.b16 %v1107, %v1106
      %v1115 = vpack.c.b16 %v1109, %v1108
      %v1116 = vpack.c.b16 %v1111, %v1110
      %v1117 = vpack.c.b16 %v1113, %v1112
      %v1127 = vunpack.c.l.b16 %v1097
      %v1128 = vunpack.c.h.b16 %v1097
      %v1129 = vunpack.c.l.b16 %v1098
      %v1130 = vunpack.c.h.b16 %v1098
      %v1131 = vunpack.c.l.b16 %v1099
      %v1132 = vunpack.c.h.b16 %v1099
      %v1133 = vunpack.c.l.b16 %v1100
      %v1134 = vunpack.c.h.b16 %v1100
      %v1135 = vunpack.c.l.b16 %v1101
      %v1136 = vunpack.c.h.b16 %v1101
      %v1137 = vunpack.c.l.b16 %v1102
      %v1138 = vunpack.c.h.b16 %v1102
      %v1139 = vunpack.c.l.b16 %v1103
      %v1140 = vunpack.c.h.b16 %v1103
      %v1141 = vunpack.c.l.b16 %v1104
      %v1142 = vunpack.c.h.b16 %v1104
      %v1143 = vunpack.c.l.b16 %v1105
      %v1144 = vunpack.c.h.b16 %v1105
      %v1145 = vpack.c.b16 %v1129, %v1127
      %v1146 = vpack.c.b16 %v1130, %v1128
      %v1147 = vpack.c.b16 %v1133, %v1131
      %v1148 = vpack.c.b16 %v1134, %v1132
      %v1149 = vpack.c.b16 %v1137, %v1135
      %v1150 = vpack.c.b16 %v1138, %v1136
      %v1151 = vpack.c.b16 %v1141, %v1139
      %v1152 = vpack.c.b16 %v1142, %v1140
      %v1153 = vpack.c.b16 %v1143, %v1143
      %v1154 = vpack.c.b16 %v1144, %v1144
      %v1164 = vsel %vm388, %v1114, 0
      %v1167 = vsel %vm388, %v1115, 0
      %v1170 = vsel %vm388, %v1116, 0
      %v1173 = vsel %vm388, %v1117, 0
      %v1176 = vsel %vm401, %v1153, 0
      %v1179 = vsel %vm401, %v1154, 0
      %1181 = vmatpush.bf16.msra.mxu0 0
      %1182 = vmatpush.bf16.msra.mxu0 0
      %1183 = vmatpush.bf16.msra.mxu0 0
      %1184 = vmatpush.bf16.msra.mxu0 %v1176
      %1185 = vmatpush.bf16.msra.mxu0 %v1151
      %1186 = vmatpush.bf16.msra.mxu0 %v1149
      %1187 = vmatpush.bf16.msra.mxu0 %v1147
      %1188 = vmatpush.bf16.msra.mxu0 %v1145
      %1189 = vmatmul.bf16.gmra.mxu0 %v1164
      %v1190 = vpop.f32.mrf.mxu0
      %v1191 = vadd.f32 0.0, %v1190
      %v1192 = vpop.f32.mrf.mxu0
      %v1193 = vadd.f32 0.0, %v1192
      %1194 = vmatmul.bf16.gmra.mxu0 %v1167
      %v1195 = vpop.f32.mrf.mxu0
      %v1196 = vadd.f32 0.0, %v1195
      %v1197 = vpop.f32.mrf.mxu0
      %v1198 = vadd.f32 0.0, %v1197
      %1199 = vmatmul.bf16.gmra.mxu0 %v1170
      %v1200 = vpop.f32.mrf.mxu0
      %v1201 = vadd.f32 0.0, %v1200
      %v1202 = vpop.f32.mrf.mxu0
      %v1203 = vadd.f32 0.0, %v1202
      %1204 = vmatmul.bf16.gmra.mxu0 %v1173
      %v1205 = vpop.f32.mrf.mxu0
      %v1206 = vadd.f32 0.0, %v1205
      %v1207 = vpop.f32.mrf.mxu0
      %v1208 = vadd.f32 0.0, %v1207
      %1209 = vdwg.mxu0
      %1210 = vmatpush.bf16.msra.mxu0 0
      %1211 = vmatpush.bf16.msra.mxu0 0
      %1212 = vmatpush.bf16.msra.mxu0 0
      %1213 = vmatpush.bf16.msra.mxu0 %v1179
      %1214 = vmatpush.bf16.msra.mxu0 %v1152
      %1215 = vmatpush.bf16.msra.mxu0 %v1150
      %1216 = vmatpush.bf16.msra.mxu0 %v1148
      %1217 = vmatpush.bf16.msra.mxu0 %v1146
      %1218 = vmatmul.bf16.gmra.mxu0 %v1164
      %v1219 = vpop.f32.mrf.mxu0
      %v1220 = vadd.f32 0.0, %v1219
      %v1221 = vpop.f32.mrf.mxu0
      %v1222 = vadd.f32 0.0, %v1221
      %1223 = vmatmul.bf16.gmra.mxu0 %v1167
      %v1224 = vpop.f32.mrf.mxu0
      %v1225 = vadd.f32 0.0, %v1224
      %v1226 = vpop.f32.mrf.mxu0
      %v1227 = vadd.f32 0.0, %v1226
      %1228 = vmatmul.bf16.gmra.mxu0 %v1170
      %v1229 = vpop.f32.mrf.mxu0
      %v1230 = vadd.f32 0.0, %v1229
      %v1231 = vpop.f32.mrf.mxu0
      %v1232 = vadd.f32 0.0, %v1231
      %1233 = vmatmul.bf16.gmra.mxu0 %v1173
      %v1234 = vpop.f32.mrf.mxu0
      %v1235 = vadd.f32 0.0, %v1234
      %v1236 = vpop.f32.mrf.mxu0
      %v1237 = vadd.f32 0.0, %v1236
      %1238 = vdwg.mxu0
      %v1239 = vadd.f32 %v972, %v1191
      %v1240 = vadd.f32 %v973, %v1220
      %v1241 = vadd.f32 %v974, %v1193
      %v1242 = vadd.f32 %v975, %v1222
      %v1243 = vadd.f32 %v976, %v1196
      %v1244 = vadd.f32 %v977, %v1225
      %v1245 = vadd.f32 %v978, %v1198
      %v1246 = vadd.f32 %v979, %v1227
      %v1247 = vadd.f32 %v980, %v1201
      %v1248 = vadd.f32 %v981, %v1230
      %v1249 = vadd.f32 %v982, %v1203
      %v1250 = vadd.f32 %v983, %v1232
      %v1251 = vadd.f32 %v984, %v1206
      %v1252 = vadd.f32 %v985, %v1235
      %v1253 = vadd.f32 %v986, %v1208
      %v1254 = vadd.f32 %v987, %v1237
      %v1255 = vld [vmem:[%s812] sm:$0xe]
      %v1256 = vld [vmem:[%s812 + $0xc] sm:$0xe]
      %v1257 = vld [vmem:[%s812 + $0x18] sm:$0xe]
      %v1258 = vld [vmem:[%s812 + $0x24] sm:$0xe]
      %v1271 = vrot.slane %v1255, 5
      %v1272 = vrot.slane %v1271, 4
      %v1273 = vrot.slane %v989, 5
      %v1274 = vsel %vm621, %v1272, %v1273
      %v1275 = vrot.slane %v1273, 4
      %v1276 = vrot.slane %v990, 5
      %v1277 = vsel %vm621, %v1275, %v1276
      %v1278 = vrot.slane %v1256, 5
      %v1279 = vrot.slane %v1278, 4
      %v1280 = vrot.slane %v992, 5
      %v1281 = vsel %vm621, %v1279, %v1280
      %v1282 = vrot.slane %v1280, 4
      %v1283 = vrot.slane %v993, 5
      %v1284 = vsel %vm621, %v1282, %v1283
      %v1285 = vrot.slane %v1257, 5
      %v1286 = vrot.slane %v1285, 4
      %v1287 = vrot.slane %v995, 5
      %v1288 = vsel %vm621, %v1286, %v1287
      %v1289 = vrot.slane %v1287, 4
      %v1290 = vrot.slane %v996, 5
      %v1291 = vsel %vm621, %v1289, %v1290
      %v1292 = vrot.slane %v1258, 5
      %v1293 = vrot.slane %v1292, 4
      %v1294 = vrot.slane %v998, 5
      %v1295 = vsel %vm621, %v1293, %v1294
      %v1296 = vrot.slane %v1294, 4
      %v1297 = vrot.slane %v999, 5
      %v1298 = vsel %vm621, %v1296, %v1297
      %s1299 = scalar_lea.vmem %s1, 720
      %v1300 = vld [vmem:[%s1299] sm:$0xff]
      %v1301 = vld [vmem:[%s1299 + $0x10] sm:$0xff]
      %v1302 = vld [vmem:[%s1299 + $0x20] sm:$0xff]
      %v1303 = vld [vmem:[%s1299 + $0x30] sm:$0xff]
      %v1304 = vld [vmem:[%s1299 + $0x40] sm:$0xff]
      %v1305 = vld [vmem:[%s1299 + $0x50] sm:$0xff]
      %v1306 = vld [vmem:[%s1299 + $0x60] sm:$0xff]
      %v1307 = vld [vmem:[%s1299 + $0x70] sm:$0xff]
      %v1308 = vld [vmem:[%s1299 + $0x80] sm:$0xff]
      %v1309 = vunpack.c.l.b16 %v1274
      %v1310 = vunpack.c.l.b16 %v1277
      %v1311 = vunpack.c.l.b16 %v1281
      %v1312 = vunpack.c.l.b16 %v1284
      %v1313 = vunpack.c.l.b16 %v1288
      %v1314 = vunpack.c.l.b16 %v1291
      %v1315 = vunpack.c.l.b16 %v1295
      %v1316 = vunpack.c.l.b16 %v1298
      %v1317 = vpack.c.b16 %v1310, %v1309
      %v1318 = vpack.c.b16 %v1312, %v1311
      %v1319 = vpack.c.b16 %v1314, %v1313
      %v1320 = vpack.c.b16 %v1316, %v1315
      %v1330 = vunpack.c.l.b16 %v1300
      %v1331 = vunpack.c.h.b16 %v1300
      %v1332 = vunpack.c.l.b16 %v1301
      %v1333 = vunpack.c.h.b16 %v1301
      %v1334 = vunpack.c.l.b16 %v1302
      %v1335 = vunpack.c.h.b16 %v1302
      %v1336 = vunpack.c.l.b16 %v1303
      %v1337 = vunpack.c.h.b16 %v1303
      %v1338 = vunpack.c.l.b16 %v1304
      %v1339 = vunpack.c.h.b16 %v1304
      %v1340 = vunpack.c.l.b16 %v1305
      %v1341 = vunpack.c.h.b16 %v1305
      %v1342 = vunpack.c.l.b16 %v1306
      %v1343 = vunpack.c.h.b16 %v1306
      %v1344 = vunpack.c.l.b16 %v1307
      %v1345 = vunpack.c.h.b16 %v1307
      %v1346 = vunpack.c.l.b16 %v1308
      %v1347 = vunpack.c.h.b16 %v1308
      %v1348 = vpack.c.b16 %v1332, %v1330
      %v1349 = vpack.c.b16 %v1333, %v1331
      %v1350 = vpack.c.b16 %v1336, %v1334
      %v1351 = vpack.c.b16 %v1337, %v1335
      %v1352 = vpack.c.b16 %v1340, %v1338
      %v1353 = vpack.c.b16 %v1341, %v1339
      %v1354 = vpack.c.b16 %v1344, %v1342
      %v1355 = vpack.c.b16 %v1345, %v1343
      %v1356 = vpack.c.b16 %v1346, %v1346
      %v1357 = vpack.c.b16 %v1347, %v1347
      %v1367 = vsel %vm388, %v1317, 0
      %v1370 = vsel %vm388, %v1318, 0
      %v1373 = vsel %vm388, %v1319, 0
      %v1376 = vsel %vm388, %v1320, 0
      %v1379 = vsel %vm401, %v1356, 0
      %v1382 = vsel %vm401, %v1357, 0
      %1384 = vmatpush.bf16.msra.mxu0 0
      %1385 = vmatpush.bf16.msra.mxu0 0
      %1386 = vmatpush.bf16.msra.mxu0 0
      %1387 = vmatpush.bf16.msra.mxu0 %v1379
      %1388 = vmatpush.bf16.msra.mxu0 %v1354
      %1389 = vmatpush.bf16.msra.mxu0 %v1352
      %1390 = vmatpush.bf16.msra.mxu0 %v1350
      %1391 = vmatpush.bf16.msra.mxu0 %v1348
      %1392 = vmatmul.bf16.gmra.mxu0 %v1367
      %v1393 = vpop.f32.mrf.mxu0
      %v1394 = vadd.f32 0.0, %v1393
      %v1395 = vpop.f32.mrf.mxu0
      %v1396 = vadd.f32 0.0, %v1395
      %1397 = vmatmul.bf16.gmra.mxu0 %v1370
      %v1398 = vpop.f32.mrf.mxu0
      %v1399 = vadd.f32 0.0, %v1398
      %v1400 = vpop.f32.mrf.mxu0
      %v1401 = vadd.f32 0.0, %v1400
      %1402 = vmatmul.bf16.gmra.mxu0 %v1373
      %v1403 = vpop.f32.mrf.mxu0
      %v1404 = vadd.f32 0.0, %v1403
      %v1405 = vpop.f32.mrf.mxu0
      %v1406 = vadd.f32 0.0, %v1405
      %1407 = vmatmul.bf16.gmra.mxu0 %v1376
      %v1408 = vpop.f32.mrf.mxu0
      %v1409 = vadd.f32 0.0, %v1408
      %v1410 = vpop.f32.mrf.mxu0
      %v1411 = vadd.f32 0.0, %v1410
      %1412 = vdwg.mxu0
      %1413 = vmatpush.bf16.msra.mxu0 0
      %1414 = vmatpush.bf16.msra.mxu0 0
      %1415 = vmatpush.bf16.msra.mxu0 0
      %1416 = vmatpush.bf16.msra.mxu0 %v1382
      %1417 = vmatpush.bf16.msra.mxu0 %v1355
      %1418 = vmatpush.bf16.msra.mxu0 %v1353
      %1419 = vmatpush.bf16.msra.mxu0 %v1351
      %1420 = vmatpush.bf16.msra.mxu0 %v1349
      %1421 = vmatmul.bf16.gmra.mxu0 %v1367
      %v1422 = vpop.f32.mrf.mxu0
      %v1423 = vadd.f32 0.0, %v1422
      %v1424 = vpop.f32.mrf.mxu0
      %v1425 = vadd.f32 0.0, %v1424
      %1426 = vmatmul.bf16.gmra.mxu0 %v1370
      %v1427 = vpop.f32.mrf.mxu0
      %v1428 = vadd.f32 0.0, %v1427
      %v1429 = vpop.f32.mrf.mxu0
      %v1430 = vadd.f32 0.0, %v1429
      %1431 = vmatmul.bf16.gmra.mxu0 %v1373
      %v1432 = vpop.f32.mrf.mxu0
      %v1433 = vadd.f32 0.0, %v1432
      %v1434 = vpop.f32.mrf.mxu0
      %v1435 = vadd.f32 0.0, %v1434
      %1436 = vmatmul.bf16.gmra.mxu0 %v1376
      %v1437 = vpop.f32.mrf.mxu0
      %v1438 = vadd.f32 0.0, %v1437
      %v1439 = vpop.f32.mrf.mxu0
      %v1440 = vadd.f32 0.0, %v1439
      %1441 = vdwg.mxu0
      %v1442 = vadd.f32 %v1239, %v1394
      %v1443 = vadd.f32 %v1240, %v1423
      %v1444 = vadd.f32 %v1241, %v1396
      %v1445 = vadd.f32 %v1242, %v1425
      %v1446 = vadd.f32 %v1243, %v1399
      %v1447 = vadd.f32 %v1244, %v1428
      %v1448 = vadd.f32 %v1245, %v1401
      %v1449 = vadd.f32 %v1246, %v1430
      %v1450 = vadd.f32 %v1247, %v1404
      %v1451 = vadd.f32 %v1248, %v1433
      %v1452 = vadd.f32 %v1249, %v1406
      %v1453 = vadd.f32 %v1250, %v1435
      %v1454 = vadd.f32 %v1251, %v1409
      %v1455 = vadd.f32 %v1252, %v1438
      %v1456 = vadd.f32 %v1253, %v1411
      %v1457 = vadd.f32 %v1254, %v1440
      %s1458 = sadd.s32 %s197, 2
      %s1459 = smul.u32 %s1458, 3
      %s1460 = smul.addr %s1459, 4
      %s1461 = scalar_lea.vmem %s184, %s1460
      %v1462 = vld [vmem:[%s1461] sm:$0xf]
      %v1463 = vld [vmem:[%s1461 + $0x4] sm:$0xf]
      %v1464 = vld [vmem:[%s1461 + $0xc] sm:$0xf]
      %v1465 = vld [vmem:[%s1461 + $0x10] sm:$0xf]
      %v1466 = vld [vmem:[%s1461 + $0x18] sm:$0xf]
      %v1467 = vld [vmem:[%s1461 + $0x1c] sm:$0xf]
      %v1468 = vld [vmem:[%s1461 + $0x24] sm:$0xf]
      %v1469 = vld [vmem:[%s1461 + $0x28] sm:$0xf]
      %s1470 = scalar_lea.vmem %s1, 864
      %v1471 = vld [vmem:[%s1470] sm:$0xff]
      %v1472 = vld [vmem:[%s1470 + $0x10] sm:$0xff]
      %v1473 = vld [vmem:[%s1470 + $0x20] sm:$0xff]
      %v1474 = vld [vmem:[%s1470 + $0x30] sm:$0xff]
      %v1475 = vld [vmem:[%s1470 + $0x40] sm:$0xff]
      %v1476 = vld [vmem:[%s1470 + $0x50] sm:$0xff]
      %v1477 = vld [vmem:[%s1470 + $0x60] sm:$0xff]
      %v1478 = vld [vmem:[%s1470 + $0x70] sm:$0xff]
      %v1479 = vld [vmem:[%s1470 + $0x80] sm:$0xff]
      %v1488 = vunpack.c.l.b16 %v1462
      %v1489 = vunpack.c.l.b16 %v1463
      %v1490 = vunpack.c.l.b16 %v1464
      %v1491 = vunpack.c.l.b16 %v1465
      %v1492 = vunpack.c.l.b16 %v1466
      %v1493 = vunpack.c.l.b16 %v1467
      %v1494 = vunpack.c.l.b16 %v1468
      %v1495 = vunpack.c.l.b16 %v1469
      %v1496 = vpack.c.b16 %v1489, %v1488
      %v1497 = vpack.c.b16 %v1491, %v1490
      %v1498 = vpack.c.b16 %v1493, %v1492
      %v1499 = vpack.c.b16 %v1495, %v1494
      %v1509 = vunpack.c.l.b16 %v1471
      %v1510 = vunpack.c.h.b16 %v1471
      %v1511 = vunpack.c.l.b16 %v1472
      %v1512 = vunpack.c.h.b16 %v1472
      %v1513 = vunpack.c.l.b16 %v1473
      %v1514 = vunpack.c.h.b16 %v1473
      %v1515 = vunpack.c.l.b16 %v1474
      %v1516 = vunpack.c.h.b16 %v1474
      %v1517 = vunpack.c.l.b16 %v1475
      %v1518 = vunpack.c.h.b16 %v1475
      %v1519 = vunpack.c.l.b16 %v1476
      %v1520 = vunpack.c.h.b16 %v1476
      %v1521 = vunpack.c.l.b16 %v1477
      %v1522 = vunpack.c.h.b16 %v1477
      %v1523 = vunpack.c.l.b16 %v1478
      %v1524 = vunpack.c.h.b16 %v1478
      %v1525 = vunpack.c.l.b16 %v1479
      %v1526 = vunpack.c.h.b16 %v1479
      %v1527 = vpack.c.b16 %v1511, %v1509
      %v1528 = vpack.c.b16 %v1512, %v1510
      %v1529 = vpack.c.b16 %v1515, %v1513
      %v1530 = vpack.c.b16 %v1516, %v1514
      %v1531 = vpack.c.b16 %v1519, %v1517
      %v1532 = vpack.c.b16 %v1520, %v1518
      %v1533 = vpack.c.b16 %v1523, %v1521
      %v1534 = vpack.c.b16 %v1524, %v1522
      %v1535 = vpack.c.b16 %v1525, %v1525
      %v1536 = vpack.c.b16 %v1526, %v1526
      %v1546 = vsel %vm388, %v1496, 0
      %v1549 = vsel %vm388, %v1497, 0
      %v1552 = vsel %vm388, %v1498, 0
      %v1555 = vsel %vm388, %v1499, 0
      %v1558 = vsel %vm401, %v1535, 0
      %v1561 = vsel %vm401, %v1536, 0
      %1563 = vmatpush.bf16.msra.mxu0 0
      %1564 = vmatpush.bf16.msra.mxu0 0
      %1565 = vmatpush.bf16.msra.mxu0 0
      %1566 = vmatpush.bf16.msra.mxu0 %v1558
      %1567 = vmatpush.bf16.msra.mxu0 %v1533
      %1568 = vmatpush.bf16.msra.mxu0 %v1531
      %1569 = vmatpush.bf16.msra.mxu0 %v1529
      %1570 = vmatpush.bf16.msra.mxu0 %v1527
      %1571 = vmatmul.bf16.gmra.mxu0 %v1546
      %v1572 = vpop.f32.mrf.mxu0
      %v1573 = vadd.f32 0.0, %v1572
      %v1574 = vpop.f32.mrf.mxu0
      %v1575 = vadd.f32 0.0, %v1574
      %1576 = vmatmul.bf16.gmra.mxu0 %v1549
      %v1577 = vpop.f32.mrf.mxu0
      %v1578 = vadd.f32 0.0, %v1577
      %v1579 = vpop.f32.mrf.mxu0
      %v1580 = vadd.f32 0.0, %v1579
      %1581 = vmatmul.bf16.gmra.mxu0 %v1552
      %v1582 = vpop.f32.mrf.mxu0
      %v1583 = vadd.f32 0.0, %v1582
      %v1584 = vpop.f32.mrf.mxu0
      %v1585 = vadd.f32 0.0, %v1584
      %1586 = vmatmul.bf16.gmra.mxu0 %v1555
      %v1587 = vpop.f32.mrf.mxu0
      %v1588 = vadd.f32 0.0, %v1587
      %v1589 = vpop.f32.mrf.mxu0
      %v1590 = vadd.f32 0.0, %v1589
      %1591 = vdwg.mxu0
      %1592 = vmatpush.bf16.msra.mxu0 0
      %1593 = vmatpush.bf16.msra.mxu0 0
      %1594 = vmatpush.bf16.msra.mxu0 0
      %1595 = vmatpush.bf16.msra.mxu0 %v1561
      %1596 = vmatpush.bf16.msra.mxu0 %v1534
      %1597 = vmatpush.bf16.msra.mxu0 %v1532
      %1598 = vmatpush.bf16.msra.mxu0 %v1530
      %1599 = vmatpush.bf16.msra.mxu0 %v1528
      %1600 = vmatmul.bf16.gmra.mxu0 %v1546
      %v1601 = vpop.f32.mrf.mxu0
      %v1602 = vadd.f32 0.0, %v1601
      %v1603 = vpop.f32.mrf.mxu0
      %v1604 = vadd.f32 0.0, %v1603
      %1605 = vmatmul.bf16.gmra.mxu0 %v1549
      %v1606 = vpop.f32.mrf.mxu0
      %v1607 = vadd.f32 0.0, %v1606
      %v1608 = vpop.f32.mrf.mxu0
      %v1609 = vadd.f32 0.0, %v1608
      %1610 = vmatmul.bf16.gmra.mxu0 %v1552
      %v1611 = vpop.f32.mrf.mxu0
      %v1612 = vadd.f32 0.0, %v1611
      %v1613 = vpop.f32.mrf.mxu0
      %v1614 = vadd.f32 0.0, %v1613
      %1615 = vmatmul.bf16.gmra.mxu0 %v1555
      %v1616 = vpop.f32.mrf.mxu0
      %v1617 = vadd.f32 0.0, %v1616
      %v1618 = vpop.f32.mrf.mxu0
      %v1619 = vadd.f32 0.0, %v1618
      %1620 = vdwg.mxu0
      %v1621 = vadd.f32 %v1442, %v1573
      %v1622 = vadd.f32 %v1443, %v1602
      %v1623 = vadd.f32 %v1444, %v1575
      %v1624 = vadd.f32 %v1445, %v1604
      %v1625 = vadd.f32 %v1446, %v1578
      %v1626 = vadd.f32 %v1447, %v1607
      %v1627 = vadd.f32 %v1448, %v1580
      %v1628 = vadd.f32 %v1449, %v1609
      %v1629 = vadd.f32 %v1450, %v1583
      %v1630 = vadd.f32 %v1451, %v1612
      %v1631 = vadd.f32 %v1452, %v1585
      %v1632 = vadd.f32 %v1453, %v1614
      %v1633 = vadd.f32 %v1454, %v1588
      %v1634 = vadd.f32 %v1455, %v1617
      %v1635 = vadd.f32 %v1456, %v1590
      %v1636 = vadd.f32 %v1457, %v1619
      %v1637 = vld [vmem:[%s1461] sm:$0xf]
      %v1638 = vld [vmem:[%s1461 + $0x4] sm:$0xf]
      %v1639 = vld [vmem:[%s1461 + $0x8] sm:$0x1]
      %v1640 = vld [vmem:[%s1461 + $0xc] sm:$0xf]
      %v1641 = vld [vmem:[%s1461 + $0x10] sm:$0xf]
      %v1642 = vld [vmem:[%s1461 + $0x14] sm:$0x1]
      %v1643 = vld [vmem:[%s1461 + $0x18] sm:$0xf]
      %v1644 = vld [vmem:[%s1461 + $0x1c] sm:$0xf]
      %v1645 = vld [vmem:[%s1461 + $0x20] sm:$0x1]
      %v1646 = vld [vmem:[%s1461 + $0x24] sm:$0xf]
      %v1647 = vld [vmem:[%s1461 + $0x28] sm:$0xf]
      %v1648 = vld [vmem:[%s1461 + $0x2c] sm:$0x1]
      %v1650 = vshrl.u32 %v1637, 16
      %v1652 = vrot.slane %v1650, 4
      %v1653 = vshll.u32 %v1637, 16
      %v1655 = vrot.slane %v1653, 5
      %v1656 = vor.u32 %v1652, %v1655
      %v1657 = vrot.slane %v1656, 4
      %v1659 = vshll.u32 %v1638, 16
      %v1661 = vrot.slane %v1659, 5
      %v1662 = vsel %vm224, %v1657, %v1661
      %v1663 = vshrl.u32 %v1638, 16
      %v1665 = vrot.slane %v1663, 4
      %v1666 = vor.u32 %v1665, %v1661
      %v1667 = vrot.slane %v1666, 4
      %v1669 = vshll.u32 %v1639, 16
      %v1671 = vrot.slane %v1669, 5
      %v1672 = vsel %vm224, %v1667, %v1671
      %v1674 = vshrl.u32 %v1640, 16
      %v1676 = vrot.slane %v1674, 4
      %v1677 = vshll.u32 %v1640, 16
      %v1679 = vrot.slane %v1677, 5
      %v1680 = vor.u32 %v1676, %v1679
      %v1681 = vrot.slane %v1680, 4
      %v1683 = vshll.u32 %v1641, 16
      %v1685 = vrot.slane %v1683, 5
      %v1686 = vsel %vm224, %v1681, %v1685
      %v1687 = vshrl.u32 %v1641, 16
      %v1689 = vrot.slane %v1687, 4
      %v1690 = vor.u32 %v1689, %v1685
      %v1691 = vrot.slane %v1690, 4
      %v1693 = vshll.u32 %v1642, 16
      %v1695 = vrot.slane %v1693, 5
      %v1696 = vsel %vm224, %v1691, %v1695
      %v1698 = vshrl.u32 %v1643, 16
      %v1700 = vrot.slane %v1698, 4
      %v1701 = vshll.u32 %v1643, 16
      %v1703 = vrot.slane %v1701, 5
      %v1704 = vor.u32 %v1700, %v1703
      %v1705 = vrot.slane %v1704, 4
      %v1707 = vshll.u32 %v1644, 16
      %v1709 = vrot.slane %v1707, 5
      %v1710 = vsel %vm224, %v1705, %v1709
      %v1711 = vshrl.u32 %v1644, 16
      %v1713 = vrot.slane %v1711, 4
      %v1714 = vor.u32 %v1713, %v1709
      %v1715 = vrot.slane %v1714, 4
      %v1717 = vshll.u32 %v1645, 16
      %v1719 = vrot.slane %v1717, 5
      %v1720 = vsel %vm224, %v1715, %v1719
      %v1722 = vshrl.u32 %v1646, 16
      %v1724 = vrot.slane %v1722, 4
      %v1725 = vshll.u32 %v1646, 16
      %v1727 = vrot.slane %v1725, 5
      %v1728 = vor.u32 %v1724, %v1727
      %v1729 = vrot.slane %v1728, 4
      %v1731 = vshll.u32 %v1647, 16
      %v1733 = vrot.slane %v1731, 5
      %v1734 = vsel %vm224, %v1729, %v1733
      %v1735 = vshrl.u32 %v1647, 16
      %v1737 = vrot.slane %v1735, 4
      %v1738 = vor.u32 %v1737, %v1733
      %v1739 = vrot.slane %v1738, 4
      %v1741 = vshll.u32 %v1648, 16
      %v1743 = vrot.slane %v1741, 5
      %v1744 = vsel %vm224, %v1739, %v1743
      %s1745 = scalar_lea.vmem %s1, 1008
      %v1746 = vld [vmem:[%s1745] sm:$0xff]
      %v1747 = vld [vmem:[%s1745 + $0x10] sm:$0xff]
      %v1748 = vld [vmem:[%s1745 + $0x20] sm:$0xff]
      %v1749 = vld [vmem:[%s1745 + $0x30] sm:$0xff]
      %v1750 = vld [vmem:[%s1745 + $0x40] sm:$0xff]
      %v1751 = vld [vmem:[%s1745 + $0x50] sm:$0xff]
      %v1752 = vld [vmem:[%s1745 + $0x60] sm:$0xff]
      %v1753 = vld [vmem:[%s1745 + $0x70] sm:$0xff]
      %v1754 = vld [vmem:[%s1745 + $0x80] sm:$0xff]
      %v1755 = vunpack.c.l.b16 %v1662
      %v1756 = vunpack.c.l.b16 %v1672
      %v1757 = vunpack.c.l.b16 %v1686
      %v1758 = vunpack.c.l.b16 %v1696
      %v1759 = vunpack.c.l.b16 %v1710
      %v1760 = vunpack.c.l.b16 %v1720
      %v1761 = vunpack.c.l.b16 %v1734
      %v1762 = vunpack.c.l.b16 %v1744
      %v1763 = vpack.c.b16 %v1756, %v1755
      %v1764 = vpack.c.b16 %v1758, %v1757
      %v1765 = vpack.c.b16 %v1760, %v1759
      %v1766 = vpack.c.b16 %v1762, %v1761
      %v1776 = vunpack.c.l.b16 %v1746
      %v1777 = vunpack.c.h.b16 %v1746
      %v1778 = vunpack.c.l.b16 %v1747
      %v1779 = vunpack.c.h.b16 %v1747
      %v1780 = vunpack.c.l.b16 %v1748
      %v1781 = vunpack.c.h.b16 %v1748
      %v1782 = vunpack.c.l.b16 %v1749
      %v1783 = vunpack.c.h.b16 %v1749
      %v1784 = vunpack.c.l.b16 %v1750
      %v1785 = vunpack.c.h.b16 %v1750
      %v1786 = vunpack.c.l.b16 %v1751
      %v1787 = vunpack.c.h.b16 %v1751
      %v1788 = vunpack.c.l.b16 %v1752
      %v1789 = vunpack.c.h.b16 %v1752
      %v1790 = vunpack.c.l.b16 %v1753
      %v1791 = vunpack.c.h.b16 %v1753
      %v1792 = vunpack.c.l.b16 %v1754
      %v1793 = vunpack.c.h.b16 %v1754
      %v1794 = vpack.c.b16 %v1778, %v1776
      %v1795 = vpack.c.b16 %v1779, %v1777
      %v1796 = vpack.c.b16 %v1782, %v1780
      %v1797 = vpack.c.b16 %v1783, %v1781
      %v1798 = vpack.c.b16 %v1786, %v1784
      %v1799 = vpack.c.b16 %v1787, %v1785
      %v1800 = vpack.c.b16 %v1790, %v1788
      %v1801 = vpack.c.b16 %v1791, %v1789
      %v1802 = vpack.c.b16 %v1792, %v1792
      %v1803 = vpack.c.b16 %v1793, %v1793
      %v1813 = vsel %vm388, %v1763, 0
      %v1816 = vsel %vm388, %v1764, 0
      %v1819 = vsel %vm388, %v1765, 0
      %v1822 = vsel %vm388, %v1766, 0
      %v1825 = vsel %vm401, %v1802, 0
      %v1828 = vsel %vm401, %v1803, 0
      %1830 = vmatpush.bf16.msra.mxu0 0
      %1831 = vmatpush.bf16.msra.mxu0 0
      %1832 = vmatpush.bf16.msra.mxu0 0
      %1833 = vmatpush.bf16.msra.mxu0 %v1825
      %1834 = vmatpush.bf16.msra.mxu0 %v1800
      %1835 = vmatpush.bf16.msra.mxu0 %v1798
      %1836 = vmatpush.bf16.msra.mxu0 %v1796
      %1837 = vmatpush.bf16.msra.mxu0 %v1794
      %1838 = vmatmul.bf16.gmra.mxu0 %v1813
      %v1839 = vpop.f32.mrf.mxu0
      %v1840 = vadd.f32 0.0, %v1839
      %v1841 = vpop.f32.mrf.mxu0
      %v1842 = vadd.f32 0.0, %v1841
      %1843 = vmatmul.bf16.gmra.mxu0 %v1816
      %v1844 = vpop.f32.mrf.mxu0
      %v1845 = vadd.f32 0.0, %v1844
      %v1846 = vpop.f32.mrf.mxu0
      %v1847 = vadd.f32 0.0, %v1846
      %1848 = vmatmul.bf16.gmra.mxu0 %v1819
      %v1849 = vpop.f32.mrf.mxu0
      %v1850 = vadd.f32 0.0, %v1849
      %v1851 = vpop.f32.mrf.mxu0
      %v1852 = vadd.f32 0.0, %v1851
      %1853 = vmatmul.bf16.gmra.mxu0 %v1822
      %v1854 = vpop.f32.mrf.mxu0
      %v1855 = vadd.f32 0.0, %v1854
      %v1856 = vpop.f32.mrf.mxu0
      %v1857 = vadd.f32 0.0, %v1856
      %1858 = vdwg.mxu0
      %1859 = vmatpush.bf16.msra.mxu0 0
      %1860 = vmatpush.bf16.msra.mxu0 0
      %1861 = vmatpush.bf16.msra.mxu0 0
      %1862 = vmatpush.bf16.msra.mxu0 %v1828
      %1863 = vmatpush.bf16.msra.mxu0 %v1801
      %1864 = vmatpush.bf16.msra.mxu0 %v1799
      %1865 = vmatpush.bf16.msra.mxu0 %v1797
      %1866 = vmatpush.bf16.msra.mxu0 %v1795
      %1867 = vmatmul.bf16.gmra.mxu0 %v1813
      %v1868 = vpop.f32.mrf.mxu0
      %v1869 = vadd.f32 0.0, %v1868
      %v1870 = vpop.f32.mrf.mxu0
      %v1871 = vadd.f32 0.0, %v1870
      %1872 = vmatmul.bf16.gmra.mxu0 %v1816
      %v1873 = vpop.f32.mrf.mxu0
      %v1874 = vadd.f32 0.0, %v1873
      %v1875 = vpop.f32.mrf.mxu0
      %v1876 = vadd.f32 0.0, %v1875
      %1877 = vmatmul.bf16.gmra.mxu0 %v1819
      %v1878 = vpop.f32.mrf.mxu0
      %v1879 = vadd.f32 0.0, %v1878
      %v1880 = vpop.f32.mrf.mxu0
      %v1881 = vadd.f32 0.0, %v1880
      %1882 = vmatmul.bf16.gmra.mxu0 %v1822
      %v1883 = vpop.f32.mrf.mxu0
      %v1884 = vadd.f32 0.0, %v1883
      %v1885 = vpop.f32.mrf.mxu0
      %v1886 = vadd.f32 0.0, %v1885
      %1887 = vdwg.mxu0
      %v1888 = vadd.f32 %v1621, %v1840
      %v1889 = vadd.f32 %v1622, %v1869
      %v1890 = vadd.f32 %v1623, %v1842
      %v1891 = vadd.f32 %v1624, %v1871
      %v1892 = vadd.f32 %v1625, %v1845
      %v1893 = vadd.f32 %v1626, %v1874
      %v1894 = vadd.f32 %v1627, %v1847
      %v1895 = vadd.f32 %v1628, %v1876
      %v1896 = vadd.f32 %v1629, %v1850
      %v1897 = vadd.f32 %v1630, %v1879
      %v1898 = vadd.f32 %v1631, %v1852
      %v1899 = vadd.f32 %v1632, %v1881
      %v1900 = vadd.f32 %v1633, %v1855
      %v1901 = vadd.f32 %v1634, %v1884
      %v1902 = vadd.f32 %v1635, %v1857
      %v1903 = vadd.f32 %v1636, %v1886
      %v1904 = vld [vmem:[%s1461] sm:$0xe]
      %v1905 = vld [vmem:[%s1461 + $0xc] sm:$0xe]
      %v1906 = vld [vmem:[%s1461 + $0x18] sm:$0xe]
      %v1907 = vld [vmem:[%s1461 + $0x24] sm:$0xe]
      %v1920 = vrot.slane %v1904, 5
      %v1921 = vrot.slane %v1920, 4
      %v1922 = vrot.slane %v1638, 5
      %v1923 = vsel %vm621, %v1921, %v1922
      %v1924 = vrot.slane %v1922, 4
      %v1925 = vrot.slane %v1639, 5
      %v1926 = vsel %vm621, %v1924, %v1925
      %v1927 = vrot.slane %v1905, 5
      %v1928 = vrot.slane %v1927, 4
      %v1929 = vrot.slane %v1641, 5
      %v1930 = vsel %vm621, %v1928, %v1929
      %v1931 = vrot.slane %v1929, 4
      %v1932 = vrot.slane %v1642, 5
      %v1933 = vsel %vm621, %v1931, %v1932
      %v1934 = vrot.slane %v1906, 5
      %v1935 = vrot.slane %v1934, 4
      %v1936 = vrot.slane %v1644, 5
      %v1937 = vsel %vm621, %v1935, %v1936
      %v1938 = vrot.slane %v1936, 4
      %v1939 = vrot.slane %v1645, 5
      %v1940 = vsel %vm621, %v1938, %v1939
      %v1941 = vrot.slane %v1907, 5
      %v1942 = vrot.slane %v1941, 4
      %v1943 = vrot.slane %v1647, 5
      %v1944 = vsel %vm621, %v1942, %v1943
      %v1945 = vrot.slane %v1943, 4
      %v1946 = vrot.slane %v1648, 5
      %v1947 = vsel %vm621, %v1945, %v1946
      %s1948 = scalar_lea.vmem %s1, 1152
      %v1949 = vld [vmem:[%s1948] sm:$0xff]
      %v1950 = vld [vmem:[%s1948 + $0x10] sm:$0xff]
      %v1951 = vld [vmem:[%s1948 + $0x20] sm:$0xff]
      %v1952 = vld [vmem:[%s1948 + $0x30] sm:$0xff]
      %v1953 = vld [vmem:[%s1948 + $0x40] sm:$0xff]
      %v1954 = vld [vmem:[%s1948 + $0x50] sm:$0xff]
      %v1955 = vld [vmem:[%s1948 + $0x60] sm:$0xff]
      %v1956 = vld [vmem:[%s1948 + $0x70] sm:$0xff]
      %v1957 = vld [vmem:[%s1948 + $0x80] sm:$0xff]
      %v1958 = vunpack.c.l.b16 %v1923
      %v1959 = vunpack.c.l.b16 %v1926
      %v1960 = vunpack.c.l.b16 %v1930
      %v1961 = vunpack.c.l.b16 %v1933
      %v1962 = vunpack.c.l.b16 %v1937
      %v1963 = vunpack.c.l.b16 %v1940
      %v1964 = vunpack.c.l.b16 %v1944
      %v1965 = vunpack.c.l.b16 %v1947
      %v1966 = vpack.c.b16 %v1959, %v1958
      %v1967 = vpack.c.b16 %v1961, %v1960
      %v1968 = vpack.c.b16 %v1963, %v1962
      %v1969 = vpack.c.b16 %v1965, %v1964
      %v1979 = vunpack.c.l.b16 %v1949
      %v1980 = vunpack.c.h.b16 %v1949
      %v1981 = vunpack.c.l.b16 %v1950
      %v1982 = vunpack.c.h.b16 %v1950
      %v1983 = vunpack.c.l.b16 %v1951
      %v1984 = vunpack.c.h.b16 %v1951
      %v1985 = vunpack.c.l.b16 %v1952
      %v1986 = vunpack.c.h.b16 %v1952
      %v1987 = vunpack.c.l.b16 %v1953
      %v1988 = vunpack.c.h.b16 %v1953
      %v1989 = vunpack.c.l.b16 %v1954
      %v1990 = vunpack.c.h.b16 %v1954
      %v1991 = vunpack.c.l.b16 %v1955
      %v1992 = vunpack.c.h.b16 %v1955
      %v1993 = vunpack.c.l.b16 %v1956
      %v1994 = vunpack.c.h.b16 %v1956
      %v1995 = vunpack.c.l.b16 %v1957
      %v1996 = vunpack.c.h.b16 %v1957
      %v1997 = vpack.c.b16 %v1981, %v1979
      %v1998 = vpack.c.b16 %v1982, %v1980
      %v1999 = vpack.c.b16 %v1985, %v1983
      %v2000 = vpack.c.b16 %v1986, %v1984
      %v2001 = vpack.c.b16 %v1989, %v1987
      %v2002 = vpack.c.b16 %v1990, %v1988
      %v2003 = vpack.c.b16 %v1993, %v1991
      %v2004 = vpack.c.b16 %v1994, %v1992
      %v2005 = vpack.c.b16 %v1995, %v1995
      %v2006 = vpack.c.b16 %v1996, %v1996
      %v2016 = vsel %vm388, %v1966, 0
      %v2019 = vsel %vm388, %v1967, 0
      %v2022 = vsel %vm388, %v1968, 0
      %v2025 = vsel %vm388, %v1969, 0
      %v2028 = vsel %vm401, %v2005, 0
      %v2031 = vsel %vm401, %v2006, 0
      %2033 = vmatpush.bf16.msra.mxu0 0
      %2034 = vmatpush.bf16.msra.mxu0 0
      %2035 = vmatpush.bf16.msra.mxu0 0
      %2036 = vmatpush.bf16.msra.mxu0 %v2028
      %2037 = vmatpush.bf16.msra.mxu0 %v2003
      %2038 = vmatpush.bf16.msra.mxu0 %v2001
      %2039 = vmatpush.bf16.msra.mxu0 %v1999
      %2040 = vmatpush.bf16.msra.mxu0 %v1997
      %2041 = vmatmul.bf16.gmra.mxu0 %v2016
      %v2042 = vpop.f32.mrf.mxu0
      %v2043 = vadd.f32 0.0, %v2042
      %v2044 = vpop.f32.mrf.mxu0
      %v2045 = vadd.f32 0.0, %v2044
      %2046 = vmatmul.bf16.gmra.mxu0 %v2019
      %v2047 = vpop.f32.mrf.mxu0
      %v2048 = vadd.f32 0.0, %v2047
      %v2049 = vpop.f32.mrf.mxu0
      %v2050 = vadd.f32 0.0, %v2049
      %2051 = vmatmul.bf16.gmra.mxu0 %v2022
      %v2052 = vpop.f32.mrf.mxu0
      %v2053 = vadd.f32 0.0, %v2052
      %v2054 = vpop.f32.mrf.mxu0
      %v2055 = vadd.f32 0.0, %v2054
      %2056 = vmatmul.bf16.gmra.mxu0 %v2025
      %v2057 = vpop.f32.mrf.mxu0
      %v2058 = vadd.f32 0.0, %v2057
      %v2059 = vpop.f32.mrf.mxu0
      %v2060 = vadd.f32 0.0, %v2059
      %2061 = vdwg.mxu0
      %2062 = vmatpush.bf16.msra.mxu0 0
      %2063 = vmatpush.bf16.msra.mxu0 0
      %2064 = vmatpush.bf16.msra.mxu0 0
      %2065 = vmatpush.bf16.msra.mxu0 %v2031
      %2066 = vmatpush.bf16.msra.mxu0 %v2004
      %2067 = vmatpush.bf16.msra.mxu0 %v2002
      %2068 = vmatpush.bf16.msra.mxu0 %v2000
      %2069 = vmatpush.bf16.msra.mxu0 %v1998
      %2070 = vmatmul.bf16.gmra.mxu0 %v2016
      %v2071 = vpop.f32.mrf.mxu0
      %v2072 = vadd.f32 0.0, %v2071
      %v2073 = vpop.f32.mrf.mxu0
      %v2074 = vadd.f32 0.0, %v2073
      %2075 = vmatmul.bf16.gmra.mxu0 %v2019
      %v2076 = vpop.f32.mrf.mxu0
      %v2077 = vadd.f32 0.0, %v2076
      %v2078 = vpop.f32.mrf.mxu0
      %v2079 = vadd.f32 0.0, %v2078
      %2080 = vmatmul.bf16.gmra.mxu0 %v2022
      %v2081 = vpop.f32.mrf.mxu0
      %v2082 = vadd.f32 0.0, %v2081
      %v2083 = vpop.f32.mrf.mxu0
      %v2084 = vadd.f32 0.0, %v2083
      %2085 = vmatmul.bf16.gmra.mxu0 %v2025
      %v2086 = vpop.f32.mrf.mxu0
      %v2087 = vadd.f32 0.0, %v2086
      %v2088 = vpop.f32.mrf.mxu0
      %v2089 = vadd.f32 0.0, %v2088
      %2090 = vdwg.mxu0
      %v2091 = vadd.f32 %v1888, %v2043
      %v2092 = vadd.f32 %v1889, %v2072
      %v2093 = vadd.f32 %v1890, %v2045
      %v2094 = vadd.f32 %v1891, %v2074
      %v2095 = vadd.f32 %v1892, %v2048
      %v2096 = vadd.f32 %v1893, %v2077
      %v2097 = vadd.f32 %v1894, %v2050
      %v2098 = vadd.f32 %v1895, %v2079
      %v2099 = vadd.f32 %v1896, %v2053
      %v2100 = vadd.f32 %v1897, %v2082
      %v2101 = vadd.f32 %v1898, %v2055
      %v2102 = vadd.f32 %v1899, %v2084
      %v2103 = vadd.f32 %v1900, %v2058
      %v2104 = vadd.f32 %v1901, %v2087
      %v2105 = vadd.f32 %v1902, %v2060
      %v2106 = vadd.f32 %v1903, %v2089
      %v2107 = vld [vmem:[%s2] sm:$0x3]
      %v2109 = vperm.slane %v2107, 0
      %v2110 = vperm.slane %v2107, 1
      %v2113 = vadd.f32 %v2091, %v2109
      %v2114 = vadd.f32 %v2092, %v2110
      %v2115 = vadd.f32 %v2093, %v2109
      %v2116 = vadd.f32 %v2094, %v2110
      %v2117 = vadd.f32 %v2095, %v2109
      %v2118 = vadd.f32 %v2096, %v2110
      %v2119 = vadd.f32 %v2097, %v2109
      %v2120 = vadd.f32 %v2098, %v2110
      %v2121 = vadd.f32 %v2099, %v2109
      %v2122 = vadd.f32 %v2100, %v2110
      %v2123 = vadd.f32 %v2101, %v2109
      %v2124 = vadd.f32 %v2102, %v2110
      %v2125 = vadd.f32 %v2103, %v2109
      %v2126 = vadd.f32 %v2104, %v2110
      %v2127 = vadd.f32 %v2105, %v2109
      %v2128 = vadd.f32 %v2106, %v2110
      %v2129 = vmax.f32 %v2113, 0.0
      %v2130 = vmax.f32 %v2114, 0.0
      %v2131 = vmax.f32 %v2115, 0.0
      %v2132 = vmax.f32 %v2116, 0.0
      %v2133 = vmax.f32 %v2117, 0.0
      %v2134 = vmax.f32 %v2118, 0.0
      %v2135 = vmax.f32 %v2119, 0.0
      %v2136 = vmax.f32 %v2120, 0.0
      %v2137 = vmax.f32 %v2121, 0.0
      %v2138 = vmax.f32 %v2122, 0.0
      %v2139 = vmax.f32 %v2123, 0.0
      %v2140 = vmax.f32 %v2124, 0.0
      %v2141 = vmax.f32 %v2125, 0.0
      %v2142 = vmax.f32 %v2126, 0.0
      %v2143 = vmax.f32 %v2127, 0.0
      %v2144 = vmax.f32 %v2128, 0.0
      %2145 = vst [vmem:[%s194] sm:$0xff] %v2129
      %2146 = vst [vmem:[%s194 + $0x8] sm:$0xff] %v2130
      %2147 = vst [vmem:[%s194 + $0x20] sm:$0xff] %v2131
      %2148 = vst [vmem:[%s194 + $0x28] sm:$0xff] %v2132
      %2149 = vst [vmem:[%s194 + $0x40] sm:$0xff] %v2133
      %2150 = vst [vmem:[%s194 + $0x48] sm:$0xff] %v2134
      %2151 = vst [vmem:[%s194 + $0x60] sm:$0xff] %v2135
      %2152 = vst [vmem:[%s194 + $0x68] sm:$0xff] %v2136
      %2153 = vst [vmem:[%s194 + $0x80] sm:$0xff] %v2137
      %2154 = vst [vmem:[%s194 + $0x88] sm:$0xff] %v2138
      %2155 = vst [vmem:[%s194 + $0xa0] sm:$0xff] %v2139
      %2156 = vst [vmem:[%s194 + $0xa8] sm:$0xff] %v2140
      %2157 = vst [vmem:[%s194 + $0xc0] sm:$0xff] %v2141
      %2158 = vst [vmem:[%s194 + $0xc8] sm:$0xff] %v2142
      %2159 = vst [vmem:[%s194 + $0xe0] sm:$0xff] %v2143
      %2160 = vst [vmem:[%s194 + $0xe8] sm:$0xff] %v2144
      %v2161 = vld [vmem:[%s200] sm:$0xf]
      %v2162 = vld [vmem:[%s200 + $0x4] sm:$0xf]
      %v2163 = vld [vmem:[%s200 + $0xc] sm:$0xf]
      %v2164 = vld [vmem:[%s200 + $0x10] sm:$0xf]
      %v2165 = vld [vmem:[%s200 + $0x18] sm:$0xf]
      %v2166 = vld [vmem:[%s200 + $0x1c] sm:$0xf]
      %v2167 = vld [vmem:[%s200 + $0x24] sm:$0xf]
      %v2168 = vld [vmem:[%s200 + $0x28] sm:$0xf]
      %v2169 = vld [vmem:[%s1 + $0x8] sm:$0xff]
      %v2170 = vld [vmem:[%s1 + $0x18] sm:$0xff]
      %v2171 = vld [vmem:[%s1 + $0x28] sm:$0xff]
      %v2172 = vld [vmem:[%s1 + $0x38] sm:$0xff]
      %v2173 = vld [vmem:[%s1 + $0x48] sm:$0xff]
      %v2174 = vld [vmem:[%s1 + $0x58] sm:$0xff]
      %v2175 = vld [vmem:[%s1 + $0x68] sm:$0xff]
      %v2176 = vld [vmem:[%s1 + $0x78] sm:$0xff]
      %v2177 = vld [vmem:[%s1 + $0x88] sm:$0xff]
      %v2178 = vld [vmem:[%s200 + $0x8] sm:$0x1]
      %v2179 = vld [vmem:[%s200 + $0x14] sm:$0x1]
      %v2180 = vld [vmem:[%s200 + $0x20] sm:$0x1]
      %v2181 = vld [vmem:[%s200 + $0x2c] sm:$0x1]
      %v2183 = vshrl.u32 %v2161, 16
      %v2185 = vrot.slane %v2183, 4
      %v2186 = vshll.u32 %v2161, 16
      %v2188 = vrot.slane %v2186, 5
      %v2189 = vor.u32 %v2185, %v2188
      %v2190 = vrot.slane %v2189, 4
      %v2192 = vshll.u32 %v2162, 16
      %v2194 = vrot.slane %v2192, 5
      %v2195 = vsel %vm224, %v2190, %v2194
      %v2196 = vshrl.u32 %v2162, 16
      %v2198 = vrot.slane %v2196, 4
      %v2199 = vor.u32 %v2198, %v2194
      %v2200 = vrot.slane %v2199, 4
      %v2202 = vshll.u32 %v2178, 16
      %v2204 = vrot.slane %v2202, 5
      %v2205 = vsel %vm224, %v2200, %v2204
      %v2207 = vshrl.u32 %v2163, 16
      %v2209 = vrot.slane %v2207, 4
      %v2210 = vshll.u32 %v2163, 16
      %v2212 = vrot.slane %v2210, 5
      %v2213 = vor.u32 %v2209, %v2212
      %v2214 = vrot.slane %v2213, 4
      %v2216 = vshll.u32 %v2164, 16
      %v2218 = vrot.slane %v2216, 5
      %v2219 = vsel %vm224, %v2214, %v2218
      %v2220 = vshrl.u32 %v2164, 16
      %v2222 = vrot.slane %v2220, 4
      %v2223 = vor.u32 %v2222, %v2218
      %v2224 = vrot.slane %v2223, 4
      %v2226 = vshll.u32 %v2179, 16
      %v2228 = vrot.slane %v2226, 5
      %v2229 = vsel %vm224, %v2224, %v2228
      %v2231 = vshrl.u32 %v2165, 16
      %v2233 = vrot.slane %v2231, 4
      %v2234 = vshll.u32 %v2165, 16
      %v2236 = vrot.slane %v2234, 5
      %v2237 = vor.u32 %v2233, %v2236
      %v2238 = vrot.slane %v2237, 4
      %v2240 = vshll.u32 %v2166, 16
      %v2242 = vrot.slane %v2240, 5
      %v2243 = vsel %vm224, %v2238, %v2242
      %v2244 = vshrl.u32 %v2166, 16
      %v2246 = vrot.slane %v2244, 4
      %v2247 = vor.u32 %v2246, %v2242
      %v2248 = vrot.slane %v2247, 4
      %v2250 = vshll.u32 %v2180, 16
      %v2252 = vrot.slane %v2250, 5
      %v2253 = vsel %vm224, %v2248, %v2252
      %v2255 = vshrl.u32 %v2167, 16
      %v2257 = vrot.slane %v2255, 4
      %v2258 = vshll.u32 %v2167, 16
      %v2260 = vrot.slane %v2258, 5
      %v2261 = vor.u32 %v2257, %v2260
      %v2262 = vrot.slane %v2261, 4
      %v2264 = vshll.u32 %v2168, 16
      %v2266 = vrot.slane %v2264, 5
      %v2267 = vsel %vm224, %v2262, %v2266
      %v2268 = vshrl.u32 %v2168, 16
      %v2270 = vrot.slane %v2268, 4
      %v2271 = vor.u32 %v2270, %v2266
      %v2272 = vrot.slane %v2271, 4
      %v2274 = vshll.u32 %v2181, 16
      %v2276 = vrot.slane %v2274, 5
      %v2277 = vsel %vm224, %v2272, %v2276
      %v2278 = vld [vmem:[%s321 + $0x8] sm:$0xff]
      %v2279 = vld [vmem:[%s321 + $0x18] sm:$0xff]
      %v2280 = vld [vmem:[%s321 + $0x28] sm:$0xff]
      %v2281 = vld [vmem:[%s321 + $0x38] sm:$0xff]
      %v2282 = vld [vmem:[%s321 + $0x48] sm:$0xff]
      %v2283 = vld [vmem:[%s321 + $0x58] sm:$0xff]
      %v2284 = vld [vmem:[%s321 + $0x68] sm:$0xff]
      %v2285 = vld [vmem:[%s321 + $0x78] sm:$0xff]
      %v2286 = vld [vmem:[%s321 + $0x88] sm:$0xff]
      %v2287 = vunpack.c.l.b16 %v2195
      %v2288 = vunpack.c.l.b16 %v2205
      %v2289 = vunpack.c.l.b16 %v2219
      %v2290 = vunpack.c.l.b16 %v2229
      %v2291 = vunpack.c.l.b16 %v2243
      %v2292 = vunpack.c.l.b16 %v2253
      %v2293 = vunpack.c.l.b16 %v2267
      %v2294 = vunpack.c.l.b16 %v2277
      %v2295 = vpack.c.b16 %v2288, %v2287
      %v2296 = vpack.c.b16 %v2290, %v2289
      %v2297 = vpack.c.b16 %v2292, %v2291
      %v2298 = vpack.c.b16 %v2294, %v2293
      %v2308 = vunpack.c.l.b16 %v2278
      %v2309 = vunpack.c.h.b16 %v2278
      %v2310 = vunpack.c.l.b16 %v2279
      %v2311 = vunpack.c.h.b16 %v2279
      %v2312 = vunpack.c.l.b16 %v2280
      %v2313 = vunpack.c.h.b16 %v2280
      %v2314 = vunpack.c.l.b16 %v2281
      %v2315 = vunpack.c.h.b16 %v2281
      %v2316 = vunpack.c.l.b16 %v2282
      %v2317 = vunpack.c.h.b16 %v2282
      %v2318 = vunpack.c.l.b16 %v2283
      %v2319 = vunpack.c.h.b16 %v2283
      %v2320 = vunpack.c.l.b16 %v2284
      %v2321 = vunpack.c.h.b16 %v2284
      %v2322 = vunpack.c.l.b16 %v2285
      %v2323 = vunpack.c.h.b16 %v2285
      %v2324 = vunpack.c.l.b16 %v2286
      %v2325 = vunpack.c.h.b16 %v2286
      %v2326 = vpack.c.b16 %v2310, %v2308
      %v2327 = vpack.c.b16 %v2311, %v2309
      %v2328 = vpack.c.b16 %v2314, %v2312
      %v2329 = vpack.c.b16 %v2315, %v2313
      %v2330 = vpack.c.b16 %v2318, %v2316
      %v2331 = vpack.c.b16 %v2319, %v2317
      %v2332 = vpack.c.b16 %v2322, %v2320
      %v2333 = vpack.c.b16 %v2323, %v2321
      %v2334 = vpack.c.b16 %v2324, %v2324
      %v2335 = vpack.c.b16 %v2325, %v2325
      %v2345 = vsel %vm388, %v2295, 0
      %v2348 = vsel %vm388, %v2296, 0
      %v2351 = vsel %vm388, %v2297, 0
      %v2354 = vsel %vm388, %v2298, 0
      %v2357 = vsel %vm401, %v2334, 0
      %v2360 = vsel %vm401, %v2335, 0
      %2362 = vmatpush.bf16.msra.mxu0 0
      %2363 = vmatpush.bf16.msra.mxu0 0
      %2364 = vmatpush.bf16.msra.mxu0 0
      %2365 = vmatpush.bf16.msra.mxu0 %v2357
      %2366 = vmatpush.bf16.msra.mxu0 %v2332
      %2367 = vmatpush.bf16.msra.mxu0 %v2330
      %2368 = vmatpush.bf16.msra.mxu0 %v2328
      %2369 = vmatpush.bf16.msra.mxu0 %v2326
      %2370 = vmatmul.bf16.gmra.mxu0 %v2345
      %v2371 = vpop.f32.mrf.mxu0
      %v2372 = vadd.f32 0.0, %v2371
      %v2373 = vpop.f32.mrf.mxu0
      %v2374 = vadd.f32 0.0, %v2373
      %2375 = vmatmul.bf16.gmra.mxu0 %v2348
      %v2376 = vpop.f32.mrf.mxu0
      %v2377 = vadd.f32 0.0, %v2376
      %v2378 = vpop.f32.mrf.mxu0
      %v2379 = vadd.f32 0.0, %v2378
      %2380 = vmatmul.bf16.gmra.mxu0 %v2351
      %v2381 = vpop.f32.mrf.mxu0
      %v2382 = vadd.f32 0.0, %v2381
      %v2383 = vpop.f32.mrf.mxu0
      %v2384 = vadd.f32 0.0, %v2383
      %2385 = vmatmul.bf16.gmra.mxu0 %v2354
      %v2386 = vpop.f32.mrf.mxu0
      %v2387 = vadd.f32 0.0, %v2386
      %v2388 = vpop.f32.mrf.mxu0
      %v2389 = vadd.f32 0.0, %v2388
      %2390 = vdwg.mxu0
      %2391 = vmatpush.bf16.msra.mxu0 0
      %2392 = vmatpush.bf16.msra.mxu0 0
      %2393 = vmatpush.bf16.msra.mxu0 0
      %2394 = vmatpush.bf16.msra.mxu0 %v2360
      %2395 = vmatpush.bf16.msra.mxu0 %v2333
      %2396 = vmatpush.bf16.msra.mxu0 %v2331
      %2397 = vmatpush.bf16.msra.mxu0 %v2329
      %2398 = vmatpush.bf16.msra.mxu0 %v2327
      %2399 = vmatmul.bf16.gmra.mxu0 %v2345
      %v2400 = vpop.f32.mrf.mxu0
      %v2401 = vadd.f32 0.0, %v2400
      %v2402 = vpop.f32.mrf.mxu0
      %v2403 = vadd.f32 0.0, %v2402
      %2404 = vmatmul.bf16.gmra.mxu0 %v2348
      %v2405 = vpop.f32.mrf.mxu0
      %v2406 = vadd.f32 0.0, %v2405
      %v2407 = vpop.f32.mrf.mxu0
      %v2408 = vadd.f32 0.0, %v2407
      %2409 = vmatmul.bf16.gmra.mxu0 %v2351
      %v2410 = vpop.f32.mrf.mxu0
      %v2411 = vadd.f32 0.0, %v2410
      %v2412 = vpop.f32.mrf.mxu0
      %v2413 = vadd.f32 0.0, %v2412
      %2414 = vmatmul.bf16.gmra.mxu0 %v2354
      %v2415 = vpop.f32.mrf.mxu0
      %v2416 = vadd.f32 0.0, %v2415
      %v2417 = vpop.f32.mrf.mxu0
      %v2418 = vadd.f32 0.0, %v2417
      %2419 = vdwg.mxu0
      %v2428 = vunpack.c.l.b16 %v2161
      %v2429 = vunpack.c.l.b16 %v2162
      %v2430 = vunpack.c.l.b16 %v2163
      %v2431 = vunpack.c.l.b16 %v2164
      %v2432 = vunpack.c.l.b16 %v2165
      %v2433 = vunpack.c.l.b16 %v2166
      %v2434 = vunpack.c.l.b16 %v2167
      %v2435 = vunpack.c.l.b16 %v2168
      %v2436 = vpack.c.b16 %v2429, %v2428
      %v2437 = vpack.c.b16 %v2431, %v2430
      %v2438 = vpack.c.b16 %v2433, %v2432
      %v2439 = vpack.c.b16 %v2435, %v2434
      %v2449 = vunpack.c.l.b16 %v2169
      %v2450 = vunpack.c.h.b16 %v2169
      %v2451 = vunpack.c.l.b16 %v2170
      %v2452 = vunpack.c.h.b16 %v2170
      %v2453 = vunpack.c.l.b16 %v2171
      %v2454 = vunpack.c.h.b16 %v2171
      %v2455 = vunpack.c.l.b16 %v2172
      %v2456 = vunpack.c.h.b16 %v2172
      %v2457 = vunpack.c.l.b16 %v2173
      %v2458 = vunpack.c.h.b16 %v2173
      %v2459 = vunpack.c.l.b16 %v2174
      %v2460 = vunpack.c.h.b16 %v2174
      %v2461 = vunpack.c.l.b16 %v2175
      %v2462 = vunpack.c.h.b16 %v2175
      %v2463 = vunpack.c.l.b16 %v2176
      %v2464 = vunpack.c.h.b16 %v2176
      %v2465 = vunpack.c.l.b16 %v2177
      %v2466 = vunpack.c.h.b16 %v2177
      %v2467 = vpack.c.b16 %v2451, %v2449
      %v2468 = vpack.c.b16 %v2452, %v2450
      %v2469 = vpack.c.b16 %v2455, %v2453
      %v2470 = vpack.c.b16 %v2456, %v2454
      %v2471 = vpack.c.b16 %v2459, %v2457
      %v2472 = vpack.c.b16 %v2460, %v2458
      %v2473 = vpack.c.b16 %v2463, %v2461
      %v2474 = vpack.c.b16 %v2464, %v2462
      %v2475 = vpack.c.b16 %v2465, %v2465
      %v2476 = vpack.c.b16 %v2466, %v2466
      %v2486 = vsel %vm388, %v2436, 0
      %v2489 = vsel %vm388, %v2437, 0
      %v2492 = vsel %vm388, %v2438, 0
      %v2495 = vsel %vm388, %v2439, 0
      %v2498 = vsel %vm401, %v2475, 0
      %v2501 = vsel %vm401, %v2476, 0
      %2503 = vmatpush.bf16.msra.mxu0 0
      %2504 = vmatpush.bf16.msra.mxu0 0
      %2505 = vmatpush.bf16.msra.mxu0 0
      %2506 = vmatpush.bf16.msra.mxu0 %v2498
      %2507 = vmatpush.bf16.msra.mxu0 %v2473
      %2508 = vmatpush.bf16.msra.mxu0 %v2471
      %2509 = vmatpush.bf16.msra.mxu0 %v2469
      %2510 = vmatpush.bf16.msra.mxu0 %v2467
      %2511 = vmatmul.bf16.gmra.mxu0 %v2486
      %v2512 = vpop.f32.mrf.mxu0
      %v2513 = vadd.f32 %v2372, %v2512
      %v2514 = vpop.f32.mrf.mxu0
      %v2515 = vadd.f32 %v2374, %v2514
      %2516 = vmatmul.bf16.gmra.mxu0 %v2489
      %v2517 = vpop.f32.mrf.mxu0
      %v2518 = vadd.f32 %v2377, %v2517
      %v2519 = vpop.f32.mrf.mxu0
      %v2520 = vadd.f32 %v2379, %v2519
      %2521 = vmatmul.bf16.gmra.mxu0 %v2492
      %v2522 = vpop.f32.mrf.mxu0
      %v2523 = vadd.f32 %v2382, %v2522
      %v2524 = vpop.f32.mrf.mxu0
      %v2525 = vadd.f32 %v2384, %v2524
      %2526 = vmatmul.bf16.gmra.mxu0 %v2495
      %v2527 = vpop.f32.mrf.mxu0
      %v2528 = vadd.f32 %v2387, %v2527
      %v2529 = vpop.f32.mrf.mxu0
      %v2530 = vadd.f32 %v2389, %v2529
      %2531 = vdwg.mxu0
      %2532 = vmatpush.bf16.msra.mxu0 0
      %2533 = vmatpush.bf16.msra.mxu0 0
      %2534 = vmatpush.bf16.msra.mxu0 0
      %2535 = vmatpush.bf16.msra.mxu0 %v2501
      %2536 = vmatpush.bf16.msra.mxu0 %v2474
      %2537 = vmatpush.bf16.msra.mxu0 %v2472
      %2538 = vmatpush.bf16.msra.mxu0 %v2470
      %2539 = vmatpush.bf16.msra.mxu0 %v2468
      %2540 = vmatmul.bf16.gmra.mxu0 %v2486
      %v2541 = vpop.f32.mrf.mxu0
      %v2542 = vadd.f32 %v2401, %v2541
      %v2543 = vpop.f32.mrf.mxu0
      %v2544 = vadd.f32 %v2403, %v2543
      %2545 = vmatmul.bf16.gmra.mxu0 %v2489
      %v2546 = vpop.f32.mrf.mxu0
      %v2547 = vadd.f32 %v2406, %v2546
      %v2548 = vpop.f32.mrf.mxu0
      %v2549 = vadd.f32 %v2408, %v2548
      %2550 = vmatmul.bf16.gmra.mxu0 %v2492
      %v2551 = vpop.f32.mrf.mxu0
      %v2552 = vadd.f32 %v2411, %v2551
      %v2553 = vpop.f32.mrf.mxu0
      %v2554 = vadd.f32 %v2413, %v2553
      %2555 = vmatmul.bf16.gmra.mxu0 %v2495
      %v2556 = vpop.f32.mrf.mxu0
      %v2557 = vadd.f32 %v2416, %v2556
      %v2558 = vpop.f32.mrf.mxu0
      %v2559 = vadd.f32 %v2418, %v2558
      %2560 = vdwg.mxu0
      %v2561 = vld [vmem:[%s200] sm:$0xe]
      %v2562 = vld [vmem:[%s200 + $0xc] sm:$0xe]
      %v2563 = vld [vmem:[%s200 + $0x18] sm:$0xe]
      %v2564 = vld [vmem:[%s200 + $0x24] sm:$0xe]
      %v2573 = vrot.slane %v2561, 5
      %v2574 = vrot.slane %v2573, 4
      %v2575 = vrot.slane %v2162, 5
      %v2576 = vsel %vm621, %v2574, %v2575
      %v2577 = vrot.slane %v2575, 4
      %v2578 = vrot.slane %v2178, 5
      %v2579 = vsel %vm621, %v2577, %v2578
      %v2580 = vrot.slane %v2562, 5
      %v2581 = vrot.slane %v2580, 4
      %v2582 = vrot.slane %v2164, 5
      %v2583 = vsel %vm621, %v2581, %v2582
      %v2584 = vrot.slane %v2582, 4
      %v2585 = vrot.slane %v2179, 5
      %v2586 = vsel %vm621, %v2584, %v2585
      %v2587 = vrot.slane %v2563, 5
      %v2588 = vrot.slane %v2587, 4
      %v2589 = vrot.slane %v2166, 5
      %v2590 = vsel %vm621, %v2588, %v2589
      %v2591 = vrot.slane %v2589, 4
      %v2592 = vrot.slane %v2180, 5
      %v2593 = vsel %vm621, %v2591, %v2592
      %v2594 = vrot.slane %v2564, 5
      %v2595 = vrot.slane %v2594, 4
      %v2596 = vrot.slane %v2168, 5
      %v2597 = vsel %vm621, %v2595, %v2596
      %v2598 = vrot.slane %v2596, 4
      %v2599 = vrot.slane %v2181, 5
      %v2600 = vsel %vm621, %v2598, %v2599
      %v2601 = vld [vmem:[%s650 + $0x8] sm:$0xff]
      %v2602 = vld [vmem:[%s650 + $0x18] sm:$0xff]
      %v2603 = vld [vmem:[%s650 + $0x28] sm:$0xff]
      %v2604 = vld [vmem:[%s650 + $0x38] sm:$0xff]
      %v2605 = vld [vmem:[%s650 + $0x48] sm:$0xff]
      %v2606 = vld [vmem:[%s650 + $0x58] sm:$0xff]
      %v2607 = vld [vmem:[%s650 + $0x68] sm:$0xff]
      %v2608 = vld [vmem:[%s650 + $0x78] sm:$0xff]
      %v2609 = vld [vmem:[%s650 + $0x88] sm:$0xff]
      %v2610 = vunpack.c.l.b16 %v2576
      %v2611 = vunpack.c.l.b16 %v2579
      %v2612 = vunpack.c.l.b16 %v2583
      %v2613 = vunpack.c.l.b16 %v2586
      %v2614 = vunpack.c.l.b16 %v2590
      %v2615 = vunpack.c.l.b16 %v2593
      %v2616 = vunpack.c.l.b16 %v2597
      %v2617 = vunpack.c.l.b16 %v2600
      %v2618 = vpack.c.b16 %v2611, %v2610
      %v2619 = vpack.c.b16 %v2613, %v2612
      %v2620 = vpack.c.b16 %v2615, %v2614
      %v2621 = vpack.c.b16 %v2617, %v2616
      %v2631 = vunpack.c.l.b16 %v2601
      %v2632 = vunpack.c.h.b16 %v2601
      %v2633 = vunpack.c.l.b16 %v2602
      %v2634 = vunpack.c.h.b16 %v2602
      %v2635 = vunpack.c.l.b16 %v2603
      %v2636 = vunpack.c.h.b16 %v2603
      %v2637 = vunpack.c.l.b16 %v2604
      %v2638 = vunpack.c.h.b16 %v2604
      %v2639 = vunpack.c.l.b16 %v2605
      %v2640 = vunpack.c.h.b16 %v2605
      %v2641 = vunpack.c.l.b16 %v2606
      %v2642 = vunpack.c.h.b16 %v2606
      %v2643 = vunpack.c.l.b16 %v2607
      %v2644 = vunpack.c.h.b16 %v2607
      %v2645 = vunpack.c.l.b16 %v2608
      %v2646 = vunpack.c.h.b16 %v2608
      %v2647 = vunpack.c.l.b16 %v2609
      %v2648 = vunpack.c.h.b16 %v2609
      %v2649 = vpack.c.b16 %v2633, %v2631
      %v2650 = vpack.c.b16 %v2634, %v2632
      %v2651 = vpack.c.b16 %v2637, %v2635
      %v2652 = vpack.c.b16 %v2638, %v2636
      %v2653 = vpack.c.b16 %v2641, %v2639
      %v2654 = vpack.c.b16 %v2642, %v2640
      %v2655 = vpack.c.b16 %v2645, %v2643
      %v2656 = vpack.c.b16 %v2646, %v2644
      %v2657 = vpack.c.b16 %v2647, %v2647
      %v2658 = vpack.c.b16 %v2648, %v2648
      %v2668 = vsel %vm388, %v2618, 0
      %v2671 = vsel %vm388, %v2619, 0
      %v2674 = vsel %vm388, %v2620, 0
      %v2677 = vsel %vm388, %v2621, 0
      %v2680 = vsel %vm401, %v2657, 0
      %v2683 = vsel %vm401, %v2658, 0
      %2685 = vmatpush.bf16.msra.mxu0 0
      %2686 = vmatpush.bf16.msra.mxu0 0
      %2687 = vmatpush.bf16.msra.mxu0 0
      %2688 = vmatpush.bf16.msra.mxu0 %v2680
      %2689 = vmatpush.bf16.msra.mxu0 %v2655
      %2690 = vmatpush.bf16.msra.mxu0 %v2653
      %2691 = vmatpush.bf16.msra.mxu0 %v2651
      %2692 = vmatpush.bf16.msra.mxu0 %v2649
      %2693 = vmatmul.bf16.gmra.mxu0 %v2668
      %v2694 = vpop.f32.mrf.mxu0
      %v2695 = vadd.f32 0.0, %v2694
      %v2696 = vpop.f32.mrf.mxu0
      %v2697 = vadd.f32 0.0, %v2696
      %2698 = vmatmul.bf16.gmra.mxu0 %v2671
      %v2699 = vpop.f32.mrf.mxu0
      %v2700 = vadd.f32 0.0, %v2699
      %v2701 = vpop.f32.mrf.mxu0
      %v2702 = vadd.f32 0.0, %v2701
      %2703 = vmatmul.bf16.gmra.mxu0 %v2674
      %v2704 = vpop.f32.mrf.mxu0
      %v2705 = vadd.f32 0.0, %v2704
      %v2706 = vpop.f32.mrf.mxu0
      %v2707 = vadd.f32 0.0, %v2706
      %2708 = vmatmul.bf16.gmra.mxu0 %v2677
      %v2709 = vpop.f32.mrf.mxu0
      %v2710 = vadd.f32 0.0, %v2709
      %v2711 = vpop.f32.mrf.mxu0
      %v2712 = vadd.f32 0.0, %v2711
      %2713 = vdwg.mxu0
      %2714 = vmatpush.bf16.msra.mxu0 0
      %2715 = vmatpush.bf16.msra.mxu0 0
      %2716 = vmatpush.bf16.msra.mxu0 0
      %2717 = vmatpush.bf16.msra.mxu0 %v2683
      %2718 = vmatpush.bf16.msra.mxu0 %v2656
      %2719 = vmatpush.bf16.msra.mxu0 %v2654
      %2720 = vmatpush.bf16.msra.mxu0 %v2652
      %2721 = vmatpush.bf16.msra.mxu0 %v2650
      %2722 = vmatmul.bf16.gmra.mxu0 %v2668
      %v2723 = vpop.f32.mrf.mxu0
      %v2724 = vadd.f32 0.0, %v2723
      %v2725 = vpop.f32.mrf.mxu0
      %v2726 = vadd.f32 0.0, %v2725
      %2727 = vmatmul.bf16.gmra.mxu0 %v2671
      %v2728 = vpop.f32.mrf.mxu0
      %v2729 = vadd.f32 0.0, %v2728
      %v2730 = vpop.f32.mrf.mxu0
      %v2731 = vadd.f32 0.0, %v2730
      %2732 = vmatmul.bf16.gmra.mxu0 %v2674
      %v2733 = vpop.f32.mrf.mxu0
      %v2734 = vadd.f32 0.0, %v2733
      %v2735 = vpop.f32.mrf.mxu0
      %v2736 = vadd.f32 0.0, %v2735
      %2737 = vmatmul.bf16.gmra.mxu0 %v2677
      %v2738 = vpop.f32.mrf.mxu0
      %v2739 = vadd.f32 0.0, %v2738
      %v2740 = vpop.f32.mrf.mxu0
      %v2741 = vadd.f32 0.0, %v2740
      %2742 = vdwg.mxu0
      %v2743 = vadd.f32 %v2513, %v2695
      %v2744 = vadd.f32 %v2542, %v2724
      %v2745 = vadd.f32 %v2515, %v2697
      %v2746 = vadd.f32 %v2544, %v2726
      %v2747 = vadd.f32 %v2518, %v2700
      %v2748 = vadd.f32 %v2547, %v2729
      %v2749 = vadd.f32 %v2520, %v2702
      %v2750 = vadd.f32 %v2549, %v2731
      %v2751 = vadd.f32 %v2523, %v2705
      %v2752 = vadd.f32 %v2552, %v2734
      %v2753 = vadd.f32 %v2525, %v2707
      %v2754 = vadd.f32 %v2554, %v2736
      %v2755 = vadd.f32 %v2528, %v2710
      %v2756 = vadd.f32 %v2557, %v2739
      %v2757 = vadd.f32 %v2530, %v2712
      %v2758 = vadd.f32 %v2559, %v2741
      %v2759 = vld [vmem:[%s812] sm:$0xf]
      %v2760 = vld [vmem:[%s812 + $0x4] sm:$0xf]
      %v2761 = vld [vmem:[%s812 + $0xc] sm:$0xf]
      %v2762 = vld [vmem:[%s812 + $0x10] sm:$0xf]
      %v2763 = vld [vmem:[%s812 + $0x18] sm:$0xf]
      %v2764 = vld [vmem:[%s812 + $0x1c] sm:$0xf]
      %v2765 = vld [vmem:[%s812 + $0x24] sm:$0xf]
      %v2766 = vld [vmem:[%s812 + $0x28] sm:$0xf]
      %v2767 = vld [vmem:[%s821 + $0x8] sm:$0xff]
      %v2768 = vld [vmem:[%s821 + $0x18] sm:$0xff]
      %v2769 = vld [vmem:[%s821 + $0x28] sm:$0xff]
      %v2770 = vld [vmem:[%s821 + $0x38] sm:$0xff]
      %v2771 = vld [vmem:[%s821 + $0x48] sm:$0xff]
      %v2772 = vld [vmem:[%s821 + $0x58] sm:$0xff]
      %v2773 = vld [vmem:[%s821 + $0x68] sm:$0xff]
      %v2774 = vld [vmem:[%s821 + $0x78] sm:$0xff]
      %v2775 = vld [vmem:[%s821 + $0x88] sm:$0xff]
      %v2784 = vunpack.c.l.b16 %v2759
      %v2785 = vunpack.c.l.b16 %v2760
      %v2786 = vunpack.c.l.b16 %v2761
      %v2787 = vunpack.c.l.b16 %v2762
      %v2788 = vunpack.c.l.b16 %v2763
      %v2789 = vunpack.c.l.b16 %v2764
      %v2790 = vunpack.c.l.b16 %v2765
      %v2791 = vunpack.c.l.b16 %v2766
      %v2792 = vpack.c.b16 %v2785, %v2784
      %v2793 = vpack.c.b16 %v2787, %v2786
      %v2794 = vpack.c.b16 %v2789, %v2788
      %v2795 = vpack.c.b16 %v2791, %v2790
      %v2805 = vunpack.c.l.b16 %v2767
      %v2806 = vunpack.c.h.b16 %v2767
      %v2807 = vunpack.c.l.b16 %v2768
      %v2808 = vunpack.c.h.b16 %v2768
      %v2809 = vunpack.c.l.b16 %v2769
      %v2810 = vunpack.c.h.b16 %v2769
      %v2811 = vunpack.c.l.b16 %v2770
      %v2812 = vunpack.c.h.b16 %v2770
      %v2813 = vunpack.c.l.b16 %v2771
      %v2814 = vunpack.c.h.b16 %v2771
      %v2815 = vunpack.c.l.b16 %v2772
      %v2816 = vunpack.c.h.b16 %v2772
      %v2817 = vunpack.c.l.b16 %v2773
      %v2818 = vunpack.c.h.b16 %v2773
      %v2819 = vunpack.c.l.b16 %v2774
      %v2820 = vunpack.c.h.b16 %v2774
      %v2821 = vunpack.c.l.b16 %v2775
      %v2822 = vunpack.c.h.b16 %v2775
      %v2823 = vpack.c.b16 %v2807, %v2805
      %v2824 = vpack.c.b16 %v2808, %v2806
      %v2825 = vpack.c.b16 %v2811, %v2809
      %v2826 = vpack.c.b16 %v2812, %v2810
      %v2827 = vpack.c.b16 %v2815, %v2813
      %v2828 = vpack.c.b16 %v2816, %v2814
      %v2829 = vpack.c.b16 %v2819, %v2817
      %v2830 = vpack.c.b16 %v2820, %v2818
      %v2831 = vpack.c.b16 %v2821, %v2821
      %v2832 = vpack.c.b16 %v2822, %v2822
      %v2842 = vsel %vm388, %v2792, 0
      %v2845 = vsel %vm388, %v2793, 0
      %v2848 = vsel %vm388, %v2794, 0
      %v2851 = vsel %vm388, %v2795, 0
      %v2854 = vsel %vm401, %v2831, 0
      %v2857 = vsel %vm401, %v2832, 0
      %2859 = vmatpush.bf16.msra.mxu0 0
      %2860 = vmatpush.bf16.msra.mxu0 0
      %2861 = vmatpush.bf16.msra.mxu0 0
      %2862 = vmatpush.bf16.msra.mxu0 %v2854
      %2863 = vmatpush.bf16.msra.mxu0 %v2829
      %2864 = vmatpush.bf16.msra.mxu0 %v2827
      %2865 = vmatpush.bf16.msra.mxu0 %v2825
      %2866 = vmatpush.bf16.msra.mxu0 %v2823
      %2867 = vmatmul.bf16.gmra.mxu0 %v2842
      %v2868 = vpop.f32.mrf.mxu0
      %v2869 = vadd.f32 0.0, %v2868
      %v2870 = vpop.f32.mrf.mxu0
      %v2871 = vadd.f32 0.0, %v2870
      %2872 = vmatmul.bf16.gmra.mxu0 %v2845
      %v2873 = vpop.f32.mrf.mxu0
      %v2874 = vadd.f32 0.0, %v2873
      %v2875 = vpop.f32.mrf.mxu0
      %v2876 = vadd.f32 0.0, %v2875
      %2877 = vmatmul.bf16.gmra.mxu0 %v2848
      %v2878 = vpop.f32.mrf.mxu0
      %v2879 = vadd.f32 0.0, %v2878
      %v2880 = vpop.f32.mrf.mxu0
      %v2881 = vadd.f32 0.0, %v2880
      %2882 = vmatmul.bf16.gmra.mxu0 %v2851
      %v2883 = vpop.f32.mrf.mxu0
      %v2884 = vadd.f32 0.0, %v2883
      %v2885 = vpop.f32.mrf.mxu0
      %v2886 = vadd.f32 0.0, %v2885
      %2887 = vdwg.mxu0
      %2888 = vmatpush.bf16.msra.mxu0 0
      %2889 = vmatpush.bf16.msra.mxu0 0
      %2890 = vmatpush.bf16.msra.mxu0 0
      %2891 = vmatpush.bf16.msra.mxu0 %v2857
      %2892 = vmatpush.bf16.msra.mxu0 %v2830
      %2893 = vmatpush.bf16.msra.mxu0 %v2828
      %2894 = vmatpush.bf16.msra.mxu0 %v2826
      %2895 = vmatpush.bf16.msra.mxu0 %v2824
      %2896 = vmatmul.bf16.gmra.mxu0 %v2842
      %v2897 = vpop.f32.mrf.mxu0
      %v2898 = vadd.f32 0.0, %v2897
      %v2899 = vpop.f32.mrf.mxu0
      %v2900 = vadd.f32 0.0, %v2899
      %2901 = vmatmul.bf16.gmra.mxu0 %v2845
      %v2902 = vpop.f32.mrf.mxu0
      %v2903 = vadd.f32 0.0, %v2902
      %v2904 = vpop.f32.mrf.mxu0
      %v2905 = vadd.f32 0.0, %v2904
      %2906 = vmatmul.bf16.gmra.mxu0 %v2848
      %v2907 = vpop.f32.mrf.mxu0
      %v2908 = vadd.f32 0.0, %v2907
      %v2909 = vpop.f32.mrf.mxu0
      %v2910 = vadd.f32 0.0, %v2909
      %2911 = vmatmul.bf16.gmra.mxu0 %v2851
      %v2912 = vpop.f32.mrf.mxu0
      %v2913 = vadd.f32 0.0, %v2912
      %v2914 = vpop.f32.mrf.mxu0
      %v2915 = vadd.f32 0.0, %v2914
      %2916 = vdwg.mxu0
      %v2917 = vadd.f32 %v2743, %v2869
      %v2918 = vadd.f32 %v2744, %v2898
      %v2919 = vadd.f32 %v2745, %v2871
      %v2920 = vadd.f32 %v2746, %v2900
      %v2921 = vadd.f32 %v2747, %v2874
      %v2922 = vadd.f32 %v2748, %v2903
      %v2923 = vadd.f32 %v2749, %v2876
      %v2924 = vadd.f32 %v2750, %v2905
      %v2925 = vadd.f32 %v2751, %v2879
      %v2926 = vadd.f32 %v2752, %v2908
      %v2927 = vadd.f32 %v2753, %v2881
      %v2928 = vadd.f32 %v2754, %v2910
      %v2929 = vadd.f32 %v2755, %v2884
      %v2930 = vadd.f32 %v2756, %v2913
      %v2931 = vadd.f32 %v2757, %v2886
      %v2932 = vadd.f32 %v2758, %v2915
      %v2933 = vld [vmem:[%s812] sm:$0xf]
      %v2934 = vld [vmem:[%s812 + $0x4] sm:$0xf]
      %v2935 = vld [vmem:[%s812 + $0x8] sm:$0x1]
      %v2936 = vld [vmem:[%s812 + $0xc] sm:$0xf]
      %v2937 = vld [vmem:[%s812 + $0x10] sm:$0xf]
      %v2938 = vld [vmem:[%s812 + $0x14] sm:$0x1]
      %v2939 = vld [vmem:[%s812 + $0x18] sm:$0xf]
      %v2940 = vld [vmem:[%s812 + $0x1c] sm:$0xf]
      %v2941 = vld [vmem:[%s812 + $0x20] sm:$0x1]
      %v2942 = vld [vmem:[%s812 + $0x24] sm:$0xf]
      %v2943 = vld [vmem:[%s812 + $0x28] sm:$0xf]
      %v2944 = vld [vmem:[%s812 + $0x2c] sm:$0x1]
      %v2946 = vshrl.u32 %v2933, 16
      %v2948 = vrot.slane %v2946, 4
      %v2949 = vshll.u32 %v2933, 16
      %v2951 = vrot.slane %v2949, 5
      %v2952 = vor.u32 %v2948, %v2951
      %v2953 = vrot.slane %v2952, 4
      %v2955 = vshll.u32 %v2934, 16
      %v2957 = vrot.slane %v2955, 5
      %v2958 = vsel %vm224, %v2953, %v2957
      %v2959 = vshrl.u32 %v2934, 16
      %v2961 = vrot.slane %v2959, 4
      %v2962 = vor.u32 %v2961, %v2957
      %v2963 = vrot.slane %v2962, 4
      %v2965 = vshll.u32 %v2935, 16
      %v2967 = vrot.slane %v2965, 5
      %v2968 = vsel %vm224, %v2963, %v2967
      %v2970 = vshrl.u32 %v2936, 16
      %v2972 = vrot.slane %v2970, 4
      %v2973 = vshll.u32 %v2936, 16
      %v2975 = vrot.slane %v2973, 5
      %v2976 = vor.u32 %v2972, %v2975
      %v2977 = vrot.slane %v2976, 4
      %v2979 = vshll.u32 %v2937, 16
      %v2981 = vrot.slane %v2979, 5
      %v2982 = vsel %vm224, %v2977, %v2981
      %v2983 = vshrl.u32 %v2937, 16
      %v2985 = vrot.slane %v2983, 4
      %v2986 = vor.u32 %v2985, %v2981
      %v2987 = vrot.slane %v2986, 4
      %v2989 = vshll.u32 %v2938, 16
      %v2991 = vrot.slane %v2989, 5
      %v2992 = vsel %vm224, %v2987, %v2991
      %v2994 = vshrl.u32 %v2939, 16
      %v2996 = vrot.slane %v2994, 4
      %v2997 = vshll.u32 %v2939, 16
      %v2999 = vrot.slane %v2997, 5
      %v3000 = vor.u32 %v2996, %v2999
      %v3001 = vrot.slane %v3000, 4
      %v3003 = vshll.u32 %v2940, 16
      %v3005 = vrot.slane %v3003, 5
      %v3006 = vsel %vm224, %v3001, %v3005
      %v3007 = vshrl.u32 %v2940, 16
      %v3009 = vrot.slane %v3007, 4
      %v3010 = vor.u32 %v3009, %v3005
      %v3011 = vrot.slane %v3010, 4
      %v3013 = vshll.u32 %v2941, 16
      %v3015 = vrot.slane %v3013, 5
      %v3016 = vsel %vm224, %v3011, %v3015
      %v3018 = vshrl.u32 %v2942, 16
      %v3020 = vrot.slane %v3018, 4
      %v3021 = vshll.u32 %v2942, 16
      %v3023 = vrot.slane %v3021, 5
      %v3024 = vor.u32 %v3020, %v3023
      %v3025 = vrot.slane %v3024, 4
      %v3027 = vshll.u32 %v2943, 16
      %v3029 = vrot.slane %v3027, 5
      %v3030 = vsel %vm224, %v3025, %v3029
      %v3031 = vshrl.u32 %v2943, 16
      %v3033 = vrot.slane %v3031, 4
      %v3034 = vor.u32 %v3033, %v3029
      %v3035 = vrot.slane %v3034, 4
      %v3037 = vshll.u32 %v2944, 16
      %v3039 = vrot.slane %v3037, 5
      %v3040 = vsel %vm224, %v3035, %v3039
      %v3041 = vld [vmem:[%s1096 + $0x8] sm:$0xff]
      %v3042 = vld [vmem:[%s1096 + $0x18] sm:$0xff]
      %v3043 = vld [vmem:[%s1096 + $0x28] sm:$0xff]
      %v3044 = vld [vmem:[%s1096 + $0x38] sm:$0xff]
      %v3045 = vld [vmem:[%s1096 + $0x48] sm:$0xff]
      %v3046 = vld [vmem:[%s1096 + $0x58] sm:$0xff]
      %v3047 = vld [vmem:[%s1096 + $0x68] sm:$0xff]
      %v3048 = vld [vmem:[%s1096 + $0x78] sm:$0xff]
      %v3049 = vld [vmem:[%s1096 + $0x88] sm:$0xff]
      %v3050 = vunpack.c.l.b16 %v2958
      %v3051 = vunpack.c.l.b16 %v2968
      %v3052 = vunpack.c.l.b16 %v2982
      %v3053 = vunpack.c.l.b16 %v2992
      %v3054 = vunpack.c.l.b16 %v3006
      %v3055 = vunpack.c.l.b16 %v3016
      %v3056 = vunpack.c.l.b16 %v3030
      %v3057 = vunpack.c.l.b16 %v3040
      %v3058 = vpack.c.b16 %v3051, %v3050
      %v3059 = vpack.c.b16 %v3053, %v3052
      %v3060 = vpack.c.b16 %v3055, %v3054
      %v3061 = vpack.c.b16 %v3057, %v3056
      %v3071 = vunpack.c.l.b16 %v3041
      %v3072 = vunpack.c.h.b16 %v3041
      %v3073 = vunpack.c.l.b16 %v3042
      %v3074 = vunpack.c.h.b16 %v3042
      %v3075 = vunpack.c.l.b16 %v3043
      %v3076 = vunpack.c.h.b16 %v3043
      %v3077 = vunpack.c.l.b16 %v3044
      %v3078 = vunpack.c.h.b16 %v3044
      %v3079 = vunpack.c.l.b16 %v3045
      %v3080 = vunpack.c.h.b16 %v3045
      %v3081 = vunpack.c.l.b16 %v3046
      %v3082 = vunpack.c.h.b16 %v3046
      %v3083 = vunpack.c.l.b16 %v3047
      %v3084 = vunpack.c.h.b16 %v3047
      %v3085 = vunpack.c.l.b16 %v3048
      %v3086 = vunpack.c.h.b16 %v3048
      %v3087 = vunpack.c.l.b16 %v3049
      %v3088 = vunpack.c.h.b16 %v3049
      %v3089 = vpack.c.b16 %v3073, %v3071
      %v3090 = vpack.c.b16 %v3074, %v3072
      %v3091 = vpack.c.b16 %v3077, %v3075
      %v3092 = vpack.c.b16 %v3078, %v3076
      %v3093 = vpack.c.b16 %v3081, %v3079
      %v3094 = vpack.c.b16 %v3082, %v3080
      %v3095 = vpack.c.b16 %v3085, %v3083
      %v3096 = vpack.c.b16 %v3086, %v3084
      %v3097 = vpack.c.b16 %v3087, %v3087
      %v3098 = vpack.c.b16 %v3088, %v3088
      %v3108 = vsel %vm388, %v3058, 0
      %v3111 = vsel %vm388, %v3059, 0
      %v3114 = vsel %vm388, %v3060, 0
      %v3117 = vsel %vm388, %v3061, 0
      %v3120 = vsel %vm401, %v3097, 0
      %v3123 = vsel %vm401, %v3098, 0
      %3125 = vmatpush.bf16.msra.mxu0 0
      %3126 = vmatpush.bf16.msra.mxu0 0
      %3127 = vmatpush.bf16.msra.mxu0 0
      %3128 = vmatpush.bf16.msra.mxu0 %v3120
      %3129 = vmatpush.bf16.msra.mxu0 %v3095
      %3130 = vmatpush.bf16.msra.mxu0 %v3093
      %3131 = vmatpush.bf16.msra.mxu0 %v3091
      %3132 = vmatpush.bf16.msra.mxu0 %v3089
      %3133 = vmatmul.bf16.gmra.mxu0 %v3108
      %v3134 = vpop.f32.mrf.mxu0
      %v3135 = vadd.f32 0.0, %v3134
      %v3136 = vpop.f32.mrf.mxu0
      %v3137 = vadd.f32 0.0, %v3136
      %3138 = vmatmul.bf16.gmra.mxu0 %v3111
      %v3139 = vpop.f32.mrf.mxu0
      %v3140 = vadd.f32 0.0, %v3139
      %v3141 = vpop.f32.mrf.mxu0
      %v3142 = vadd.f32 0.0, %v3141
      %3143 = vmatmul.bf16.gmra.mxu0 %v3114
      %v3144 = vpop.f32.mrf.mxu0
      %v3145 = vadd.f32 0.0, %v3144
      %v3146 = vpop.f32.mrf.mxu0
      %v3147 = vadd.f32 0.0, %v3146
      %3148 = vmatmul.bf16.gmra.mxu0 %v3117
      %v3149 = vpop.f32.mrf.mxu0
      %v3150 = vadd.f32 0.0, %v3149
      %v3151 = vpop.f32.mrf.mxu0
      %v3152 = vadd.f32 0.0, %v3151
      %3153 = vdwg.mxu0
      %3154 = vmatpush.bf16.msra.mxu0 0
      %3155 = vmatpush.bf16.msra.mxu0 0
      %3156 = vmatpush.bf16.msra.mxu0 0
      %3157 = vmatpush.bf16.msra.mxu0 %v3123
      %3158 = vmatpush.bf16.msra.mxu0 %v3096
      %3159 = vmatpush.bf16.msra.mxu0 %v3094
      %3160 = vmatpush.bf16.msra.mxu0 %v3092
      %3161 = vmatpush.bf16.msra.mxu0 %v3090
      %3162 = vmatmul.bf16.gmra.mxu0 %v3108
      %v3163 = vpop.f32.mrf.mxu0
      %v3164 = vadd.f32 0.0, %v3163
      %v3165 = vpop.f32.mrf.mxu0
      %v3166 = vadd.f32 0.0, %v3165
      %3167 = vmatmul.bf16.gmra.mxu0 %v3111
      %v3168 = vpop.f32.mrf.mxu0
      %v3169 = vadd.f32 0.0, %v3168
      %v3170 = vpop.f32.mrf.mxu0
      %v3171 = vadd.f32 0.0, %v3170
      %3172 = vmatmul.bf16.gmra.mxu0 %v3114
      %v3173 = vpop.f32.mrf.mxu0
      %v3174 = vadd.f32 0.0, %v3173
      %v3175 = vpop.f32.mrf.mxu0
      %v3176 = vadd.f32 0.0, %v3175
      %3177 = vmatmul.bf16.gmra.mxu0 %v3117
      %v3178 = vpop.f32.mrf.mxu0
      %v3179 = vadd.f32 0.0, %v3178
      %v3180 = vpop.f32.mrf.mxu0
      %v3181 = vadd.f32 0.0, %v3180
      %3182 = vdwg.mxu0
      %v3183 = vadd.f32 %v2917, %v3135
      %v3184 = vadd.f32 %v2918, %v3164
      %v3185 = vadd.f32 %v2919, %v3137
      %v3186 = vadd.f32 %v2920, %v3166
      %v3187 = vadd.f32 %v2921, %v3140
      %v3188 = vadd.f32 %v2922, %v3169
      %v3189 = vadd.f32 %v2923, %v3142
      %v3190 = vadd.f32 %v2924, %v3171
      %v3191 = vadd.f32 %v2925, %v3145
      %v3192 = vadd.f32 %v2926, %v3174
      %v3193 = vadd.f32 %v2927, %v3147
      %v3194 = vadd.f32 %v2928, %v3176
      %v3195 = vadd.f32 %v2929, %v3150
      %v3196 = vadd.f32 %v2930, %v3179
      %v3197 = vadd.f32 %v2931, %v3152
      %v3198 = vadd.f32 %v2932, %v3181
      %v3199 = vld [vmem:[%s812] sm:$0xe]
      %v3200 = vld [vmem:[%s812 + $0xc] sm:$0xe]
      %v3201 = vld [vmem:[%s812 + $0x18] sm:$0xe]
      %v3202 = vld [vmem:[%s812 + $0x24] sm:$0xe]
      %v3215 = vrot.slane %v3199, 5
      %v3216 = vrot.slane %v3215, 4
      %v3217 = vrot.slane %v2934, 5
      %v3218 = vsel %vm621, %v3216, %v3217
      %v3219 = vrot.slane %v3217, 4
      %v3220 = vrot.slane %v2935, 5
      %v3221 = vsel %vm621, %v3219, %v3220
      %v3222 = vrot.slane %v3200, 5
      %v3223 = vrot.slane %v3222, 4
      %v3224 = vrot.slane %v2937, 5
      %v3225 = vsel %vm621, %v3223, %v3224
      %v3226 = vrot.slane %v3224, 4
      %v3227 = vrot.slane %v2938, 5
      %v3228 = vsel %vm621, %v3226, %v3227
      %v3229 = vrot.slane %v3201, 5
      %v3230 = vrot.slane %v3229, 4
      %v3231 = vrot.slane %v2940, 5
      %v3232 = vsel %vm621, %v3230, %v3231
      %v3233 = vrot.slane %v3231, 4
      %v3234 = vrot.slane %v2941, 5
      %v3235 = vsel %vm621, %v3233, %v3234
      %v3236 = vrot.slane %v3202, 5
      %v3237 = vrot.slane %v3236, 4
      %v3238 = vrot.slane %v2943, 5
      %v3239 = vsel %vm621, %v3237, %v3238
      %v3240 = vrot.slane %v3238, 4
      %v3241 = vrot.slane %v2944, 5
      %v3242 = vsel %vm621, %v3240, %v3241
      %v3243 = vld [vmem:[%s1299 + $0x8] sm:$0xff]
      %v3244 = vld [vmem:[%s1299 + $0x18] sm:$0xff]
      %v3245 = vld [vmem:[%s1299 + $0x28] sm:$0xff]
      %v3246 = vld [vmem:[%s1299 + $0x38] sm:$0xff]
      %v3247 = vld [vmem:[%s1299 + $0x48] sm:$0xff]
      %v3248 = vld [vmem:[%s1299 + $0x58] sm:$0xff]
      %v3249 = vld [vmem:[%s1299 + $0x68] sm:$0xff]
      %v3250 = vld [vmem:[%s1299 + $0x78] sm:$0xff]
      %v3251 = vld [vmem:[%s1299 + $0x88] sm:$0xff]
      %v3252 = vunpack.c.l.b16 %v3218
      %v3253 = vunpack.c.l.b16 %v3221
      %v3254 = vunpack.c.l.b16 %v3225
      %v3255 = vunpack.c.l.b16 %v3228
      %v3256 = vunpack.c.l.b16 %v3232
      %v3257 = vunpack.c.l.b16 %v3235
      %v3258 = vunpack.c.l.b16 %v3239
      %v3259 = vunpack.c.l.b16 %v3242
      %v3260 = vpack.c.b16 %v3253, %v3252
      %v3261 = vpack.c.b16 %v3255, %v3254
      %v3262 = vpack.c.b16 %v3257, %v3256
      %v3263 = vpack.c.b16 %v3259, %v3258
      %v3273 = vunpack.c.l.b16 %v3243
      %v3274 = vunpack.c.h.b16 %v3243
      %v3275 = vunpack.c.l.b16 %v3244
      %v3276 = vunpack.c.h.b16 %v3244
      %v3277 = vunpack.c.l.b16 %v3245
      %v3278 = vunpack.c.h.b16 %v3245
      %v3279 = vunpack.c.l.b16 %v3246
      %v3280 = vunpack.c.h.b16 %v3246
      %v3281 = vunpack.c.l.b16 %v3247
      %v3282 = vunpack.c.h.b16 %v3247
      %v3283 = vunpack.c.l.b16 %v3248
      %v3284 = vunpack.c.h.b16 %v3248
      %v3285 = vunpack.c.l.b16 %v3249
      %v3286 = vunpack.c.h.b16 %v3249
      %v3287 = vunpack.c.l.b16 %v3250
      %v3288 = vunpack.c.h.b16 %v3250
      %v3289 = vunpack.c.l.b16 %v3251
      %v3290 = vunpack.c.h.b16 %v3251
      %v3291 = vpack.c.b16 %v3275, %v3273
      %v3292 = vpack.c.b16 %v3276, %v3274
      %v3293 = vpack.c.b16 %v3279, %v3277
      %v3294 = vpack.c.b16 %v3280, %v3278
      %v3295 = vpack.c.b16 %v3283, %v3281
      %v3296 = vpack.c.b16 %v3284, %v3282
      %v3297 = vpack.c.b16 %v3287, %v3285
      %v3298 = vpack.c.b16 %v3288, %v3286
      %v3299 = vpack.c.b16 %v3289, %v3289
      %v3300 = vpack.c.b16 %v3290, %v3290
      %v3310 = vsel %vm388, %v3260, 0
      %v3313 = vsel %vm388, %v3261, 0
      %v3316 = vsel %vm388, %v3262, 0
      %v3319 = vsel %vm388, %v3263, 0
      %v3322 = vsel %vm401, %v3299, 0
      %v3325 = vsel %vm401, %v3300, 0
      %3327 = vmatpush.bf16.msra.mxu0 0
      %3328 = vmatpush.bf16.msra.mxu0 0
      %3329 = vmatpush.bf16.msra.mxu0 0
      %3330 = vmatpush.bf16.msra.mxu0 %v3322
      %3331 = vmatpush.bf16.msra.mxu0 %v3297
      %3332 = vmatpush.bf16.msra.mxu0 %v3295
      %3333 = vmatpush.bf16.msra.mxu0 %v3293
      %3334 = vmatpush.bf16.msra.mxu0 %v3291
      %3335 = vmatmul.bf16.gmra.mxu0 %v3310
      %v3336 = vpop.f32.mrf.mxu0
      %v3337 = vadd.f32 0.0, %v3336
      %v3338 = vpop.f32.mrf.mxu0
      %v3339 = vadd.f32 0.0, %v3338
      %3340 = vmatmul.bf16.gmra.mxu0 %v3313
      %v3341 = vpop.f32.mrf.mxu0
      %v3342 = vadd.f32 0.0, %v3341
      %v3343 = vpop.f32.mrf.mxu0
      %v3344 = vadd.f32 0.0, %v3343
      %3345 = vmatmul.bf16.gmra.mxu0 %v3316
      %v3346 = vpop.f32.mrf.mxu0
      %v3347 = vadd.f32 0.0, %v3346
      %v3348 = vpop.f32.mrf.mxu0
      %v3349 = vadd.f32 0.0, %v3348
      %3350 = vmatmul.bf16.gmra.mxu0 %v3319
      %v3351 = vpop.f32.mrf.mxu0
      %v3352 = vadd.f32 0.0, %v3351
      %v3353 = vpop.f32.mrf.mxu0
      %v3354 = vadd.f32 0.0, %v3353
      %3355 = vdwg.mxu0
      %3356 = vmatpush.bf16.msra.mxu0 0
      %3357 = vmatpush.bf16.msra.mxu0 0
      %3358 = vmatpush.bf16.msra.mxu0 0
      %3359 = vmatpush.bf16.msra.mxu0 %v3325
      %3360 = vmatpush.bf16.msra.mxu0 %v3298
      %3361 = vmatpush.bf16.msra.mxu0 %v3296
      %3362 = vmatpush.bf16.msra.mxu0 %v3294
      %3363 = vmatpush.bf16.msra.mxu0 %v3292
      %3364 = vmatmul.bf16.gmra.mxu0 %v3310
      %v3365 = vpop.f32.mrf.mxu0
      %v3366 = vadd.f32 0.0, %v3365
      %v3367 = vpop.f32.mrf.mxu0
      %v3368 = vadd.f32 0.0, %v3367
      %3369 = vmatmul.bf16.gmra.mxu0 %v3313
      %v3370 = vpop.f32.mrf.mxu0
      %v3371 = vadd.f32 0.0, %v3370
      %v3372 = vpop.f32.mrf.mxu0
      %v3373 = vadd.f32 0.0, %v3372
      %3374 = vmatmul.bf16.gmra.mxu0 %v3316
      %v3375 = vpop.f32.mrf.mxu0
      %v3376 = vadd.f32 0.0, %v3375
      %v3377 = vpop.f32.mrf.mxu0
      %v3378 = vadd.f32 0.0, %v3377
      %3379 = vmatmul.bf16.gmra.mxu0 %v3319
      %v3380 = vpop.f32.mrf.mxu0
      %v3381 = vadd.f32 0.0, %v3380
      %v3382 = vpop.f32.mrf.mxu0
      %v3383 = vadd.f32 0.0, %v3382
      %3384 = vdwg.mxu0
      %v3385 = vadd.f32 %v3183, %v3337
      %v3386 = vadd.f32 %v3184, %v3366
      %v3387 = vadd.f32 %v3185, %v3339
      %v3388 = vadd.f32 %v3186, %v3368
      %v3389 = vadd.f32 %v3187, %v3342
      %v3390 = vadd.f32 %v3188, %v3371
      %v3391 = vadd.f32 %v3189, %v3344
      %v3392 = vadd.f32 %v3190, %v3373
      %v3393 = vadd.f32 %v3191, %v3347
      %v3394 = vadd.f32 %v3192, %v3376
      %v3395 = vadd.f32 %v3193, %v3349
      %v3396 = vadd.f32 %v3194, %v3378
      %v3397 = vadd.f32 %v3195, %v3352
      %v3398 = vadd.f32 %v3196, %v3381
      %v3399 = vadd.f32 %v3197, %v3354
      %v3400 = vadd.f32 %v3198, %v3383
      %v3401 = vld [vmem:[%s1461] sm:$0xf]
      %v3402 = vld [vmem:[%s1461 + $0x4] sm:$0xf]
      %v3403 = vld [vmem:[%s1461 + $0xc] sm:$0xf]
      %v3404 = vld [vmem:[%s1461 + $0x10] sm:$0xf]
      %v3405 = vld [vmem:[%s1461 + $0x18] sm:$0xf]
      %v3406 = vld [vmem:[%s1461 + $0x1c] sm:$0xf]
      %v3407 = vld [vmem:[%s1461 + $0x24] sm:$0xf]
      %v3408 = vld [vmem:[%s1461 + $0x28] sm:$0xf]
      %v3409 = vld [vmem:[%s1470 + $0x8] sm:$0xff]
      %v3410 = vld [vmem:[%s1470 + $0x18] sm:$0xff]
      %v3411 = vld [vmem:[%s1470 + $0x28] sm:$0xff]
      %v3412 = vld [vmem:[%s1470 + $0x38] sm:$0xff]
      %v3413 = vld [vmem:[%s1470 + $0x48] sm:$0xff]
      %v3414 = vld [vmem:[%s1470 + $0x58] sm:$0xff]
      %v3415 = vld [vmem:[%s1470 + $0x68] sm:$0xff]
      %v3416 = vld [vmem:[%s1470 + $0x78] sm:$0xff]
      %v3417 = vld [vmem:[%s1470 + $0x88] sm:$0xff]
      %v3426 = vunpack.c.l.b16 %v3401
      %v3427 = vunpack.c.l.b16 %v3402
      %v3428 = vunpack.c.l.b16 %v3403
      %v3429 = vunpack.c.l.b16 %v3404
      %v3430 = vunpack.c.l.b16 %v3405
      %v3431 = vunpack.c.l.b16 %v3406
      %v3432 = vunpack.c.l.b16 %v3407
      %v3433 = vunpack.c.l.b16 %v3408
      %v3434 = vpack.c.b16 %v3427, %v3426
      %v3435 = vpack.c.b16 %v3429, %v3428
      %v3436 = vpack.c.b16 %v3431, %v3430
      %v3437 = vpack.c.b16 %v3433, %v3432
      %v3447 = vunpack.c.l.b16 %v3409
      %v3448 = vunpack.c.h.b16 %v3409
      %v3449 = vunpack.c.l.b16 %v3410
      %v3450 = vunpack.c.h.b16 %v3410
      %v3451 = vunpack.c.l.b16 %v3411
      %v3452 = vunpack.c.h.b16 %v3411
      %v3453 = vunpack.c.l.b16 %v3412
      %v3454 = vunpack.c.h.b16 %v3412
      %v3455 = vunpack.c.l.b16 %v3413
      %v3456 = vunpack.c.h.b16 %v3413
      %v3457 = vunpack.c.l.b16 %v3414
      %v3458 = vunpack.c.h.b16 %v3414
      %v3459 = vunpack.c.l.b16 %v3415
      %v3460 = vunpack.c.h.b16 %v3415
      %v3461 = vunpack.c.l.b16 %v3416
      %v3462 = vunpack.c.h.b16 %v3416
      %v3463 = vunpack.c.l.b16 %v3417
      %v3464 = vunpack.c.h.b16 %v3417
      %v3465 = vpack.c.b16 %v3449, %v3447
      %v3466 = vpack.c.b16 %v3450, %v3448
      %v3467 = vpack.c.b16 %v3453, %v3451
      %v3468 = vpack.c.b16 %v3454, %v3452
      %v3469 = vpack.c.b16 %v3457, %v3455
      %v3470 = vpack.c.b16 %v3458, %v3456
      %v3471 = vpack.c.b16 %v3461, %v3459
      %v3472 = vpack.c.b16 %v3462, %v3460
      %v3473 = vpack.c.b16 %v3463, %v3463
      %v3474 = vpack.c.b16 %v3464, %v3464
      %v3484 = vsel %vm388, %v3434, 0
      %v3487 = vsel %vm388, %v3435, 0
      %v3490 = vsel %vm388, %v3436, 0
      %v3493 = vsel %vm388, %v3437, 0
      %v3496 = vsel %vm401, %v3473, 0
      %v3499 = vsel %vm401, %v3474, 0
      %3501 = vmatpush.bf16.msra.mxu0 0
      %3502 = vmatpush.bf16.msra.mxu0 0
      %3503 = vmatpush.bf16.msra.mxu0 0
      %3504 = vmatpush.bf16.msra.mxu0 %v3496
      %3505 = vmatpush.bf16.msra.mxu0 %v3471
      %3506 = vmatpush.bf16.msra.mxu0 %v3469
      %3507 = vmatpush.bf16.msra.mxu0 %v3467
      %3508 = vmatpush.bf16.msra.mxu0 %v3465
      %3509 = vmatmul.bf16.gmra.mxu0 %v3484
      %v3510 = vpop.f32.mrf.mxu0
      %v3511 = vadd.f32 0.0, %v3510
      %v3512 = vpop.f32.mrf.mxu0
      %v3513 = vadd.f32 0.0, %v3512
      %3514 = vmatmul.bf16.gmra.mxu0 %v3487
      %v3515 = vpop.f32.mrf.mxu0
      %v3516 = vadd.f32 0.0, %v3515
      %v3517 = vpop.f32.mrf.mxu0
      %v3518 = vadd.f32 0.0, %v3517
      %3519 = vmatmul.bf16.gmra.mxu0 %v3490
      %v3520 = vpop.f32.mrf.mxu0
      %v3521 = vadd.f32 0.0, %v3520
      %v3522 = vpop.f32.mrf.mxu0
      %v3523 = vadd.f32 0.0, %v3522
      %3524 = vmatmul.bf16.gmra.mxu0 %v3493
      %v3525 = vpop.f32.mrf.mxu0
      %v3526 = vadd.f32 0.0, %v3525
      %v3527 = vpop.f32.mrf.mxu0
      %v3528 = vadd.f32 0.0, %v3527
      %3529 = vdwg.mxu0
      %3530 = vmatpush.bf16.msra.mxu0 0
      %3531 = vmatpush.bf16.msra.mxu0 0
      %3532 = vmatpush.bf16.msra.mxu0 0
      %3533 = vmatpush.bf16.msra.mxu0 %v3499
      %3534 = vmatpush.bf16.msra.mxu0 %v3472
      %3535 = vmatpush.bf16.msra.mxu0 %v3470
      %3536 = vmatpush.bf16.msra.mxu0 %v3468
      %3537 = vmatpush.bf16.msra.mxu0 %v3466
      %3538 = vmatmul.bf16.gmra.mxu0 %v3484
      %v3539 = vpop.f32.mrf.mxu0
      %v3540 = vadd.f32 0.0, %v3539
      %v3541 = vpop.f32.mrf.mxu0
      %v3542 = vadd.f32 0.0, %v3541
      %3543 = vmatmul.bf16.gmra.mxu0 %v3487
      %v3544 = vpop.f32.mrf.mxu0
      %v3545 = vadd.f32 0.0, %v3544
      %v3546 = vpop.f32.mrf.mxu0
      %v3547 = vadd.f32 0.0, %v3546
      %3548 = vmatmul.bf16.gmra.mxu0 %v3490
      %v3549 = vpop.f32.mrf.mxu0
      %v3550 = vadd.f32 0.0, %v3549
      %v3551 = vpop.f32.mrf.mxu0
      %v3552 = vadd.f32 0.0, %v3551
      %3553 = vmatmul.bf16.gmra.mxu0 %v3493
      %v3554 = vpop.f32.mrf.mxu0
      %v3555 = vadd.f32 0.0, %v3554
      %v3556 = vpop.f32.mrf.mxu0
      %v3557 = vadd.f32 0.0, %v3556
      %3558 = vdwg.mxu0
      %v3559 = vadd.f32 %v3385, %v3511
      %v3560 = vadd.f32 %v3386, %v3540
      %v3561 = vadd.f32 %v3387, %v3513
      %v3562 = vadd.f32 %v3388, %v3542
      %v3563 = vadd.f32 %v3389, %v3516
      %v3564 = vadd.f32 %v3390, %v3545
      %v3565 = vadd.f32 %v3391, %v3518
      %v3566 = vadd.f32 %v3392, %v3547
      %v3567 = vadd.f32 %v3393, %v3521
      %v3568 = vadd.f32 %v3394, %v3550
      %v3569 = vadd.f32 %v3395, %v3523
      %v3570 = vadd.f32 %v3396, %v3552
      %v3571 = vadd.f32 %v3397, %v3526
      %v3572 = vadd.f32 %v3398, %v3555
      %v3573 = vadd.f32 %v3399, %v3528
      %v3574 = vadd.f32 %v3400, %v3557
      %v3575 = vld [vmem:[%s1461] sm:$0xf]
      %v3576 = vld [vmem:[%s1461 + $0x4] sm:$0xf]
      %v3577 = vld [vmem:[%s1461 + $0x8] sm:$0x1]
      %v3578 = vld [vmem:[%s1461 + $0xc] sm:$0xf]
      %v3579 = vld [vmem:[%s1461 + $0x10] sm:$0xf]
      %v3580 = vld [vmem:[%s1461 + $0x14] sm:$0x1]
      %v3581 = vld [vmem:[%s1461 + $0x18] sm:$0xf]
      %v3582 = vld [vmem:[%s1461 + $0x1c] sm:$0xf]
      %v3583 = vld [vmem:[%s1461 + $0x20] sm:$0x1]
      %v3584 = vld [vmem:[%s1461 + $0x24] sm:$0xf]
      %v3585 = vld [vmem:[%s1461 + $0x28] sm:$0xf]
      %v3586 = vld [vmem:[%s1461 + $0x2c] sm:$0x1]
      %v3588 = vshrl.u32 %v3575, 16
      %v3590 = vrot.slane %v3588, 4
      %v3591 = vshll.u32 %v3575, 16
      %v3593 = vrot.slane %v3591, 5
      %v3594 = vor.u32 %v3590, %v3593
      %v3595 = vrot.slane %v3594, 4
      %v3597 = vshll.u32 %v3576, 16
      %v3599 = vrot.slane %v3597, 5
      %v3600 = vsel %vm224, %v3595, %v3599
      %v3601 = vshrl.u32 %v3576, 16
      %v3603 = vrot.slane %v3601, 4
      %v3604 = vor.u32 %v3603, %v3599
      %v3605 = vrot.slane %v3604, 4
      %v3607 = vshll.u32 %v3577, 16
      %v3609 = vrot.slane %v3607, 5
      %v3610 = vsel %vm224, %v3605, %v3609
      %v3612 = vshrl.u32 %v3578, 16
      %v3614 = vrot.slane %v3612, 4
      %v3615 = vshll.u32 %v3578, 16
      %v3617 = vrot.slane %v3615, 5
      %v3618 = vor.u32 %v3614, %v3617
      %v3619 = vrot.slane %v3618, 4
      %v3621 = vshll.u32 %v3579, 16
      %v3623 = vrot.slane %v3621, 5
      %v3624 = vsel %vm224, %v3619, %v3623
      %v3625 = vshrl.u32 %v3579, 16
      %v3627 = vrot.slane %v3625, 4
      %v3628 = vor.u32 %v3627, %v3623
      %v3629 = vrot.slane %v3628, 4
      %v3631 = vshll.u32 %v3580, 16
      %v3633 = vrot.slane %v3631, 5
      %v3634 = vsel %vm224, %v3629, %v3633
      %v3636 = vshrl.u32 %v3581, 16
      %v3638 = vrot.slane %v3636, 4
      %v3639 = vshll.u32 %v3581, 16
      %v3641 = vrot.slane %v3639, 5
      %v3642 = vor.u32 %v3638, %v3641
      %v3643 = vrot.slane %v3642, 4
      %v3645 = vshll.u32 %v3582, 16
      %v3647 = vrot.slane %v3645, 5
      %v3648 = vsel %vm224, %v3643, %v3647
      %v3649 = vshrl.u32 %v3582, 16
      %v3651 = vrot.slane %v3649, 4
      %v3652 = vor.u32 %v3651, %v3647
      %v3653 = vrot.slane %v3652, 4
      %v3655 = vshll.u32 %v3583, 16
      %v3657 = vrot.slane %v3655, 5
      %v3658 = vsel %vm224, %v3653, %v3657
      %v3660 = vshrl.u32 %v3584, 16
      %v3662 = vrot.slane %v3660, 4
      %v3663 = vshll.u32 %v3584, 16
      %v3665 = vrot.slane %v3663, 5
      %v3666 = vor.u32 %v3662, %v3665
      %v3667 = vrot.slane %v3666, 4
      %v3669 = vshll.u32 %v3585, 16
      %v3671 = vrot.slane %v3669, 5
      %v3672 = vsel %vm224, %v3667, %v3671
      %v3673 = vshrl.u32 %v3585, 16
      %v3675 = vrot.slane %v3673, 4
      %v3676 = vor.u32 %v3675, %v3671
      %v3677 = vrot.slane %v3676, 4
      %v3679 = vshll.u32 %v3586, 16
      %v3681 = vrot.slane %v3679, 5
      %v3682 = vsel %vm224, %v3677, %v3681
      %v3683 = vld [vmem:[%s1745 + $0x8] sm:$0xff]
      %v3684 = vld [vmem:[%s1745 + $0x18] sm:$0xff]
      %v3685 = vld [vmem:[%s1745 + $0x28] sm:$0xff]
      %v3686 = vld [vmem:[%s1745 + $0x38] sm:$0xff]
      %v3687 = vld [vmem:[%s1745 + $0x48] sm:$0xff]
      %v3688 = vld [vmem:[%s1745 + $0x58] sm:$0xff]
      %v3689 = vld [vmem:[%s1745 + $0x68] sm:$0xff]
      %v3690 = vld [vmem:[%s1745 + $0x78] sm:$0xff]
      %v3691 = vld [vmem:[%s1745 + $0x88] sm:$0xff]
      %v3692 = vunpack.c.l.b16 %v3600
      %v3693 = vunpack.c.l.b16 %v3610
      %v3694 = vunpack.c.l.b16 %v3624
      %v3695 = vunpack.c.l.b16 %v3634
      %v3696 = vunpack.c.l.b16 %v3648
      %v3697 = vunpack.c.l.b16 %v3658
      %v3698 = vunpack.c.l.b16 %v3672
      %v3699 = vunpack.c.l.b16 %v3682
      %v3700 = vpack.c.b16 %v3693, %v3692
      %v3701 = vpack.c.b16 %v3695, %v3694
      %v3702 = vpack.c.b16 %v3697, %v3696
      %v3703 = vpack.c.b16 %v3699, %v3698
      %v3713 = vunpack.c.l.b16 %v3683
      %v3714 = vunpack.c.h.b16 %v3683
      %v3715 = vunpack.c.l.b16 %v3684
      %v3716 = vunpack.c.h.b16 %v3684
      %v3717 = vunpack.c.l.b16 %v3685
      %v3718 = vunpack.c.h.b16 %v3685
      %v3719 = vunpack.c.l.b16 %v3686
      %v3720 = vunpack.c.h.b16 %v3686
      %v3721 = vunpack.c.l.b16 %v3687
      %v3722 = vunpack.c.h.b16 %v3687
      %v3723 = vunpack.c.l.b16 %v3688
      %v3724 = vunpack.c.h.b16 %v3688
      %v3725 = vunpack.c.l.b16 %v3689
      %v3726 = vunpack.c.h.b16 %v3689
      %v3727 = vunpack.c.l.b16 %v3690
      %v3728 = vunpack.c.h.b16 %v3690
      %v3729 = vunpack.c.l.b16 %v3691
      %v3730 = vunpack.c.h.b16 %v3691
      %v3731 = vpack.c.b16 %v3715, %v3713
      %v3732 = vpack.c.b16 %v3716, %v3714
      %v3733 = vpack.c.b16 %v3719, %v3717
      %v3734 = vpack.c.b16 %v3720, %v3718
      %v3735 = vpack.c.b16 %v3723, %v3721
      %v3736 = vpack.c.b16 %v3724, %v3722
      %v3737 = vpack.c.b16 %v3727, %v3725
      %v3738 = vpack.c.b16 %v3728, %v3726
      %v3739 = vpack.c.b16 %v3729, %v3729
      %v3740 = vpack.c.b16 %v3730, %v3730
      %v3750 = vsel %vm388, %v3700, 0
      %v3753 = vsel %vm388, %v3701, 0
      %v3756 = vsel %vm388, %v3702, 0
      %v3759 = vsel %vm388, %v3703, 0
      %v3762 = vsel %vm401, %v3739, 0
      %v3765 = vsel %vm401, %v3740, 0
      %3767 = vmatpush.bf16.msra.mxu0 0
      %3768 = vmatpush.bf16.msra.mxu0 0
      %3769 = vmatpush.bf16.msra.mxu0 0
      %3770 = vmatpush.bf16.msra.mxu0 %v3762
      %3771 = vmatpush.bf16.msra.mxu0 %v3737
      %3772 = vmatpush.bf16.msra.mxu0 %v3735
      %3773 = vmatpush.bf16.msra.mxu0 %v3733
      %3774 = vmatpush.bf16.msra.mxu0 %v3731
      %3775 = vmatmul.bf16.gmra.mxu0 %v3750
      %v3776 = vpop.f32.mrf.mxu0
      %v3777 = vadd.f32 0.0, %v3776
      %v3778 = vpop.f32.mrf.mxu0
      %v3779 = vadd.f32 0.0, %v3778
      %3780 = vmatmul.bf16.gmra.mxu0 %v3753
      %v3781 = vpop.f32.mrf.mxu0
      %v3782 = vadd.f32 0.0, %v3781
      %v3783 = vpop.f32.mrf.mxu0
      %v3784 = vadd.f32 0.0, %v3783
      %3785 = vmatmul.bf16.gmra.mxu0 %v3756
      %v3786 = vpop.f32.mrf.mxu0
      %v3787 = vadd.f32 0.0, %v3786
      %v3788 = vpop.f32.mrf.mxu0
      %v3789 = vadd.f32 0.0, %v3788
      %3790 = vmatmul.bf16.gmra.mxu0 %v3759
      %v3791 = vpop.f32.mrf.mxu0
      %v3792 = vadd.f32 0.0, %v3791
      %v3793 = vpop.f32.mrf.mxu0
      %v3794 = vadd.f32 0.0, %v3793
      %3795 = vdwg.mxu0
      %3796 = vmatpush.bf16.msra.mxu0 0
      %3797 = vmatpush.bf16.msra.mxu0 0
      %3798 = vmatpush.bf16.msra.mxu0 0
      %3799 = vmatpush.bf16.msra.mxu0 %v3765
      %3800 = vmatpush.bf16.msra.mxu0 %v3738
      %3801 = vmatpush.bf16.msra.mxu0 %v3736
      %3802 = vmatpush.bf16.msra.mxu0 %v3734
      %3803 = vmatpush.bf16.msra.mxu0 %v3732
      %3804 = vmatmul.bf16.gmra.mxu0 %v3750
      %v3805 = vpop.f32.mrf.mxu0
      %v3806 = vadd.f32 0.0, %v3805
      %v3807 = vpop.f32.mrf.mxu0
      %v3808 = vadd.f32 0.0, %v3807
      %3809 = vmatmul.bf16.gmra.mxu0 %v3753
      %v3810 = vpop.f32.mrf.mxu0
      %v3811 = vadd.f32 0.0, %v3810
      %v3812 = vpop.f32.mrf.mxu0
      %v3813 = vadd.f32 0.0, %v3812
      %3814 = vmatmul.bf16.gmra.mxu0 %v3756
      %v3815 = vpop.f32.mrf.mxu0
      %v3816 = vadd.f32 0.0, %v3815
      %v3817 = vpop.f32.mrf.mxu0
      %v3818 = vadd.f32 0.0, %v3817
      %3819 = vmatmul.bf16.gmra.mxu0 %v3759
      %v3820 = vpop.f32.mrf.mxu0
      %v3821 = vadd.f32 0.0, %v3820
      %v3822 = vpop.f32.mrf.mxu0
      %v3823 = vadd.f32 0.0, %v3822
      %3824 = vdwg.mxu0
      %v3825 = vadd.f32 %v3559, %v3777
      %v3826 = vadd.f32 %v3560, %v3806
      %v3827 = vadd.f32 %v3561, %v3779
      %v3828 = vadd.f32 %v3562, %v3808
      %v3829 = vadd.f32 %v3563, %v3782
      %v3830 = vadd.f32 %v3564, %v3811
      %v3831 = vadd.f32 %v3565, %v3784
      %v3832 = vadd.f32 %v3566, %v3813
      %v3833 = vadd.f32 %v3567, %v3787
      %v3834 = vadd.f32 %v3568, %v3816
      %v3835 = vadd.f32 %v3569, %v3789
      %v3836 = vadd.f32 %v3570, %v3818
      %v3837 = vadd.f32 %v3571, %v3792
      %v3838 = vadd.f32 %v3572, %v3821
      %v3839 = vadd.f32 %v3573, %v3794
      %v3840 = vadd.f32 %v3574, %v3823
      %v3841 = vld [vmem:[%s1461] sm:$0xe]
      %v3842 = vld [vmem:[%s1461 + $0xc] sm:$0xe]
      %v3843 = vld [vmem:[%s1461 + $0x18] sm:$0xe]
      %v3844 = vld [vmem:[%s1461 + $0x24] sm:$0xe]
      %v3857 = vrot.slane %v3841, 5
      %v3858 = vrot.slane %v3857, 4
      %v3859 = vrot.slane %v3576, 5
      %v3860 = vsel %vm621, %v3858, %v3859
      %v3861 = vrot.slane %v3859, 4
      %v3862 = vrot.slane %v3577, 5
      %v3863 = vsel %vm621, %v3861, %v3862
      %v3864 = vrot.slane %v3842, 5
      %v3865 = vrot.slane %v3864, 4
      %v3866 = vrot.slane %v3579, 5
      %v3867 = vsel %vm621, %v3865, %v3866
      %v3868 = vrot.slane %v3866, 4
      %v3869 = vrot.slane %v3580, 5
      %v3870 = vsel %vm621, %v3868, %v3869
      %v3871 = vrot.slane %v3843, 5
      %v3872 = vrot.slane %v3871, 4
      %v3873 = vrot.slane %v3582, 5
      %v3874 = vsel %vm621, %v3872, %v3873
      %v3875 = vrot.slane %v3873, 4
      %v3876 = vrot.slane %v3583, 5
      %v3877 = vsel %vm621, %v3875, %v3876
      %v3878 = vrot.slane %v3844, 5
      %v3879 = vrot.slane %v3878, 4
      %v3880 = vrot.slane %v3585, 5
      %v3881 = vsel %vm621, %v3879, %v3880
      %v3882 = vrot.slane %v3880, 4
      %v3883 = vrot.slane %v3586, 5
      %v3884 = vsel %vm621, %v3882, %v3883
      %v3885 = vld [vmem:[%s1948 + $0x8] sm:$0xff]
      %v3886 = vld [vmem:[%s1948 + $0x18] sm:$0xff]
      %v3887 = vld [vmem:[%s1948 + $0x28] sm:$0xff]
      %v3888 = vld [vmem:[%s1948 + $0x38] sm:$0xff]
      %v3889 = vld [vmem:[%s1948 + $0x48] sm:$0xff]
      %v3890 = vld [vmem:[%s1948 + $0x58] sm:$0xff]
      %v3891 = vld [vmem:[%s1948 + $0x68] sm:$0xff]
      %v3892 = vld [vmem:[%s1948 + $0x78] sm:$0xff]
      %v3893 = vld [vmem:[%s1948 + $0x88] sm:$0xff]
      %v3894 = vunpack.c.l.b16 %v3860
      %v3895 = vunpack.c.l.b16 %v3863
      %v3896 = vunpack.c.l.b16 %v3867
      %v3897 = vunpack.c.l.b16 %v3870
      %v3898 = vunpack.c.l.b16 %v3874
      %v3899 = vunpack.c.l.b16 %v3877
      %v3900 = vunpack.c.l.b16 %v3881
      %v3901 = vunpack.c.l.b16 %v3884
      %v3902 = vpack.c.b16 %v3895, %v3894
      %v3903 = vpack.c.b16 %v3897, %v3896
      %v3904 = vpack.c.b16 %v3899, %v3898
      %v3905 = vpack.c.b16 %v3901, %v3900
      %v3915 = vunpack.c.l.b16 %v3885
      %v3916 = vunpack.c.h.b16 %v3885
      %v3917 = vunpack.c.l.b16 %v3886
      %v3918 = vunpack.c.h.b16 %v3886
      %v3919 = vunpack.c.l.b16 %v3887
      %v3920 = vunpack.c.h.b16 %v3887
      %v3921 = vunpack.c.l.b16 %v3888
      %v3922 = vunpack.c.h.b16 %v3888
      %v3923 = vunpack.c.l.b16 %v3889
      %v3924 = vunpack.c.h.b16 %v3889
      %v3925 = vunpack.c.l.b16 %v3890
      %v3926 = vunpack.c.h.b16 %v3890
      %v3927 = vunpack.c.l.b16 %v3891
      %v3928 = vunpack.c.h.b16 %v3891
      %v3929 = vunpack.c.l.b16 %v3892
      %v3930 = vunpack.c.h.b16 %v3892
      %v3931 = vunpack.c.l.b16 %v3893
      %v3932 = vunpack.c.h.b16 %v3893
      %v3933 = vpack.c.b16 %v3917, %v3915
      %v3934 = vpack.c.b16 %v3918, %v3916
      %v3935 = vpack.c.b16 %v3921, %v3919
      %v3936 = vpack.c.b16 %v3922, %v3920
      %v3937 = vpack.c.b16 %v3925, %v3923
      %v3938 = vpack.c.b16 %v3926, %v3924
      %v3939 = vpack.c.b16 %v3929, %v3927
      %v3940 = vpack.c.b16 %v3930, %v3928
      %v3941 = vpack.c.b16 %v3931, %v3931
      %v3942 = vpack.c.b16 %v3932, %v3932
      %v3952 = vsel %vm388, %v3902, 0
      %v3955 = vsel %vm388, %v3903, 0
      %v3958 = vsel %vm388, %v3904, 0
      %v3961 = vsel %vm388, %v3905, 0
      %v3964 = vsel %vm401, %v3941, 0
      %v3967 = vsel %vm401, %v3942, 0
      %3969 = vmatpush.bf16.msra.mxu0 0
      %3970 = vmatpush.bf16.msra.mxu0 0
      %3971 = vmatpush.bf16.msra.mxu0 0
      %3972 = vmatpush.bf16.msra.mxu0 %v3964
      %3973 = vmatpush.bf16.msra.mxu0 %v3939
      %3974 = vmatpush.bf16.msra.mxu0 %v3937
      %3975 = vmatpush.bf16.msra.mxu0 %v3935
      %3976 = vmatpush.bf16.msra.mxu0 %v3933
      %3977 = vmatmul.bf16.gmra.mxu0 %v3952
      %v3978 = vpop.f32.mrf.mxu0
      %v3979 = vadd.f32 0.0, %v3978
      %v3980 = vpop.f32.mrf.mxu0
      %v3981 = vadd.f32 0.0, %v3980
      %3982 = vmatmul.bf16.gmra.mxu0 %v3955
      %v3983 = vpop.f32.mrf.mxu0
      %v3984 = vadd.f32 0.0, %v3983
      %v3985 = vpop.f32.mrf.mxu0
      %v3986 = vadd.f32 0.0, %v3985
      %3987 = vmatmul.bf16.gmra.mxu0 %v3958
      %v3988 = vpop.f32.mrf.mxu0
      %v3989 = vadd.f32 0.0, %v3988
      %v3990 = vpop.f32.mrf.mxu0
      %v3991 = vadd.f32 0.0, %v3990
      %3992 = vmatmul.bf16.gmra.mxu0 %v3961
      %v3993 = vpop.f32.mrf.mxu0
      %v3994 = vadd.f32 0.0, %v3993
      %v3995 = vpop.f32.mrf.mxu0
      %v3996 = vadd.f32 0.0, %v3995
      %3997 = vdwg.mxu0
      %3998 = vmatpush.bf16.msra.mxu0 0
      %3999 = vmatpush.bf16.msra.mxu0 0
      %4000 = vmatpush.bf16.msra.mxu0 0
      %4001 = vmatpush.bf16.msra.mxu0 %v3967
      %4002 = vmatpush.bf16.msra.mxu0 %v3940
      %4003 = vmatpush.bf16.msra.mxu0 %v3938
      %4004 = vmatpush.bf16.msra.mxu0 %v3936
      %4005 = vmatpush.bf16.msra.mxu0 %v3934
      %4006 = vmatmul.bf16.gmra.mxu0 %v3952
      %v4007 = vpop.f32.mrf.mxu0
      %v4008 = vadd.f32 0.0, %v4007
      %v4009 = vpop.f32.mrf.mxu0
      %v4010 = vadd.f32 0.0, %v4009
      %4011 = vmatmul.bf16.gmra.mxu0 %v3955
      %v4012 = vpop.f32.mrf.mxu0
      %v4013 = vadd.f32 0.0, %v4012
      %v4014 = vpop.f32.mrf.mxu0
      %v4015 = vadd.f32 0.0, %v4014
      %4016 = vmatmul.bf16.gmra.mxu0 %v3958
      %v4017 = vpop.f32.mrf.mxu0
      %v4018 = vadd.f32 0.0, %v4017
      %v4019 = vpop.f32.mrf.mxu0
      %v4020 = vadd.f32 0.0, %v4019
      %4021 = vmatmul.bf16.gmra.mxu0 %v3961
      %v4022 = vpop.f32.mrf.mxu0
      %v4023 = vadd.f32 0.0, %v4022
      %v4024 = vpop.f32.mrf.mxu0
      %v4025 = vadd.f32 0.0, %v4024
      %4026 = vdwg.mxu0
      %v4027 = vadd.f32 %v3825, %v3979
      %v4028 = vadd.f32 %v3826, %v4008
      %v4029 = vadd.f32 %v3827, %v3981
      %v4030 = vadd.f32 %v3828, %v4010
      %v4031 = vadd.f32 %v3829, %v3984
      %v4032 = vadd.f32 %v3830, %v4013
      %v4033 = vadd.f32 %v3831, %v3986
      %v4034 = vadd.f32 %v3832, %v4015
      %v4035 = vadd.f32 %v3833, %v3989
      %v4036 = vadd.f32 %v3834, %v4018
      %v4037 = vadd.f32 %v3835, %v3991
      %v4038 = vadd.f32 %v3836, %v4020
      %v4039 = vadd.f32 %v3837, %v3994
      %v4040 = vadd.f32 %v3838, %v4023
      %v4041 = vadd.f32 %v3839, %v3996
      %v4042 = vadd.f32 %v3840, %v4025
      %v4043 = vld [vmem:[%s2 + $0x2] sm:$0x3]
      %v4045 = vperm.slane %v4043, 0
      %v4046 = vperm.slane %v4043, 1
      %v4049 = vadd.f32 %v4027, %v4045
      %v4050 = vadd.f32 %v4028, %v4046
      %v4051 = vadd.f32 %v4029, %v4045
      %v4052 = vadd.f32 %v4030, %v4046
      %v4053 = vadd.f32 %v4031, %v4045
      %v4054 = vadd.f32 %v4032, %v4046
      %v4055 = vadd.f32 %v4033, %v4045
      %v4056 = vadd.f32 %v4034, %v4046
      %v4057 = vadd.f32 %v4035, %v4045
      %v4058 = vadd.f32 %v4036, %v4046
      %v4059 = vadd.f32 %v4037, %v4045
      %v4060 = vadd.f32 %v4038, %v4046
      %v4061 = vadd.f32 %v4039, %v4045
      %v4062 = vadd.f32 %v4040, %v4046
      %v4063 = vadd.f32 %v4041, %v4045
      %v4064 = vadd.f32 %v4042, %v4046
      %v4065 = vmax.f32 %v4049, 0.0
      %v4066 = vmax.f32 %v4050, 0.0
      %v4067 = vmax.f32 %v4051, 0.0
      %v4068 = vmax.f32 %v4052, 0.0
      %v4069 = vmax.f32 %v4053, 0.0
      %v4070 = vmax.f32 %v4054, 0.0
      %v4071 = vmax.f32 %v4055, 0.0
      %v4072 = vmax.f32 %v4056, 0.0
      %v4073 = vmax.f32 %v4057, 0.0
      %v4074 = vmax.f32 %v4058, 0.0
      %v4075 = vmax.f32 %v4059, 0.0
      %v4076 = vmax.f32 %v4060, 0.0
      %v4077 = vmax.f32 %v4061, 0.0
      %v4078 = vmax.f32 %v4062, 0.0
      %v4079 = vmax.f32 %v4063, 0.0
      %v4080 = vmax.f32 %v4064, 0.0
      %4081 = vst [vmem:[%s194 + $0x10] sm:$0xff] %v4065
      %4082 = vst [vmem:[%s194 + $0x18] sm:$0xff] %v4066
      %4083 = vst [vmem:[%s194 + $0x30] sm:$0xff] %v4067
      %4084 = vst [vmem:[%s194 + $0x38] sm:$0xff] %v4068
      %4085 = vst [vmem:[%s194 + $0x50] sm:$0xff] %v4069
      %4086 = vst [vmem:[%s194 + $0x58] sm:$0xff] %v4070
      %4087 = vst [vmem:[%s194 + $0x70] sm:$0xff] %v4071
      %4088 = vst [vmem:[%s194 + $0x78] sm:$0xff] %v4072
      %4089 = vst [vmem:[%s194 + $0x90] sm:$0xff] %v4073
      %4090 = vst [vmem:[%s194 + $0x98] sm:$0xff] %v4074
      %4091 = vst [vmem:[%s194 + $0xb0] sm:$0xff] %v4075
      %4092 = vst [vmem:[%s194 + $0xb8] sm:$0xff] %v4076
      %4093 = vst [vmem:[%s194 + $0xd0] sm:$0xff] %v4077
      %4094 = vst [vmem:[%s194 + $0xd8] sm:$0xff] %v4078
      %4095 = vst [vmem:[%s194 + $0xf0] sm:$0xff] %v4079
      %4096 = vst [vmem:[%s194 + $0xf8] sm:$0xff] %v4080
      %s4097 = smul.u32 8, %s19
      %p4098 = scmp.lt.s32.totalorder %s18, 1
      %s4099 = scalar_select %p4098, %s18, 1
      %p4100 = scmp.lt.s32.totalorder %s4097, 31
      %s4101 = scalar_select %p4100, %s4097, 31
      %s4102 = smul.addr %s4101, 4
      %s4103 = smul.addr %s4099, 128
      %s4104 = sadd.s32 %s4102, %s4103
      %s4105 = smul.addr %s4104, 8
      %s4106 = scalar_lea.vmem %s3, %s4105
      // Predicated region
      $region33: #{basic3x3_forward.1} parent=31 // pred_check
        %p4107 = pneg %p114
      $region34: #{basic3x3_forward.1} parent=31 // pred_check_branch
        %4109 = sbr.rel (%p4107) target = $region36
      $region35: #{basic3x3_forward.1} parent=31 // pred_region
        %s4110 = smul.u32 8, %s19
      $region36: #{basic3x3_forward.1} parent=31 // pred_fallthru
        _
    $region32: #{basic3x3_forward.1} parent=5 // pred_fallthru
      _
    %p4111 = scmp.le.s32.totalorder 2, %s9
    // Predicated region
    $region37: #{basic3x3_forward.1} parent=5 // pred_check
      %p4112 = pneg %p4111
    $region38: #{basic3x3_forward.1} parent=5 // pred_check_branch
      %4114 = sbr.rel (%p4112) target = $region40
    $region39: #{basic3x3_forward.1} parent=5 // pred_region
      %s4115 = ssub.s32 %s9, 2
      // Predicated region
      $region41: #{basic3x3_forward.1} parent=39 // pred_check
        %p4116 = pneg %p120
      $region42: #{basic3x3_forward.1} parent=39 // pred_check_branch
        %4118 = sbr.rel (%p4116) target = $region44
      $region43: #{basic3x3_forward.1} parent=39 // pred_region
        %s4119 = smul.u32 8, %s21
        %p4120 = scmp.lt.s32.totalorder %s20, 1
        %s4121 = scalar_select %p4120, %s20, 1
        %p4122 = scmp.lt.s32.totalorder %s4119, 31
        %s4123 = scalar_select %p4122, %s4119, 31
        %s4124 = smul.addr %s4123, 4
        %s4125 = smul.addr %s4121, 128
        %s4126 = sadd.s32 %s4124, %s4125
        %s4127 = smul.addr %s4126, 8
        %s4128 = scalar_lea.vmem %s3, %s4127
      $region44: #{basic3x3_forward.1} parent=39 // pred_fallthru
        _
    $region40: #{basic3x3_forward.1} parent=5 // pred_fallthru
      _
  $region6: #{basic3x3_forward.1} parent=0 // loop_footer
    %s13 = sadd.s32 1, %s9
  $region7: #{basic3x3_forward.1} parent=0 // loop_footer_branch
    %8 = sbr.rel target = $region3
  $region8: #{basic3x3_forward.1} parent=0 // loop_exit
    _

</llo_original>
